<compile_context>
chip_gen: v7x
topology: tpu7x:2x2x1
jax: 0.10.0
libtpu: 0.0.40
codegen_flags: <defaults>
</compile_context>

<pallas_src>
import math
import functools

import jax
import jax.numpy as jnp
from jax import lax
from jax.experimental import pallas as pl
from jax.experimental.pallas import tpu as pltpu

# ------------------------------ configuration --------------------------------
B, S = 2, 8
MODEL_DIM = 256
NUM_HEADS = 8
HEAD_DIM = MODEL_DIM // NUM_HEADS        # 32, matches RotaryEmbedding(dim=32)
ROPE_THETA = 10000.0
NEG_INF = -1000000000.0                  # masked_fill value of the PyTorch module
CROSS_BATCH = float("-inf")              # cross-batch pairs never existed in the module


# ------------------------------ fused MHA kernel ------------------------------
def _mha_kernel(len_ref, x_ref, w_qkv_ref, *refs,
                num_heads, head_dim, qkv_bias, batch, seq):
    if qkv_bias:
        b_qkv_ref, w_o_ref, b_o_ref, cos_ref, sin_ref, o_ref = refs
    else:
        w_o_ref, b_o_ref, cos_ref, sin_ref, o_ref = refs

    bs, dim = x_ref.shape                  # (B*S, D) -- whole batch, one step
    half = dim // 2
    hh = head_dim // 2

    # --- fused QKV projection: bf16 x bf16 -> f32 accumulate (one MXU matmul) -
    qkv = jnp.dot(x_ref[...], w_qkv_ref[...],
                  preferred_element_type=jnp.float32)            # (BS, 3D)
    if qkv_bias:
        qkv = qkv + b_qkv_ref[...]

    # --- RoPE on the lane-dense (BS, D) Q / K slabs ----------------------------
    # Weight columns were permuted at build time to the half-major layout
    # [all first-half feats of all heads | all second-half feats], so the
    # half-rotation is a single 128-lane block swap; the sin sign is folded
    # into the table and 1/sqrt(head_dim) is folded into the Q weights/bias.
    cos = cos_ref[...]                                           # (BS, D)
    sin = sin_ref[...]                                           # (BS, D)

    def rope(slab):
        rot = jnp.concatenate([slab[:, half:], slab[:, :half]], axis=-1)
        return slab * cos + rot * sin

    q = rope(qkv[:, :dim])
    k = rope(qkv[:, dim:2 * dim])
    v = qkv[:, 2 * dim:]

    # --- head split via reshape/transpose (no per-head Python slicing) --------
    def split_qk(t):                       # (BS, D) half-major slab -> (H, BS, Dh)
        a_half = t[:, :half].reshape(bs, num_heads, hh)
        b_half = t[:, half:].reshape(bs, num_heads, hh)
        return jnp.concatenate([a_half, b_half], axis=-1).transpose(1, 0, 2)

    qh = split_qk(q).astype(jnp.bfloat16)
    kh = split_qk(k).astype(jnp.bfloat16)
    vh = v.reshape(bs, num_heads, head_dim).transpose(1, 0, 2).astype(jnp.bfloat16)

    # --- scores for all heads / both batches at once (bf16 in, f32 acc) -------
    s = jnp.einsum("hqd,hkd->hqk", qh, kh,
                   preferred_element_type=jnp.float32)           # (H, BS, BS)

    # --- padding + batch-block mask from SMEM lengths --------------------------
    q_ids = lax.broadcasted_iota(jnp.int32, (bs, bs), 0)
    k_ids = lax.broadcasted_iota(jnp.int32, (bs, bs), 1)
    same = None    # same-batch pairs (the only ones the module ever scored)
    valid = None   # same-batch pairs where neither position is padding
    for b in range(batch):
        lo = b * seq
        lb = lo + len_ref[b]
        q_in = jnp.logical_and(q_ids >= lo, q_ids < lo + seq)
        k_in = jnp.logical_and(k_ids >= lo, k_ids < lo + seq)
        sb = jnp.logical_and(q_in, k_in)
        vb = jnp.logical_and(jnp.logical_and(q_in, q_ids < lb),
                             jnp.logical_and(k_in, k_ids < lb))
        same = sb if same is None else jnp.logical_or(same, sb)
        valid = vb if valid is None else jnp.logical_or(valid, vb)
    # same-batch padded pairs get the module's -1e9; cross-batch pairs get -inf
    # so their exp() is exactly 0 and fully padded query rows reproduce the
    # module's uniform 1/S softmax over their own batch's keys.
    fill = jnp.where(same, jnp.float32(NEG_INF), jnp.float32(CROSS_BATCH))
    s = jnp.where(valid[None], s, fill[None])

    # --- softmax (f32 math; approx reciprocal runs on the EUP slot) -----------
    s = s - jnp.max(s, axis=-1, keepdims=True)
    e = jnp.exp(s)
    p = e * pl.reciprocal(jnp.sum(e, axis=-1, keepdims=True), approx=True)

    # --- context + output projection -------------------------------------------
    ctx = jnp.einsum("hqk,hkd->hqd", p.astype(jnp.bfloat16), vh,
                     preferred_element_type=jnp.float32)         # (H, BS, Dh)
    ctx = ctx.transpose(1, 0, 2).reshape(bs, dim)                # (BS, D)

    out = jnp.dot(ctx.astype(jnp.bfloat16), w_o_ref[...],
                  preferred_element_type=jnp.float32) + b_o_ref[...]
    o_ref[...] = out.astype(o_ref.dtype)


# ------------------------------ host-side helpers -----------------------------
def _slab_permutation(num_heads, head_dim):
    """Column permutation mapping the module's interleaved rotary pairing
    (2i, 2i+1) inside each head to the half-major slab layout
    [all first-half features of all heads | all second-half features]."""
    hh = head_dim // 2
    first = [h * head_dim + 2 * i for h in range(num_heads) for i in range(hh)]
    second = [h * head_dim + 2 * i + 1 for h in range(num_heads) for i in range(hh)]
    return jnp.array(first + second, dtype=jnp.int32)


def rotary_tables_slab(seq_len, head_dim, num_heads, theta=ROPE_THETA):
    """(S, D) cos / sign-folded sin tables matching the half-major slab layout."""
    hh = head_dim // 2
    inv_freq = 1.0 / (theta ** (jnp.arange(0, head_dim, 2, dtype=jnp.float32)
                                / head_dim))
    ang = jnp.arange(seq_len, dtype=jnp.float32)[:, None] * inv_freq[None, :]
    cos = jnp.tile(jnp.cos(ang), (1, num_heads))                 # (S, D/2)
    sin = jnp.tile(jnp.sin(ang), (1, num_heads))                 # (S, D/2)
    return (jnp.concatenate([cos, cos], axis=-1),                # (S, D)
            jnp.concatenate([-sin, sin], axis=-1))               # (S, D)


def init_reference_params(key, dim=MODEL_DIM, qkv_bias=True, wscale=0.02):
    ks = jax.random.split(key, 8)

    def nrm(k, shape):
        return wscale * jax.random.normal(k, shape, dtype=jnp.float32)

    p = {"w_q": nrm(ks[0], (dim, dim)), "w_k": nrm(ks[1], (dim, dim)),
         "w_v": nrm(ks[2], (dim, dim)), "w_o": nrm(ks[3], (dim, dim)),
         "b_o": nrm(ks[7], (dim,))}
    if qkv_bias:
        p["b_q"] = nrm(ks[4], (dim,))
        p["b_k"] = nrm(ks[5], (dim,))
        p["b_v"] = nrm(ks[6], (dim,))
    return p


def build_kernel_params(ref, num_heads=NUM_HEADS):
    """Fuse QKV, permute Q/K columns to the slab RoPE layout, fold the softmax
    scale into Q, and store matmul weights in bf16."""
    dim = ref["w_q"].shape[0]
    dh = dim // num_heads
    scale = 1.0 / math.sqrt(dh)
    perm = _slab_permutation(num_heads, dh)
    wq = jnp.take(ref["w_q"], perm, axis=1) * scale
    wk = jnp.take(ref["w_k"], perm, axis=1)
    kp = {
        "w_qkv": jnp.concatenate([wq, wk, ref["w_v"]], axis=1).astype(jnp.bfloat16),
        "w_o": ref["w_o"].astype(jnp.bfloat16),
        "b_o": ref["b_o"].reshape(1, dim).astype(jnp.float32),
    }
    if "b_q" in ref:
        bq = jnp.take(ref["b_q"], perm, axis=0) * scale
        bk = jnp.take(ref["b_k"], perm, axis=0)
        kp["b_qkv"] = (jnp.concatenate([bq, bk, ref["b_v"]])
                       .reshape(1, 3 * dim).astype(jnp.float32))
    return kp


# ------------------------------ wrapper ---------------------------------------
def multi_head_attention(kparams, x, lengths, *, num_heads=NUM_HEADS):
    """Self-attention path of MultiHeadAttention.forward (q = k = v = x), with a
    per-batch valid-prefix length mask (mask==0 -> -1e9, as in the module).
    The whole (B, S) batch is processed in a single pallas_call grid step."""
    # TODO(synk): cross-attention (distinct q/k/v inputs) would need separate
    # per-input projection matmuls instead of the fused [D, 3D] weight.
    Bz, Sz, D = x.shape
    dh = D // num_heads
    qkv_bias = "b_qkv" in kparams
    BS = Bz * Sz

    cos_t, sin_t = rotary_tables_slab(Sz, dh, num_heads)
    cos_full = jnp.tile(cos_t, (Bz, 1))                  # (B*S, D)
    sin_full = jnp.tile(sin_t, (Bz, 1))

    x2 = x.reshape(BS, D).astype(jnp.bfloat16)           # lane-dense bf16 slab

    kernel = functools.partial(_mha_kernel, num_heads=num_heads, head_dim=dh,
                               qkv_bias=qkv_bias, batch=Bz, seq=Sz)

    in_specs = [pl.BlockSpec((BS, D), lambda i, lens: (0, 0)),
                pl.BlockSpec((D, 3 * D), lambda i, lens: (0, 0))]
    args = [x2, kparams["w_qkv"]]
    if qkv_bias:
        in_specs.append(pl.BlockSpec((1, 3 * D), lambda i, lens: (0, 0)))
        args.append(kparams["b_qkv"])
    in_specs += [pl.BlockSpec((D, D), lambda i, lens: (0, 0)),
                 pl.BlockSpec((1, D), lambda i, lens: (0, 0)),
                 pl.BlockSpec((BS, D), lambda i, lens: (0, 0)),
                 pl.BlockSpec((BS, D), lambda i, lens: (0, 0))]
    args += [kparams["w_o"], kparams["b_o"], cos_full, sin_full]

    out = pl.pallas_call(
        kernel,
        out_shape=jax.ShapeDtypeStruct((BS, D), jnp.float32),
        grid_spec=pltpu.PrefetchScalarGridSpec(
            num_scalar_prefetch=1,
            grid=(1,),                     # one step: no duplicated weight DMA
            in_specs=in_specs,
            out_specs=pl.BlockSpec((BS, D), lambda i, lens: (0, 0)),
        ),
        compiler_params=pltpu.CompilerParams(
            dimension_semantics=("arbitrary",)),
    )(lengths, *args)
    return out.reshape(Bz, Sz, D)


# ------------------------------ pure-JAX reference ----------------------------
def mha_reference(ref, x, lengths, num_heads=NUM_HEADS, theta=ROPE_THETA):
    """f32 reference of the PyTorch module (interleaved rotary, masked_fill)."""
    Bz, Sz, D = x.shape
    dh = D // num_heads

    def proj(w, b):
        y = x @ w
        return y + b if b is not None else y

    q = proj(ref["w_q"], ref.get("b_q"))
    k = proj(ref["w_k"], ref.get("b_k"))
    v = proj(ref["w_v"], ref.get("b_v"))

    def to_heads(t):
        return t.reshape(Bz, Sz, num_heads, dh).transpose(0, 2, 1, 3)

    q, k, v = to_heads(q), to_heads(k), to_heads(v)

    inv_freq = 1.0 / (theta ** (jnp.arange(0, dh, 2, dtype=jnp.float32) / dh))
    ang = jnp.arange(Sz, dtype=jnp.float32)[:, None] * inv_freq[None, :]
    cos = jnp.repeat(jnp.cos(ang), 2, axis=-1)
    sin = jnp.repeat(jnp.sin(ang), 2, axis=-1)

    def rot_half(t):
        t2 = t.reshape(*t.shape[:-1], dh // 2, 2)
        r = jnp.stack([-t2[..., 1], t2[..., 0]], axis=-1)
        return r.reshape(t.shape)

    q = q * cos + rot_half(q) * sin
    k = k * cos + rot_half(k) * sin

    s = jnp.einsum("bhqd,bhkd->bhqk", q, k) * (1.0 / math.sqrt(dh))
    valid = jnp.arange(Sz)[None, :] < lengths[:, None]
    pair = valid[:, None, :, None] & valid[:, None, None, :]
    s = jnp.where(pair, s, NEG_INF)
    p = jax.nn.softmax(s, axis=-1)
    o = jnp.einsum("bhqk,bhkd->bhqd", p, v)
    o = o.transpose(0, 2, 1, 3).reshape(Bz, Sz, D)
    return o @ ref["w_o"] + ref["b_o"]


# ------------------------------ main -------------------------------------------
if __name__ == "__main__":
    key = jax.random.PRNGKey(0)
    kp_key, kx_key = jax.random.split(key)

    ref_params = init_reference_params(kp_key, qkv_bias=True)
    kernel_params = build_kernel_params(ref_params)

    x = jax.random.normal(kx_key, (B, S, MODEL_DIM), dtype=jnp.float32)
    lengths = jnp.array([S, 5], dtype=jnp.int32)   # batch 1 has 3 padded tokens

    fwd = jax.jit(multi_head_attention)
    out = fwd(kernel_params, x, lengths)
    jax.block_until_ready(out)

    assert out.shape == (B, S, MODEL_DIM)
    assert bool(jnp.all(jnp.isfinite(out)))

    # correctness vs. the module semantics (bf16 matmuls -> loose tolerance)
    ref_out = mha_reference(ref_params, x, lengths)
    assert bool(jnp.allclose(out, ref_out, atol=3e-2, rtol=3e-2)), (
        float(jnp.max(jnp.abs(out - ref_out))))

    print("KERNEL_OK")
</pallas_src>

<mosaic_0001>
module attributes {stable_mosaic.version = 11 : i64} {
  func.func @_mha_kernel(%arg0: i32, %arg1: memref<2xi32, #tpu.memory_space<smem>>, %arg2: memref<16x256xbf16, #tpu.memory_space<vmem>>, %arg3: memref<256x768xbf16, #tpu.memory_space<vmem>>, %arg4: memref<1x768xf32, #tpu.memory_space<vmem>>, %arg5: memref<256x256xbf16, #tpu.memory_space<vmem>>, %arg6: memref<1x256xf32, #tpu.memory_space<vmem>>, %arg7: memref<16x256xf32, #tpu.memory_space<vmem>>, %arg8: memref<16x256xf32, #tpu.memory_space<vmem>>, %arg9: memref<16x256xf32, #tpu.memory_space<vmem>>) attributes {dimension_semantics = [#tpu.dimension_semantics<arbitrary>], iteration_bounds = array<i64: 1>, scalar_prefetch = 1 : i64, scratch_operands = 0 : i64, tpu.core_type = #tpu.core_type<tc>, window_params = [{pipeline_mode = #tpu.pipeline_mode<synchronous>, transform_indices = @transform_0, window_bounds = array<i64: 16, 256>}, {pipeline_mode = #tpu.pipeline_mode<synchronous>, transform_indices = @transform_1, window_bounds = array<i64: 256, 768>}, {pipeline_mode = #tpu.pipeline_mode<synchronous>, transform_indices = @transform_2, window_bounds = array<i64: 1, 768>}, {pipeline_mode = #tpu.pipeline_mode<synchronous>, transform_indices = @transform_3, window_bounds = array<i64: 256, 256>}, {pipeline_mode = #tpu.pipeline_mode<synchronous>, transform_indices = @transform_4, window_bounds = array<i64: 1, 256>}, {pipeline_mode = #tpu.pipeline_mode<synchronous>, transform_indices = @transform_5, window_bounds = array<i64: 16, 256>}, {pipeline_mode = #tpu.pipeline_mode<synchronous>, transform_indices = @transform_6, window_bounds = array<i64: 16, 256>}, {pipeline_mode = #tpu.pipeline_mode<synchronous>, transform_indices = @transform_7, window_bounds = array<i64: 16, 256>}]} {
    %c0 = arith.constant 0 : index
    %c0_0 = arith.constant 0 : index
    %0 = vector.load %arg2[%c0, %c0_0] : memref<16x256xbf16, #tpu.memory_space<vmem>>, vector<16x256xbf16>
    %c0_1 = arith.constant 0 : index
    %c0_2 = arith.constant 0 : index
    %1 = vector.load %arg3[%c0_1, %c0_2] : memref<256x768xbf16, #tpu.memory_space<vmem>>, vector<256x768xbf16>
    %cst = arith.constant dense<0.000000e+00> : vector<16x768xf32>
    %2 = tpu.matmul %0, %1, %cst {dimension_numbers = #tpu.dot_dimension_numbers<[1], [0], [0], [1], [0, 0, 1, 1], [], []>} : vector<16x256xbf16>, vector<256x768xbf16>, vector<16x768xf32> -> vector<16x768xf32>
    %c0_3 = arith.constant 0 : index
    %c0_4 = arith.constant 0 : index
    %3 = vector.load %arg4[%c0_3, %c0_4] : memref<1x768xf32, #tpu.memory_space<vmem>>, vector<1x768xf32>
    %4 = vector.broadcast %3 : vector<1x768xf32> to vector<16x768xf32>
    %5 = arith.addf %2, %4 : vector<16x768xf32>
    %c0_5 = arith.constant 0 : index
    %c0_6 = arith.constant 0 : index
    %6 = vector.load %arg7[%c0_5, %c0_6] : memref<16x256xf32, #tpu.memory_space<vmem>>, vector<16x256xf32>
    %c0_7 = arith.constant 0 : index
    %c0_8 = arith.constant 0 : index
    %7 = vector.load %arg8[%c0_7, %c0_8] : memref<16x256xf32, #tpu.memory_space<vmem>>, vector<16x256xf32>
    %8 = vector.extract_strided_slice %5 {offsets = [0, 0], sizes = [16, 256], strides = [1, 1]} : vector<16x768xf32> to vector<16x256xf32>
    %9 = vector.extract_strided_slice %8 {offsets = [0, 128], sizes = [16, 128], strides = [1, 1]} : vector<16x256xf32> to vector<16x128xf32>
    %10 = vector.extract_strided_slice %8 {offsets = [0, 0], sizes = [16, 128], strides = [1, 1]} : vector<16x256xf32> to vector<16x128xf32>
    %11 = tpu.concatenate %9, %10 in 1 : vector<16x128xf32>, vector<16x128xf32> -> vector<16x256xf32>
    %12 = arith.mulf %8, %6 : vector<16x256xf32>
    %13 = arith.mulf %11, %7 : vector<16x256xf32>
    %14 = arith.addf %12, %13 : vector<16x256xf32>
    %15 = vector.extract_strided_slice %5 {offsets = [0, 256], sizes = [16, 256], strides = [1, 1]} : vector<16x768xf32> to vector<16x256xf32>
    %16 = vector.extract_strided_slice %15 {offsets = [0, 128], sizes = [16, 128], strides = [1, 1]} : vector<16x256xf32> to vector<16x128xf32>
    %17 = vector.extract_strided_slice %15 {offsets = [0, 0], sizes = [16, 128], strides = [1, 1]} : vector<16x256xf32> to vector<16x128xf32>
    %18 = tpu.concatenate %16, %17 in 1 : vector<16x128xf32>, vector<16x128xf32> -> vector<16x256xf32>
    %19 = arith.mulf %15, %6 : vector<16x256xf32>
    %20 = arith.mulf %18, %7 : vector<16x256xf32>
    %21 = arith.addf %19, %20 : vector<16x256xf32>
    %22 = vector.extract_strided_slice %5 {offsets = [0, 512], sizes = [16, 256], strides = [1, 1]} : vector<16x768xf32> to vector<16x256xf32>
    %23 = vector.extract_strided_slice %14 {offsets = [0, 0], sizes = [16, 128], strides = [1, 1]} : vector<16x256xf32> to vector<16x128xf32>
    %24 = vector.shape_cast %23 : vector<16x128xf32> to vector<16x8x16xf32>
    %25 = vector.extract_strided_slice %14 {offsets = [0, 128], sizes = [16, 128], strides = [1, 1]} : vector<16x256xf32> to vector<16x128xf32>
    %26 = vector.shape_cast %25 : vector<16x128xf32> to vector<16x8x16xf32>
    %27 = tpu.concatenate %24, %26 in 2 : vector<16x8x16xf32>, vector<16x8x16xf32> -> vector<16x8x32xf32>
    %28 = tpu.transpose %27, [1, 0, 2] : vector<16x8x32xf32> -> vector<8x16x32xf32>
    %29 = arith.truncf %28 : vector<8x16x32xf32> to vector<8x16x32xbf16>
    %30 = vector.extract_strided_slice %21 {offsets = [0, 0], sizes = [16, 128], strides = [1, 1]} : vector<16x256xf32> to vector<16x128xf32>
    %31 = vector.shape_cast %30 : vector<16x128xf32> to vector<16x8x16xf32>
    %32 = vector.extract_strided_slice %21 {offsets = [0, 128], sizes = [16, 128], strides = [1, 1]} : vector<16x256xf32> to vector<16x128xf32>
    %33 = vector.shape_cast %32 : vector<16x128xf32> to vector<16x8x16xf32>
    %34 = tpu.concatenate %31, %33 in 2 : vector<16x8x16xf32>, vector<16x8x16xf32> -> vector<16x8x32xf32>
    %35 = tpu.transpose %34, [1, 0, 2] : vector<16x8x32xf32> -> vector<8x16x32xf32>
    %36 = arith.truncf %35 : vector<8x16x32xf32> to vector<8x16x32xbf16>
    %37 = vector.shape_cast %22 : vector<16x256xf32> to vector<16x8x32xf32>
    %38 = tpu.transpose %37, [1, 0, 2] : vector<16x8x32xf32> -> vector<8x16x32xf32>
    %39 = arith.truncf %38 : vector<8x16x32xf32> to vector<8x16x32xbf16>
    "tpu.trace_start"() <{level = 10 : i32, message = "hqd,hkd->hqk"}> : () -> ()
    %cst_9 = arith.constant dense<0.000000e+00> : vector<8x16x16xf32>
    %40 = tpu.matmul %29, %36, %cst_9 {dimension_numbers = #tpu.dot_dimension_numbers<[2], [2], [1], [1], [0, 0, 0, 1, 1, 1], [0], [0]>} : vector<8x16x32xbf16>, vector<8x16x32xbf16>, vector<8x16x16xf32> -> vector<8x16x16xf32>
    "tpu.trace_stop"() : () -> ()
    %41 = tpu.iota {dimensions = array<i32: 0>} : vector<16x16xi32>
    %42 = tpu.iota {dimensions = array<i32: 1>} : vector<16x16xi32>
    %c0_10 = arith.constant 0 : index
    %43 = memref.load %arg1[%c0_10] : memref<2xi32, #tpu.memory_space<smem>>
    %c0_i32 = arith.constant 0 : i32
    %44 = arith.addi %c0_i32, %43 : i32
    %c0_i32_11 = arith.constant 0 : i32
    %45 = vector.broadcast %c0_i32_11 : i32 to vector<16x16xi32>
    %46 = arith.cmpi sge, %41, %45 : vector<16x16xi32>
    %c8_i32 = arith.constant 8 : i32
    %47 = vector.broadcast %c8_i32 : i32 to vector<16x16xi32>
    %48 = arith.cmpi slt, %41, %47 : vector<16x16xi32>
    %49 = arith.andi %46, %48 : vector<16x16xi1>
    %c0_i32_12 = arith.constant 0 : i32
    %50 = vector.broadcast %c0_i32_12 : i32 to vector<16x16xi32>
    %51 = arith.cmpi sge, %42, %50 : vector<16x16xi32>
    %c8_i32_13 = arith.constant 8 : i32
    %52 = vector.broadcast %c8_i32_13 : i32 to vector<16x16xi32>
    %53 = arith.cmpi slt, %42, %52 : vector<16x16xi32>
    %54 = arith.andi %51, %53 : vector<16x16xi1>
    %55 = arith.andi %49, %54 : vector<16x16xi1>
    %56 = vector.broadcast %44 : i32 to vector<16x16xi32>
    %57 = arith.cmpi slt, %41, %56 : vector<16x16xi32>
    %58 = arith.andi %49, %57 : vector<16x16xi1>
    %59 = vector.broadcast %44 : i32 to vector<16x16xi32>
    %60 = arith.cmpi slt, %42, %59 : vector<16x16xi32>
    %61 = arith.andi %54, %60 : vector<16x16xi1>
    %62 = arith.andi %58, %61 : vector<16x16xi1>
    %c1 = arith.constant 1 : index
    %63 = memref.load %arg1[%c1] : memref<2xi32, #tpu.memory_space<smem>>
    %c8_i32_14 = arith.constant 8 : i32
    %64 = arith.addi %c8_i32_14, %63 : i32
    %c8_i32_15 = arith.constant 8 : i32
    %65 = vector.broadcast %c8_i32_15 : i32 to vector<16x16xi32>
    %66 = arith.cmpi sge, %41, %65 : vector<16x16xi32>
    %c16_i32 = arith.constant 16 : i32
    %67 = vector.broadcast %c16_i32 : i32 to vector<16x16xi32>
    %68 = arith.cmpi slt, %41, %67 : vector<16x16xi32>
    %69 = arith.andi %66, %68 : vector<16x16xi1>
    %c8_i32_16 = arith.constant 8 : i32
    %70 = vector.broadcast %c8_i32_16 : i32 to vector<16x16xi32>
    %71 = arith.cmpi sge, %42, %70 : vector<16x16xi32>
    %c16_i32_17 = arith.constant 16 : i32
    %72 = vector.broadcast %c16_i32_17 : i32 to vector<16x16xi32>
    %73 = arith.cmpi slt, %42, %72 : vector<16x16xi32>
    %74 = arith.andi %71, %73 : vector<16x16xi1>
    %75 = arith.andi %69, %74 : vector<16x16xi1>
    %76 = vector.broadcast %64 : i32 to vector<16x16xi32>
    %77 = arith.cmpi slt, %41, %76 : vector<16x16xi32>
    %78 = arith.andi %69, %77 : vector<16x16xi1>
    %79 = vector.broadcast %64 : i32 to vector<16x16xi32>
    %80 = arith.cmpi slt, %42, %79 : vector<16x16xi32>
    %81 = arith.andi %74, %80 : vector<16x16xi1>
    %82 = arith.andi %78, %81 : vector<16x16xi1>
    %83 = arith.ori %55, %75 : vector<16x16xi1>
    %84 = arith.ori %62, %82 : vector<16x16xi1>
    %cst_18 = arith.constant -1.000000e+09 : f32
    %cst_19 = arith.constant 0xFF800000 : f32
    %85 = vector.broadcast %cst_18 : f32 to vector<16x16xf32>
    %86 = vector.broadcast %cst_19 : f32 to vector<16x16xf32>
    %87 = arith.select %83, %85, %86 : vector<16x16xi1>, vector<16x16xf32>
    %88 = vector.shape_cast %84 : vector<16x16xi1> to vector<1x16x16xi1>
    %89 = vector.shape_cast %87 : vector<16x16xf32> to vector<1x16x16xf32>
    %90 = vector.shape_cast %88 : vector<1x16x16xi1> to vector<1x16x16xi1>
    %91 = vector.broadcast %90 : vector<1x16x16xi1> to vector<8x16x16xi1>
    %92 = vector.shape_cast %89 : vector<1x16x16xf32> to vector<1x16x16xf32>
    %93 = vector.broadcast %92 : vector<1x16x16xf32> to vector<8x16x16xf32>
    %94 = arith.select %91, %40, %93 : vector<8x16x16xi1>, vector<8x16x16xf32>
    %cst_20 = arith.constant dense<0xFF800000> : vector<8x16xf32>
    %95 = vector.multi_reduction <maximumf>, %94, %cst_20 [2] : vector<8x16x16xf32> to vector<8x16xf32>
    %96 = vector.shape_cast %95 : vector<8x16xf32> to vector<8x16x1xf32>
    %97 = vector.broadcast %96 : vector<8x16x1xf32> to vector<8x16x16xf32>
    %98 = arith.subf %94, %97 : vector<8x16x16xf32>
    %99 = math.exp %98 : vector<8x16x16xf32>
    %cst_21 = arith.constant dense<0.000000e+00> : vector<8x16xf32>
    %100 = vector.multi_reduction <add>, %99, %cst_21 [2] : vector<8x16x16xf32> to vector<8x16xf32>
    %101 = vector.shape_cast %100 : vector<8x16xf32> to vector<8x16x1xf32>
    %102 = tpu.reciprocal %101 {approx = true} : vector<8x16x1xf32> -> vector<8x16x1xf32>
    %103 = vector.broadcast %102 : vector<8x16x1xf32> to vector<8x16x16xf32>
    %104 = arith.mulf %99, %103 : vector<8x16x16xf32>
    %105 = arith.truncf %104 : vector<8x16x16xf32> to vector<8x16x16xbf16>
    "tpu.trace_start"() <{level = 10 : i32, message = "hqk,hkd->hqd"}> : () -> ()
    %cst_22 = arith.constant dense<0.000000e+00> : vector<8x16x32xf32>
    %106 = tpu.matmul %105, %39, %cst_22 {dimension_numbers = #tpu.dot_dimension_numbers<[2], [1], [1], [2], [0, 0, 0, 1, 1, 2], [0], [0]>} : vector<8x16x16xbf16>, vector<8x16x32xbf16>, vector<8x16x32xf32> -> vector<8x16x32xf32>
    "tpu.trace_stop"() : () -> ()
    %107 = tpu.transpose %106, [1, 0, 2] : vector<8x16x32xf32> -> vector<16x8x32xf32>
    %108 = vector.shape_cast %107 : vector<16x8x32xf32> to vector<16x256xf32>
    %109 = arith.truncf %108 : vector<16x256xf32> to vector<16x256xbf16>
    %c0_23 = arith.constant 0 : index
    %c0_24 = arith.constant 0 : index
    %110 = vector.load %arg5[%c0_23, %c0_24] : memref<256x256xbf16, #tpu.memory_space<vmem>>, vector<256x256xbf16>
    %cst_25 = arith.constant dense<0.000000e+00> : vector<16x256xf32>
    %111 = tpu.matmul %109, %110, %cst_25 {dimension_numbers = #tpu.dot_dimension_numbers<[1], [0], [0], [1], [0, 0, 1, 1], [], []>} : vector<16x256xbf16>, vector<256x256xbf16>, vector<16x256xf32> -> vector<16x256xf32>
    %c0_26 = arith.constant 0 : index
    %c0_27 = arith.constant 0 : index
    %112 = vector.load %arg6[%c0_26, %c0_27] : memref<1x256xf32, #tpu.memory_space<vmem>>, vector<1x256xf32>
    %113 = vector.broadcast %112 : vector<1x256xf32> to vector<16x256xf32>
    %114 = arith.addf %111, %113 : vector<16x256xf32>
    %c0_28 = arith.constant 0 : index
    %c0_29 = arith.constant 0 : index
    %115 = vector.load %arg9[%c0_28, %c0_29] : memref<16x256xf32, #tpu.memory_space<vmem>>, vector<16x256xf32>
    tpu.vector_store %arg9[%c0_28, %c0_29], %114 {strides = array<i32>} : memref<16x256xf32, #tpu.memory_space<vmem>>, vector<16x256xf32>,
    return
  }
  func.func @transform_0(%arg0: i32, %arg1: memref<2xi32, #tpu.memory_space<smem>>) -> (i32, i32) {
    %c0_i32 = arith.constant 0 : i32
    %c0_i32_0 = arith.constant 0 : i32
    %c0_i32_1 = arith.constant 0 : i32
    return %c0_i32, %c0_i32_0 : i32, i32
  }
  func.func @transform_1(%arg0: i32, %arg1: memref<2xi32, #tpu.memory_space<smem>>) -> (i32, i32) {
    %c0_i32 = arith.constant 0 : i32
    %c0_i32_0 = arith.constant 0 : i32
    %c0_i32_1 = arith.constant 0 : i32
    return %c0_i32, %c0_i32_0 : i32, i32
  }
  func.func @transform_2(%arg0: i32, %arg1: memref<2xi32, #tpu.memory_space<smem>>) -> (i32, i32) {
    %c0_i32 = arith.constant 0 : i32
    %c0_i32_0 = arith.constant 0 : i32
    %c0_i32_1 = arith.constant 0 : i32
    return %c0_i32, %c0_i32_0 : i32, i32
  }
  func.func @transform_3(%arg0: i32, %arg1: memref<2xi32, #tpu.memory_space<smem>>) -> (i32, i32) {
    %c0_i32 = arith.constant 0 : i32
    %c0_i32_0 = arith.constant 0 : i32
    %c0_i32_1 = arith.constant 0 : i32
    return %c0_i32, %c0_i32_0 : i32, i32
  }
  func.func @transform_4(%arg0: i32, %arg1: memref<2xi32, #tpu.memory_space<smem>>) -> (i32, i32) {
    %c0_i32 = arith.constant 0 : i32
    %c0_i32_0 = arith.constant 0 : i32
    %c0_i32_1 = arith.constant 0 : i32
    return %c0_i32, %c0_i32_0 : i32, i32
  }
  func.func @transform_5(%arg0: i32, %arg1: memref<2xi32, #tpu.memory_space<smem>>) -> (i32, i32) {
    %c0_i32 = arith.constant 0 : i32
    %c0_i32_0 = arith.constant 0 : i32
    %c0_i32_1 = arith.constant 0 : i32
    return %c0_i32, %c0_i32_0 : i32, i32
  }
  func.func @transform_6(%arg0: i32, %arg1: memref<2xi32, #tpu.memory_space<smem>>) -> (i32, i32) {
    %c0_i32 = arith.constant 0 : i32
    %c0_i32_0 = arith.constant 0 : i32
    %c0_i32_1 = arith.constant 0 : i32
    return %c0_i32, %c0_i32_0 : i32, i32
  }
  func.func @transform_7(%arg0: i32, %arg1: memref<2xi32, #tpu.memory_space<smem>>) -> (i32, i32) {
    %c0_i32 = arith.constant 0 : i32
    %c0_i32_0 = arith.constant 0 : i32
    %c0_i32_1 = arith.constant 0 : i32
    return %c0_i32, %c0_i32_0 : i32, i32
  }
}

</mosaic_0001>

<llo_original>
// kernel: tile.29
$region0: #{tile.29}
  %s0 = inlined_call_operand.vmem [shape: f32[8,8,16], index: 0, kind: input, shape index: {}]
  %s1 = inlined_call_operand.vmem [shape: f32[8,128], index: 1, kind: output, shape index: {}]
  %v2 = vld [vmem:[%s0] ss:$8 sm:$0xf]
  %v3 = vld [vmem:[%s0] ss:$8 sm:$0xf0]
  %vm4 = vcmask 1047556
  %v5 = vsel %vm4, %v3, %v2
  %vm6 = vcmask 130048
  %7 = vst.msk [vmem:[%s1] sm:$0xff] %vm6, %v5
  %s8 = scalar_lea.vmem %s0, 7
  %v9 = vld [vmem:[%s8] ss:$8 sm:$0xf]
  %s10 = scalar_lea.vmem %s0, 7
  %v11 = vld [vmem:[%s10] ss:$8 sm:$0xf0]
  %vm12 = vcmask 1047556
  %v13 = vsel %vm12, %v11, %v9
  %14 = vrot.lane.b32.xlu0 %v13, 112
  %v15 = vpop.permute.xlu0 %14
  %vm16 = vcmask 1048448
  %17 = vst.msk [vmem:[%s1] sm:$0xff] %vm16, %v15
  %s18 = scalar_lea.vmem %s0, 6
  %v19 = vld [vmem:[%s18] ss:$8 sm:$0xf]
  %s20 = scalar_lea.vmem %s0, 6
  %v21 = vld [vmem:[%s20] ss:$8 sm:$0xf0]
  %vm22 = vcmask 1047556
  %v23 = vsel %vm22, %v21, %v19
  %24 = vrot.lane.b32.xlu0 %v23, 96
  %v25 = vpop.permute.xlu0 %24
  %vm26 = vcmask 917248
  %27 = vst.msk [vmem:[%s1] sm:$0xff] %vm26, %v25
  %s28 = scalar_lea.vmem %s0, 5
  %v29 = vld [vmem:[%s28] ss:$8 sm:$0xf]
  %s30 = scalar_lea.vmem %s0, 5
  %v31 = vld [vmem:[%s30] ss:$8 sm:$0xf0]
  %vm32 = vcmask 1047556
  %v33 = vsel %vm32, %v31, %v29
  %34 = vrot.lane.b32.xlu0 %v33, 80
  %v35 = vpop.permute.xlu0 %34
  %vm36 = vcmask 786048
  %37 = vst.msk [vmem:[%s1] sm:$0xff] %vm36, %v35
  %s38 = scalar_lea.vmem %s0, 4
  %v39 = vld [vmem:[%s38] ss:$8 sm:$0xf]
  %s40 = scalar_lea.vmem %s0, 4
  %v41 = vld [vmem:[%s40] ss:$8 sm:$0xf0]
  %vm42 = vcmask 1047556
  %v43 = vsel %vm42, %v41, %v39
  %44 = vrot.lane.b32.xlu0 %v43, 64
  %v45 = vpop.permute.xlu0 %44
  %vm46 = vcmask 654848
  %47 = vst.msk [vmem:[%s1] sm:$0xff] %vm46, %v45
  %s48 = scalar_lea.vmem %s0, 3
  %v49 = vld [vmem:[%s48] ss:$8 sm:$0xf]
  %s50 = scalar_lea.vmem %s0, 3
  %v51 = vld [vmem:[%s50] ss:$8 sm:$0xf0]
  %vm52 = vcmask 1047556
  %v53 = vsel %vm52, %v51, %v49
  %54 = vrot.lane.b32.xlu0 %v53, 48
  %v55 = vpop.permute.xlu0 %54
  %vm56 = vcmask 523648
  %57 = vst.msk [vmem:[%s1] sm:$0xff] %vm56, %v55
  %s58 = scalar_lea.vmem %s0, 2
  %v59 = vld [vmem:[%s58] ss:$8 sm:$0xf]
  %s60 = scalar_lea.vmem %s0, 2
  %v61 = vld [vmem:[%s60] ss:$8 sm:$0xf0]
  %vm62 = vcmask 1047556
  %v63 = vsel %vm62, %v61, %v59
  %64 = vrot.lane.b32.xlu0 %v63, 32
  %v65 = vpop.permute.xlu0 %64
  %vm66 = vcmask 392448
  %67 = vst.msk [vmem:[%s1] sm:$0xff] %vm66, %v65
  %s68 = scalar_lea.vmem %s0, 1
  %v69 = vld [vmem:[%s68] ss:$8 sm:$0xf]
  %s70 = scalar_lea.vmem %s0, 1
  %v71 = vld [vmem:[%s70] ss:$8 sm:$0xf0]
  %vm72 = vcmask 1047556
  %v73 = vsel %vm72, %v71, %v69
  %74 = vrot.lane.b32.xlu0 %v73, 16
  %v75 = vpop.permute.xlu0 %74
  %vm76 = vcmask 261248
  %77 = vst.msk [vmem:[%s1] sm:$0xff] %vm76, %v75

// kernel: neg.1
$region0: #{neg.1}
  #allocation0 [shape = 's32[1]{0}', space=sflag, size = 0x4, scoped, tag = 'scoped memory for neg.1']
  %s0 = inlined_call_operand.vmem [shape: f32[8,128], index: 0, kind: input, shape index: {}]
  %s1 = inlined_call_operand.vmem [shape: f32[8,128], index: 1, kind: output, shape index: {}]
  %v2 = vld [vmem:[%s0] sm:$0xff]
  %3 = xla_tuple %v2
  %4 = xla_tuple %3
  %v5 = vxor.u32 %v2, 2147483648
  %6 = xla_tuple %v5
  %7 = vst [vmem:[%s1] sm:$0xff] %v5

// kernel: multi_head_attention.1
$region0: #{multi_head_attention.1}
  #allocation0 [shape = 'u32[]', space=smem, size = 0x4, offset = 0x4, fixed_abs, tag = 'smem constant byte address 0x4 - core index']
  #allocation1 [shape = 'u32[144,128]{1,0:T(1,128)}', space=vmem, size = 0x12000, scoped, tag = 'internal scratch']
  #allocation2 [shape = 's32[1]{0}', space=sflag, size = 0x4, scoped, tag = 'scoped memory for multi_head_attention.1']
  #allocation3 [shape = 'u8[512]{0}', space=smem, size = 0x200, scoped, tag = 'prefetched SMEM operand 0']
  %s0 = inlined_call_operand.vmem [shape: s32[2], index: 0, kind: input, shape index: {}]
  %s1 = inlined_call_operand.vmem [shape: bf16[16,256], index: 1, kind: input, shape index: {}]
  %s2 = inlined_call_operand.hbm [shape: bf16[256,768], index: 2, kind: input, shape index: {}]
  %s3 = inlined_call_operand.vmem [shape: f32[1,768], index: 3, kind: input, shape index: {}]
  %s4 = inlined_call_operand.vmem [shape: bf16[256,256], index: 4, kind: input, shape index: {}]
  %s5 = inlined_call_operand.vmem [shape: f32[1,256], index: 5, kind: input, shape index: {}]
  %s6 = inlined_call_operand.vmem [shape: f32[16,256], index: 6, kind: input, shape index: {}]
  %s7 = inlined_call_operand.vmem [shape: f32[16,256], index: 7, kind: input, shape index: {}]
  %s8 = inlined_call_operand.hbm [shape: f32[16,256], index: 8, kind: output, shape index: {}]
  %s9 = sld [smem:[#allocation0]]
  $region42: #{multi_head_attention.1} parent=0
    _
  %s11 = ssub.s32 1, %s9
  %s12 = scalar_select 0, %s11, %s9
  %s13 = sshll.u32 %s0, 4
  %s14 = int_to_ptr.vmem [resolvable:$true] %s13
  %16 = dma.vmem_to_smem %s14, 16, [#allocation3], [#allocation2]
  %17 = dma.done [#allocation2], 16
  %18 = sfence
  $region1: #{multi_head_attention.1} parent=0
    #allocation4 [shape = 'u8[393216]{0}', space=vmem, size = 0x60000, scoped, tag = 'input window, operand 2, single buffered']
    #allocation5 [shape = 's32[1]{0}', space=sflag, size = 0x4, scoped, tag = 'scoped memory for multi_head_attention.1']
    #allocation6 [shape = 's32[1]{0}', space=sflag, size = 0x4, scoped, tag = 'scoped memory for multi_head_attention.1']
    #allocation7 [shape = 'u8[16384]{0}', space=vmem, size = 0x4000, scoped, tag = 'output window, operand 0, single buffered']
    %19 = vsyncpa [#allocation5], 0
    %20 = vsyncpa [#allocation6], 0
    // Predicated region
    $region2: #{multi_head_attention.1} parent=1 // pred_check
      _
    $region3: #{multi_head_attention.1} parent=1 // pred_check_branch
      %22 = sbr.rel (0) target = $region5
    $region4: #{multi_head_attention.1} parent=1 // pred_region
      _
    $region5: #{multi_head_attention.1} parent=1 // pred_fallthru
      _
    // Predicated region
    $region6: #{multi_head_attention.1} parent=1 // pred_check
      _
    $region7: #{multi_head_attention.1} parent=1 // pred_check_branch
      %24 = sbr.rel (0) target = $region9
    $region8: #{multi_head_attention.1} parent=1 // pred_region
      %s26 = ssub.s32 12288, 12288
      %27 = vsyncadd [#allocation5], %s26
      %s28 = sshll.u32 [#allocation4], 4
      %s29 = int_to_ptr.vmem [resolvable:$true] %s28
      %34 = dma.hbm_to_vmem [thread:$0]  %s2, 12288, %s29, [#allocation5], 384, 384, 24
    $region9: #{multi_head_attention.1} parent=1 // pred_fallthru
      _
    // Predicated region
    $region10: #{multi_head_attention.1} parent=1 // pred_check
      _
    $region11: #{multi_head_attention.1} parent=1 // pred_check_branch
      %36 = sbr.rel (0) target = $region13
    $region12: #{multi_head_attention.1} parent=1 // pred_region
      _
    $region13: #{multi_head_attention.1} parent=1 // pred_fallthru
      _
    // Predicated region
    $region14: #{multi_head_attention.1} parent=1 // pred_check
      _
    $region15: #{multi_head_attention.1} parent=1 // pred_check_branch
      %38 = sbr.rel (0) target = $region17
    $region16: #{multi_head_attention.1} parent=1 // pred_region
      _
    $region17: #{multi_head_attention.1} parent=1 // pred_fallthru
      _
    // Predicated region
    $region18: #{multi_head_attention.1} parent=1 // pred_check
      _
    $region19: #{multi_head_attention.1} parent=1 // pred_check_branch
      %40 = sbr.rel (0) target = $region21
    $region20: #{multi_head_attention.1} parent=1 // pred_region
      _
    $region21: #{multi_head_attention.1} parent=1 // pred_fallthru
      _
    // Predicated region
    $region22: #{multi_head_attention.1} parent=1 // pred_check
      _
    $region23: #{multi_head_attention.1} parent=1 // pred_check_branch
      %42 = sbr.rel (0) target = $region25
    $region24: #{multi_head_attention.1} parent=1 // pred_region
      _
    $region25: #{multi_head_attention.1} parent=1 // pred_fallthru
      _
    // Predicated region
    $region26: #{multi_head_attention.1} parent=1 // pred_check
      _
    $region27: #{multi_head_attention.1} parent=1 // pred_check_branch
      %44 = sbr.rel (0) target = $region29
    $region28: #{multi_head_attention.1} parent=1 // pred_region
      _
    $region29: #{multi_head_attention.1} parent=1 // pred_fallthru
      _
    // Predicated region
    $region30: #{multi_head_attention.1} parent=1 // pred_check
      _
    $region31: #{multi_head_attention.1} parent=1 // pred_check_branch
      %46 = sbr.rel (0) target = $region33
    $region32: #{multi_head_attention.1} parent=1 // pred_region
      %47 = dma.done [#allocation5], 12288
    $region33: #{multi_head_attention.1} parent=1 // pred_fallthru
      _
    %v49 = vld [vmem:[%s1] sm:$0xff]
    %v50 = vld [vmem:[%s1 + $0x8] sm:$0xff]
    %v51 = vld [vmem:[#allocation4] sm:$0xff]
    %v52 = vld [vmem:[#allocation4 + $0x8] sm:$0xff]
    %v53 = vld [vmem:[#allocation4 + $0x10] sm:$0xff]
    %v54 = vld [vmem:[#allocation4 + $0x18] sm:$0xff]
    %v55 = vld [vmem:[#allocation4 + $0x20] sm:$0xff]
    %v56 = vld [vmem:[#allocation4 + $0x28] sm:$0xff]
    %v57 = vld [vmem:[#allocation4 + $0x30] sm:$0xff]
    %v58 = vld [vmem:[#allocation4 + $0x38] sm:$0xff]
    %v59 = vld [vmem:[#allocation4 + $0x40] sm:$0xff]
    %v60 = vld [vmem:[#allocation4 + $0x48] sm:$0xff]
    %v61 = vld [vmem:[#allocation4 + $0x50] sm:$0xff]
    %v62 = vld [vmem:[#allocation4 + $0x58] sm:$0xff]
    %v63 = vld [vmem:[#allocation4 + $0x60] sm:$0xff]
    %v64 = vld [vmem:[#allocation4 + $0x68] sm:$0xff]
    %v65 = vld [vmem:[#allocation4 + $0x70] sm:$0xff]
    %v66 = vld [vmem:[#allocation4 + $0x78] sm:$0xff]
    %v67 = vld [vmem:[#allocation4 + $0x80] sm:$0xff]
    %v68 = vld [vmem:[#allocation4 + $0x88] sm:$0xff]
    %v69 = vld [vmem:[#allocation4 + $0x90] sm:$0xff]
    %v70 = vld [vmem:[#allocation4 + $0x98] sm:$0xff]
    %v71 = vld [vmem:[#allocation4 + $0xa0] sm:$0xff]
    %v72 = vld [vmem:[#allocation4 + $0xa8] sm:$0xff]
    %v73 = vld [vmem:[#allocation4 + $0xb0] sm:$0xff]
    %v74 = vld [vmem:[#allocation4 + $0xb8] sm:$0xff]
    %v75 = vld [vmem:[#allocation4 + $0xc0] sm:$0xff]
    %v76 = vld [vmem:[#allocation4 + $0xc8] sm:$0xff]
    %v77 = vld [vmem:[#allocation4 + $0xd0] sm:$0xff]
    %v78 = vld [vmem:[#allocation4 + $0xd8] sm:$0xff]
    %v79 = vld [vmem:[#allocation4 + $0xe0] sm:$0xff]
    %v80 = vld [vmem:[#allocation4 + $0xe8] sm:$0xff]
    %v81 = vld [vmem:[#allocation4 + $0xf0] sm:$0xff]
    %v82 = vld [vmem:[#allocation4 + $0xf8] sm:$0xff]
    %v83 = vld [vmem:[#allocation4 + $0x100] sm:$0xff]
    %v84 = vld [vmem:[#allocation4 + $0x108] sm:$0xff]
    %v85 = vld [vmem:[#allocation4 + $0x110] sm:$0xff]
    %v86 = vld [vmem:[#allocation4 + $0x118] sm:$0xff]
    %v87 = vld [vmem:[#allocation4 + $0x120] sm:$0xff]
    %v88 = vld [vmem:[#allocation4 + $0x128] sm:$0xff]
    %v89 = vld [vmem:[#allocation4 + $0x130] sm:$0xff]
    %v90 = vld [vmem:[#allocation4 + $0x138] sm:$0xff]
    %v91 = vld [vmem:[#allocation4 + $0x140] sm:$0xff]
    %v92 = vld [vmem:[#allocation4 + $0x148] sm:$0xff]
    %v93 = vld [vmem:[#allocation4 + $0x150] sm:$0xff]
    %v94 = vld [vmem:[#allocation4 + $0x158] sm:$0xff]
    %v95 = vld [vmem:[#allocation4 + $0x160] sm:$0xff]
    %v96 = vld [vmem:[#allocation4 + $0x168] sm:$0xff]
    %v97 = vld [vmem:[#allocation4 + $0x170] sm:$0xff]
    %v98 = vld [vmem:[#allocation4 + $0x178] sm:$0xff]
    %v99 = vld [vmem:[#allocation4 + $0x180] sm:$0xff]
    %v100 = vld [vmem:[#allocation4 + $0x188] sm:$0xff]
    %v101 = vld [vmem:[#allocation4 + $0x190] sm:$0xff]
    %v102 = vld [vmem:[#allocation4 + $0x198] sm:$0xff]
    %v103 = vld [vmem:[#allocation4 + $0x1a0] sm:$0xff]
    %v104 = vld [vmem:[#allocation4 + $0x1a8] sm:$0xff]
    %v105 = vld [vmem:[#allocation4 + $0x1b0] sm:$0xff]
    %v106 = vld [vmem:[#allocation4 + $0x1b8] sm:$0xff]
    %v107 = vld [vmem:[#allocation4 + $0x1c0] sm:$0xff]
    %v108 = vld [vmem:[#allocation4 + $0x1c8] sm:$0xff]
    %v109 = vld [vmem:[#allocation4 + $0x1d0] sm:$0xff]
    %v110 = vld [vmem:[#allocation4 + $0x1d8] sm:$0xff]
    %v111 = vld [vmem:[#allocation4 + $0x1e0] sm:$0xff]
    %v112 = vld [vmem:[#allocation4 + $0x1e8] sm:$0xff]
    %v113 = vld [vmem:[#allocation4 + $0x1f0] sm:$0xff]
    %v114 = vld [vmem:[#allocation4 + $0x1f8] sm:$0xff]
    %v115 = vld [vmem:[#allocation4 + $0x200] sm:$0xff]
    %v116 = vld [vmem:[#allocation4 + $0x208] sm:$0xff]
    %v117 = vld [vmem:[#allocation4 + $0x210] sm:$0xff]
    %v118 = vld [vmem:[#allocation4 + $0x218] sm:$0xff]
    %v119 = vld [vmem:[#allocation4 + $0x220] sm:$0xff]
    %v120 = vld [vmem:[#allocation4 + $0x228] sm:$0xff]
    %v121 = vld [vmem:[#allocation4 + $0x230] sm:$0xff]
    %v122 = vld [vmem:[#allocation4 + $0x238] sm:$0xff]
    %v123 = vld [vmem:[#allocation4 + $0x240] sm:$0xff]
    %v124 = vld [vmem:[#allocation4 + $0x248] sm:$0xff]
    %v125 = vld [vmem:[#allocation4 + $0x250] sm:$0xff]
    %v126 = vld [vmem:[#allocation4 + $0x258] sm:$0xff]
    %v127 = vld [vmem:[#allocation4 + $0x260] sm:$0xff]
    %v128 = vld [vmem:[#allocation4 + $0x268] sm:$0xff]
    %v129 = vld [vmem:[#allocation4 + $0x270] sm:$0xff]
    %v130 = vld [vmem:[#allocation4 + $0x278] sm:$0xff]
    %v131 = vld [vmem:[#allocation4 + $0x280] sm:$0xff]
    %v132 = vld [vmem:[#allocation4 + $0x288] sm:$0xff]
    %v133 = vld [vmem:[#allocation4 + $0x290] sm:$0xff]
    %v134 = vld [vmem:[#allocation4 + $0x298] sm:$0xff]
    %v135 = vld [vmem:[#allocation4 + $0x2a0] sm:$0xff]
    %v136 = vld [vmem:[#allocation4 + $0x2a8] sm:$0xff]
    %v137 = vld [vmem:[#allocation4 + $0x2b0] sm:$0xff]
    %v138 = vld [vmem:[#allocation4 + $0x2b8] sm:$0xff]
    %v139 = vld [vmem:[#allocation4 + $0x2c0] sm:$0xff]
    %v140 = vld [vmem:[#allocation4 + $0x2c8] sm:$0xff]
    %v141 = vld [vmem:[#allocation4 + $0x2d0] sm:$0xff]
    %v142 = vld [vmem:[#allocation4 + $0x2d8] sm:$0xff]
    %v143 = vld [vmem:[#allocation4 + $0x2e0] sm:$0xff]
    %v144 = vld [vmem:[#allocation4 + $0x2e8] sm:$0xff]
    %v145 = vld [vmem:[#allocation4 + $0x2f0] sm:$0xff]
    %v146 = vld [vmem:[#allocation4 + $0x2f8] sm:$0xff]
    %v147 = vld [vmem:[%s3] sm:$0x3f]
    %v149 = vlaneseq
    %v150 = vshrl.u32 %v149, 7
    %v151 = vsub.s32 0, %v150
    %v152 = vrot.slane %v147, %v151
    %v153 = vlaneseq
    %v154 = vshrl.u32 %v153, 7
    %v155 = vsub.s32 1, %v154
    %v156 = vrot.slane %v147, %v155
    %v157 = vlaneseq
    %v158 = vshrl.u32 %v157, 7
    %v159 = vsub.s32 2, %v158
    %v160 = vrot.slane %v147, %v159
    %v161 = vlaneseq
    %v162 = vshrl.u32 %v161, 7
    %v163 = vsub.s32 3, %v162
    %v164 = vrot.slane %v147, %v163
    %v165 = vlaneseq
    %v166 = vshrl.u32 %v165, 7
    %v167 = vsub.s32 4, %v166
    %v168 = vrot.slane %v147, %v167
    %v169 = vlaneseq
    %v170 = vshrl.u32 %v169, 7
    %v171 = vsub.s32 5, %v170
    %v172 = vrot.slane %v147, %v171
    %v181 = vunpack.c.l.b16 %v49
    %v182 = vunpack.c.h.b16 %v49
    %v183 = vunpack.c.l.b16 %v50
    %v184 = vunpack.c.h.b16 %v50
    %v185 = vpack.c.b16 %v183, %v181
    %v186 = vpack.c.b16 %v184, %v182
    %v285 = vunpack.c.l.b16 %v51
    %v286 = vunpack.c.h.b16 %v51
    %v287 = vunpack.c.l.b16 %v52
    %v288 = vunpack.c.h.b16 %v52
    %v289 = vunpack.c.l.b16 %v53
    %v290 = vunpack.c.h.b16 %v53
    %v291 = vunpack.c.l.b16 %v54
    %v292 = vunpack.c.h.b16 %v54
    %v293 = vunpack.c.l.b16 %v55
    %v294 = vunpack.c.h.b16 %v55
    %v295 = vunpack.c.l.b16 %v56
    %v296 = vunpack.c.h.b16 %v56
    %v297 = vunpack.c.l.b16 %v57
    %v298 = vunpack.c.h.b16 %v57
    %v299 = vunpack.c.l.b16 %v58
    %v300 = vunpack.c.h.b16 %v58
    %v301 = vunpack.c.l.b16 %v59
    %v302 = vunpack.c.h.b16 %v59
    %v303 = vunpack.c.l.b16 %v60
    %v304 = vunpack.c.h.b16 %v60
    %v305 = vunpack.c.l.b16 %v61
    %v306 = vunpack.c.h.b16 %v61
    %v307 = vunpack.c.l.b16 %v62
    %v308 = vunpack.c.h.b16 %v62
    %v309 = vunpack.c.l.b16 %v63
    %v310 = vunpack.c.h.b16 %v63
    %v311 = vunpack.c.l.b16 %v64
    %v312 = vunpack.c.h.b16 %v64
    %v313 = vunpack.c.l.b16 %v65
    %v314 = vunpack.c.h.b16 %v65
    %v315 = vunpack.c.l.b16 %v66
    %v316 = vunpack.c.h.b16 %v66
    %v317 = vunpack.c.l.b16 %v67
    %v318 = vunpack.c.h.b16 %v67
    %v319 = vunpack.c.l.b16 %v68
    %v320 = vunpack.c.h.b16 %v68
    %v321 = vunpack.c.l.b16 %v69
    %v322 = vunpack.c.h.b16 %v69
    %v323 = vunpack.c.l.b16 %v70
    %v324 = vunpack.c.h.b16 %v70
    %v325 = vunpack.c.l.b16 %v71
    %v326 = vunpack.c.h.b16 %v71
    %v327 = vunpack.c.l.b16 %v72
    %v328 = vunpack.c.h.b16 %v72
    %v329 = vunpack.c.l.b16 %v73
    %v330 = vunpack.c.h.b16 %v73
    %v331 = vunpack.c.l.b16 %v74
    %v332 = vunpack.c.h.b16 %v74
    %v333 = vunpack.c.l.b16 %v75
    %v334 = vunpack.c.h.b16 %v75
    %v335 = vunpack.c.l.b16 %v76
    %v336 = vunpack.c.h.b16 %v76
    %v337 = vunpack.c.l.b16 %v77
    %v338 = vunpack.c.h.b16 %v77
    %v339 = vunpack.c.l.b16 %v78
    %v340 = vunpack.c.h.b16 %v78
    %v341 = vunpack.c.l.b16 %v79
    %v342 = vunpack.c.h.b16 %v79
    %v343 = vunpack.c.l.b16 %v80
    %v344 = vunpack.c.h.b16 %v80
    %v345 = vunpack.c.l.b16 %v81
    %v346 = vunpack.c.h.b16 %v81
    %v347 = vunpack.c.l.b16 %v82
    %v348 = vunpack.c.h.b16 %v82
    %v349 = vunpack.c.l.b16 %v83
    %v350 = vunpack.c.h.b16 %v83
    %v351 = vunpack.c.l.b16 %v84
    %v352 = vunpack.c.h.b16 %v84
    %v353 = vunpack.c.l.b16 %v85
    %v354 = vunpack.c.h.b16 %v85
    %v355 = vunpack.c.l.b16 %v86
    %v356 = vunpack.c.h.b16 %v86
    %v357 = vunpack.c.l.b16 %v87
    %v358 = vunpack.c.h.b16 %v87
    %v359 = vunpack.c.l.b16 %v88
    %v360 = vunpack.c.h.b16 %v88
    %v361 = vunpack.c.l.b16 %v89
    %v362 = vunpack.c.h.b16 %v89
    %v363 = vunpack.c.l.b16 %v90
    %v364 = vunpack.c.h.b16 %v90
    %v365 = vunpack.c.l.b16 %v91
    %v366 = vunpack.c.h.b16 %v91
    %v367 = vunpack.c.l.b16 %v92
    %v368 = vunpack.c.h.b16 %v92
    %v369 = vunpack.c.l.b16 %v93
    %v370 = vunpack.c.h.b16 %v93
    %v371 = vunpack.c.l.b16 %v94
    %v372 = vunpack.c.h.b16 %v94
    %v373 = vunpack.c.l.b16 %v95
    %v374 = vunpack.c.h.b16 %v95
    %v375 = vunpack.c.l.b16 %v96
    %v376 = vunpack.c.h.b16 %v96
    %v377 = vunpack.c.l.b16 %v97
    %v378 = vunpack.c.h.b16 %v97
    %v379 = vunpack.c.l.b16 %v98
    %v380 = vunpack.c.h.b16 %v98
    %v381 = vunpack.c.l.b16 %v99
    %v382 = vunpack.c.h.b16 %v99
    %v383 = vunpack.c.l.b16 %v100
    %v384 = vunpack.c.h.b16 %v100
    %v385 = vunpack.c.l.b16 %v101
    %v386 = vunpack.c.h.b16 %v101
    %v387 = vunpack.c.l.b16 %v102
    %v388 = vunpack.c.h.b16 %v102
    %v389 = vunpack.c.l.b16 %v103
    %v390 = vunpack.c.h.b16 %v103
    %v391 = vunpack.c.l.b16 %v104
    %v392 = vunpack.c.h.b16 %v104
    %v393 = vunpack.c.l.b16 %v105
    %v394 = vunpack.c.h.b16 %v105
    %v395 = vunpack.c.l.b16 %v106
    %v396 = vunpack.c.h.b16 %v106
    %v397 = vunpack.c.l.b16 %v107
    %v398 = vunpack.c.h.b16 %v107
    %v399 = vunpack.c.l.b16 %v108
    %v400 = vunpack.c.h.b16 %v108
    %v401 = vunpack.c.l.b16 %v109
    %v402 = vunpack.c.h.b16 %v109
    %v403 = vunpack.c.l.b16 %v110
    %v404 = vunpack.c.h.b16 %v110
    %v405 = vunpack.c.l.b16 %v111
    %v406 = vunpack.c.h.b16 %v111
    %v407 = vunpack.c.l.b16 %v112
    %v408 = vunpack.c.h.b16 %v112
    %v409 = vunpack.c.l.b16 %v113
    %v410 = vunpack.c.h.b16 %v113
    %v411 = vunpack.c.l.b16 %v114
    %v412 = vunpack.c.h.b16 %v114
    %v413 = vunpack.c.l.b16 %v115
    %v414 = vunpack.c.h.b16 %v115
    %v415 = vunpack.c.l.b16 %v116
    %v416 = vunpack.c.h.b16 %v116
    %v417 = vunpack.c.l.b16 %v117
    %v418 = vunpack.c.h.b16 %v117
    %v419 = vunpack.c.l.b16 %v118
    %v420 = vunpack.c.h.b16 %v118
    %v421 = vunpack.c.l.b16 %v119
    %v422 = vunpack.c.h.b16 %v119
    %v423 = vunpack.c.l.b16 %v120
    %v424 = vunpack.c.h.b16 %v120
    %v425 = vunpack.c.l.b16 %v121
    %v426 = vunpack.c.h.b16 %v121
    %v427 = vunpack.c.l.b16 %v122
    %v428 = vunpack.c.h.b16 %v122
    %v429 = vunpack.c.l.b16 %v123
    %v430 = vunpack.c.h.b16 %v123
    %v431 = vunpack.c.l.b16 %v124
    %v432 = vunpack.c.h.b16 %v124
    %v433 = vunpack.c.l.b16 %v125
    %v434 = vunpack.c.h.b16 %v125
    %v435 = vunpack.c.l.b16 %v126
    %v436 = vunpack.c.h.b16 %v126
    %v437 = vunpack.c.l.b16 %v127
    %v438 = vunpack.c.h.b16 %v127
    %v439 = vunpack.c.l.b16 %v128
    %v440 = vunpack.c.h.b16 %v128
    %v441 = vunpack.c.l.b16 %v129
    %v442 = vunpack.c.h.b16 %v129
    %v443 = vunpack.c.l.b16 %v130
    %v444 = vunpack.c.h.b16 %v130
    %v445 = vunpack.c.l.b16 %v131
    %v446 = vunpack.c.h.b16 %v131
    %v447 = vunpack.c.l.b16 %v132
    %v448 = vunpack.c.h.b16 %v132
    %v449 = vunpack.c.l.b16 %v133
    %v450 = vunpack.c.h.b16 %v133
    %v451 = vunpack.c.l.b16 %v134
    %v452 = vunpack.c.h.b16 %v134
    %v453 = vunpack.c.l.b16 %v135
    %v454 = vunpack.c.h.b16 %v135
    %v455 = vunpack.c.l.b16 %v136
    %v456 = vunpack.c.h.b16 %v136
    %v457 = vunpack.c.l.b16 %v137
    %v458 = vunpack.c.h.b16 %v137
    %v459 = vunpack.c.l.b16 %v138
    %v460 = vunpack.c.h.b16 %v138
    %v461 = vunpack.c.l.b16 %v139
    %v462 = vunpack.c.h.b16 %v139
    %v463 = vunpack.c.l.b16 %v140
    %v464 = vunpack.c.h.b16 %v140
    %v465 = vunpack.c.l.b16 %v141
    %v466 = vunpack.c.h.b16 %v141
    %v467 = vunpack.c.l.b16 %v142
    %v468 = vunpack.c.h.b16 %v142
    %v469 = vunpack.c.l.b16 %v143
    %v470 = vunpack.c.h.b16 %v143
    %v471 = vunpack.c.l.b16 %v144
    %v472 = vunpack.c.h.b16 %v144
    %v473 = vunpack.c.l.b16 %v145
    %v474 = vunpack.c.h.b16 %v145
    %v475 = vunpack.c.l.b16 %v146
    %v476 = vunpack.c.h.b16 %v146
    %v477 = vpack.c.b16 %v291, %v285
    %v478 = vpack.c.b16 %v292, %v286
    %v479 = vpack.c.b16 %v293, %v287
    %v480 = vpack.c.b16 %v294, %v288
    %v481 = vpack.c.b16 %v295, %v289
    %v482 = vpack.c.b16 %v296, %v290
    %v483 = vpack.c.b16 %v303, %v297
    %v484 = vpack.c.b16 %v304, %v298
    %v485 = vpack.c.b16 %v305, %v299
    %v486 = vpack.c.b16 %v306, %v300
    %v487 = vpack.c.b16 %v307, %v301
    %v488 = vpack.c.b16 %v308, %v302
    %v489 = vpack.c.b16 %v315, %v309
    %v490 = vpack.c.b16 %v316, %v310
    %v491 = vpack.c.b16 %v317, %v311
    %v492 = vpack.c.b16 %v318, %v312
    %v493 = vpack.c.b16 %v319, %v313
    %v494 = vpack.c.b16 %v320, %v314
    %v495 = vpack.c.b16 %v327, %v321
    %v496 = vpack.c.b16 %v328, %v322
    %v497 = vpack.c.b16 %v329, %v323
    %v498 = vpack.c.b16 %v330, %v324
    %v499 = vpack.c.b16 %v331, %v325
    %v500 = vpack.c.b16 %v332, %v326
    %v501 = vpack.c.b16 %v339, %v333
    %v502 = vpack.c.b16 %v340, %v334
    %v503 = vpack.c.b16 %v341, %v335
    %v504 = vpack.c.b16 %v342, %v336
    %v505 = vpack.c.b16 %v343, %v337
    %v506 = vpack.c.b16 %v344, %v338
    %v507 = vpack.c.b16 %v351, %v345
    %v508 = vpack.c.b16 %v352, %v346
    %v509 = vpack.c.b16 %v353, %v347
    %v510 = vpack.c.b16 %v354, %v348
    %v511 = vpack.c.b16 %v355, %v349
    %v512 = vpack.c.b16 %v356, %v350
    %v513 = vpack.c.b16 %v363, %v357
    %v514 = vpack.c.b16 %v364, %v358
    %v515 = vpack.c.b16 %v365, %v359
    %v516 = vpack.c.b16 %v366, %v360
    %v517 = vpack.c.b16 %v367, %v361
    %v518 = vpack.c.b16 %v368, %v362
    %v519 = vpack.c.b16 %v375, %v369
    %v520 = vpack.c.b16 %v376, %v370
    %v521 = vpack.c.b16 %v377, %v371
    %v522 = vpack.c.b16 %v378, %v372
    %v523 = vpack.c.b16 %v379, %v373
    %v524 = vpack.c.b16 %v380, %v374
    %v525 = vpack.c.b16 %v387, %v381
    %v526 = vpack.c.b16 %v388, %v382
    %v527 = vpack.c.b16 %v389, %v383
    %v528 = vpack.c.b16 %v390, %v384
    %v529 = vpack.c.b16 %v391, %v385
    %v530 = vpack.c.b16 %v392, %v386
    %v531 = vpack.c.b16 %v399, %v393
    %v532 = vpack.c.b16 %v400, %v394
    %v533 = vpack.c.b16 %v401, %v395
    %v534 = vpack.c.b16 %v402, %v396
    %v535 = vpack.c.b16 %v403, %v397
    %v536 = vpack.c.b16 %v404, %v398
    %v537 = vpack.c.b16 %v411, %v405
    %v538 = vpack.c.b16 %v412, %v406
    %v539 = vpack.c.b16 %v413, %v407
    %v540 = vpack.c.b16 %v414, %v408
    %v541 = vpack.c.b16 %v415, %v409
    %v542 = vpack.c.b16 %v416, %v410
    %v543 = vpack.c.b16 %v423, %v417
    %v544 = vpack.c.b16 %v424, %v418
    %v545 = vpack.c.b16 %v425, %v419
    %v546 = vpack.c.b16 %v426, %v420
    %v547 = vpack.c.b16 %v427, %v421
    %v548 = vpack.c.b16 %v428, %v422
    %v549 = vpack.c.b16 %v435, %v429
    %v550 = vpack.c.b16 %v436, %v430
    %v551 = vpack.c.b16 %v437, %v431
    %v552 = vpack.c.b16 %v438, %v432
    %v553 = vpack.c.b16 %v439, %v433
    %v554 = vpack.c.b16 %v440, %v434
    %v555 = vpack.c.b16 %v447, %v441
    %v556 = vpack.c.b16 %v448, %v442
    %v557 = vpack.c.b16 %v449, %v443
    %v558 = vpack.c.b16 %v450, %v444
    %v559 = vpack.c.b16 %v451, %v445
    %v560 = vpack.c.b16 %v452, %v446
    %v561 = vpack.c.b16 %v459, %v453
    %v562 = vpack.c.b16 %v460, %v454
    %v563 = vpack.c.b16 %v461, %v455
    %v564 = vpack.c.b16 %v462, %v456
    %v565 = vpack.c.b16 %v463, %v457
    %v566 = vpack.c.b16 %v464, %v458
    %v567 = vpack.c.b16 %v471, %v465
    %v568 = vpack.c.b16 %v472, %v466
    %v569 = vpack.c.b16 %v473, %v467
    %v570 = vpack.c.b16 %v474, %v468
    %v571 = vpack.c.b16 %v475, %v469
    %v572 = vpack.c.b16 %v476, %v470
    %669 = vmatprep.subr.bf16.mxu0 %v478
    %670 = vmatpush1.bf16.msra.mxu0 %v477
    %671 = vmatprep.subr.bf16.mxu0 %v484
    %672 = vmatpush1.bf16.msra.mxu0 %v483
    %673 = vmatprep.subr.bf16.mxu0 %v490
    %674 = vmatpush1.bf16.msra.mxu0 %v489
    %675 = vmatprep.subr.bf16.mxu0 %v496
    %676 = vmatpush1.bf16.msra.mxu0 %v495
    %677 = vmatprep.subr.bf16.mxu0 %v502
    %678 = vmatpush1.bf16.msra.mxu0 %v501
    %679 = vmatprep.subr.bf16.mxu0 %v508
    %680 = vmatpush1.bf16.msra.mxu0 %v507
    %681 = vmatprep.subr.bf16.mxu0 %v514
    %682 = vmatpush1.bf16.msra.mxu0 %v513
    %683 = vmatprep.subr.bf16.mxu0 %v520
    %684 = vmatpush1.bf16.msra.mxu0 %v519
    %685 = vmatprep.subr.bf16.mxu0 %v526
    %686 = vmatpush1.bf16.msra.mxu0 %v525
    %687 = vmatprep.subr.bf16.mxu0 %v532
    %688 = vmatpush1.bf16.msra.mxu0 %v531
    %689 = vmatprep.subr.bf16.mxu0 %v538
    %690 = vmatpush1.bf16.msra.mxu0 %v537
    %691 = vmatprep.subr.bf16.mxu0 %v544
    %692 = vmatpush1.bf16.msra.mxu0 %v543
    %693 = vmatprep.subr.bf16.mxu0 %v550
    %694 = vmatpush1.bf16.msra.mxu0 %v549
    %695 = vmatprep.subr.bf16.mxu0 %v556
    %696 = vmatpush1.bf16.msra.mxu0 %v555
    %697 = vmatprep.subr.bf16.mxu0 %v562
    %698 = vmatpush1.bf16.msra.mxu0 %v561
    %699 = vmatprep.subr.bf16.mxu0 %v568
    %700 = vmatpush1.bf16.msra.mxu0 %v567
    %701 = vmatprep.mubr.bf16.mxu0 %v186
    %702 = vmatmul.mubr.bf16.gmra.mrb[0].mxu0 %v185
    %v703 = vpop.f32.mrb[0].mxu0
    %v704 = vadd.f32 %v152, %v703
    %v705 = vpop.f32.mrb[0].mxu0
    %v706 = vadd.f32 %v156, %v705
    %v707 = vpop.f32.mrb[0].mxu0
    %v708 = vadd.f32 %v152, %v707
    %v709 = vpop.f32.mrb[0].mxu0
    %v710 = vadd.f32 %v156, %v709
    %711 = vdwg.mxu0
    %712 = vmatprep.subr.bf16.mxu0 %v480
    %713 = vmatpush1.bf16.msra.mxu0 %v479
    %714 = vmatprep.subr.bf16.mxu0 %v486
    %715 = vmatpush1.bf16.msra.mxu0 %v485
    %716 = vmatprep.subr.bf16.mxu0 %v492
    %717 = vmatpush1.bf16.msra.mxu0 %v491
    %718 = vmatprep.subr.bf16.mxu0 %v498
    %719 = vmatpush1.bf16.msra.mxu0 %v497
    %720 = vmatprep.subr.bf16.mxu0 %v504
    %721 = vmatpush1.bf16.msra.mxu0 %v503
    %722 = vmatprep.subr.bf16.mxu0 %v510
    %723 = vmatpush1.bf16.msra.mxu0 %v509
    %724 = vmatprep.subr.bf16.mxu0 %v516
    %725 = vmatpush1.bf16.msra.mxu0 %v515
    %726 = vmatprep.subr.bf16.mxu0 %v522
    %727 = vmatpush1.bf16.msra.mxu0 %v521
    %728 = vmatprep.subr.bf16.mxu0 %v528
    %729 = vmatpush1.bf16.msra.mxu0 %v527
    %730 = vmatprep.subr.bf16.mxu0 %v534
    %731 = vmatpush1.bf16.msra.mxu0 %v533
    %732 = vmatprep.subr.bf16.mxu0 %v540
    %733 = vmatpush1.bf16.msra.mxu0 %v539
    %734 = vmatprep.subr.bf16.mxu0 %v546
    %735 = vmatpush1.bf16.msra.mxu0 %v545
    %736 = vmatprep.subr.bf16.mxu0 %v552
    %737 = vmatpush1.bf16.msra.mxu0 %v551
    %738 = vmatprep.subr.bf16.mxu0 %v558
    %739 = vmatpush1.bf16.msra.mxu0 %v557
    %740 = vmatprep.subr.bf16.mxu0 %v564
    %741 = vmatpush1.bf16.msra.mxu0 %v563
    %742 = vmatprep.subr.bf16.mxu0 %v570
    %743 = vmatpush1.bf16.msra.mxu0 %v569
    %744 = vmatprep.mubr.bf16.mxu0 %v186
    %745 = vmatmul.mubr.bf16.gmra.mrb[0].mxu0 %v185
    %v746 = vpop.f32.mrb[0].mxu0
    %v747 = vadd.f32 %v160, %v746
    %v748 = vpop.f32.mrb[0].mxu0
    %v749 = vadd.f32 %v164, %v748
    %v750 = vpop.f32.mrb[0].mxu0
    %v751 = vadd.f32 %v160, %v750
    %v752 = vpop.f32.mrb[0].mxu0
    %v753 = vadd.f32 %v164, %v752
    %754 = vdwg.mxu0
    %755 = vmatprep.subr.bf16.mxu0 %v482
    %756 = vmatpush1.bf16.msra.mxu0 %v481
    %757 = vmatprep.subr.bf16.mxu0 %v488
    %758 = vmatpush1.bf16.msra.mxu0 %v487
    %759 = vmatprep.subr.bf16.mxu0 %v494
    %760 = vmatpush1.bf16.msra.mxu0 %v493
    %761 = vmatprep.subr.bf16.mxu0 %v500
    %762 = vmatpush1.bf16.msra.mxu0 %v499
    %763 = vmatprep.subr.bf16.mxu0 %v506
    %764 = vmatpush1.bf16.msra.mxu0 %v505
    %765 = vmatprep.subr.bf16.mxu0 %v512
    %766 = vmatpush1.bf16.msra.mxu0 %v511
    %767 = vmatprep.subr.bf16.mxu0 %v518
    %768 = vmatpush1.bf16.msra.mxu0 %v517
    %769 = vmatprep.subr.bf16.mxu0 %v524
    %770 = vmatpush1.bf16.msra.mxu0 %v523
    %771 = vmatprep.subr.bf16.mxu0 %v530
    %772 = vmatpush1.bf16.msra.mxu0 %v529
    %773 = vmatprep.subr.bf16.mxu0 %v536
    %774 = vmatpush1.bf16.msra.mxu0 %v535
    %775 = vmatprep.subr.bf16.mxu0 %v542
    %776 = vmatpush1.bf16.msra.mxu0 %v541
    %777 = vmatprep.subr.bf16.mxu0 %v548
    %778 = vmatpush1.bf16.msra.mxu0 %v547
    %779 = vmatprep.subr.bf16.mxu0 %v554
    %780 = vmatpush1.bf16.msra.mxu0 %v553
    %781 = vmatprep.subr.bf16.mxu0 %v560
    %782 = vmatpush1.bf16.msra.mxu0 %v559
    %783 = vmatprep.subr.bf16.mxu0 %v566
    %784 = vmatpush1.bf16.msra.mxu0 %v565
    %785 = vmatprep.subr.bf16.mxu0 %v572
    %786 = vmatpush1.bf16.msra.mxu0 %v571
    %787 = vmatprep.mubr.bf16.mxu0 %v186
    %788 = vmatmul.mubr.bf16.gmra.mrb[0].mxu0 %v185
    %v789 = vpop.f32.mrb[0].mxu0
    %v790 = vadd.f32 %v168, %v789
    %v791 = vpop.f32.mrb[0].mxu0
    %v792 = vadd.f32 %v172, %v791
    %v793 = vpop.f32.mrb[0].mxu0
    %v794 = vadd.f32 %v168, %v793
    %v795 = vpop.f32.mrb[0].mxu0
    %v796 = vadd.f32 %v172, %v795
    %797 = vdwg.mxu0
    %v798 = vld [vmem:[%s6] sm:$0xff]
    %v799 = vld [vmem:[%s6 + $0x8] sm:$0xff]
    %v800 = vld [vmem:[%s6 + $0x10] sm:$0xff]
    %v801 = vld [vmem:[%s6 + $0x18] sm:$0xff]
    %v802 = vld [vmem:[%s7] sm:$0xff]
    %v803 = vld [vmem:[%s7 + $0x8] sm:$0xff]
    %v804 = vld [vmem:[%s7 + $0x10] sm:$0xff]
    %v805 = vld [vmem:[%s7 + $0x18] sm:$0xff]
    %v806 = vmul.f32 %v704, %v798
    %v807 = vmul.f32 %v706, %v799
    %v808 = vmul.f32 %v708, %v800
    %v809 = vmul.f32 %v710, %v801
    %v810 = vmul.f32 %v706, %v802
    %v811 = vmul.f32 %v704, %v803
    %v812 = vmul.f32 %v710, %v804
    %v813 = vmul.f32 %v708, %v805
    %v814 = vadd.f32 %v806, %v810
    %v815 = vadd.f32 %v807, %v811
    %v816 = vadd.f32 %v808, %v812
    %v817 = vadd.f32 %v809, %v813
    %v818 = vmul.f32 %v747, %v798
    %v819 = vmul.f32 %v749, %v799
    %v820 = vmul.f32 %v751, %v800
    %v821 = vmul.f32 %v753, %v801
    %v822 = vmul.f32 %v749, %v802
    %v823 = vmul.f32 %v747, %v803
    %v824 = vmul.f32 %v753, %v804
    %v825 = vmul.f32 %v751, %v805
    %v826 = vadd.f32 %v818, %v822
    %v827 = vadd.f32 %v819, %v823
    %v828 = vadd.f32 %v820, %v824
    %v829 = vadd.f32 %v821, %v825
    %832 = vrot.lane.b32.xlu0 %v814, 112
    %v833 = vpop.permute.xlu0 %832
    %834 = vrot.lane.b32.xlu0 %v816, 112
    %v835 = vpop.permute.xlu0 %834
    %838 = vrot.lane.b32.xlu0 %v814, 96
    %v839 = vpop.permute.xlu0 %838
    %840 = vrot.lane.b32.xlu0 %v816, 96
    %v841 = vpop.permute.xlu0 %840
    %844 = vrot.lane.b32.xlu0 %v814, 80
    %v845 = vpop.permute.xlu0 %844
    %846 = vrot.lane.b32.xlu0 %v816, 80
    %v847 = vpop.permute.xlu0 %846
    %850 = vrot.lane.b32.xlu0 %v814, 64
    %v851 = vpop.permute.xlu0 %850
    %852 = vrot.lane.b32.xlu0 %v816, 64
    %v853 = vpop.permute.xlu0 %852
    %856 = vrot.lane.b32.xlu0 %v814, 48
    %v857 = vpop.permute.xlu0 %856
    %858 = vrot.lane.b32.xlu0 %v816, 48
    %v859 = vpop.permute.xlu0 %858
    %862 = vrot.lane.b32.xlu0 %v814, 32
    %v863 = vpop.permute.xlu0 %862
    %864 = vrot.lane.b32.xlu0 %v816, 32
    %v865 = vpop.permute.xlu0 %864
    %868 = vrot.lane.b32.xlu0 %v814, 16
    %v869 = vpop.permute.xlu0 %868
    %870 = vrot.lane.b32.xlu0 %v816, 16
    %v871 = vpop.permute.xlu0 %870
    %v874 = vcombine.low %v814, %v839
    %v875 = vcombine.high %v814, %v839
    %v877 = vunpack.c.l.s4 1983009808
    %v878 = vunpack.c.0.s8 %v877
    %v879 = vlaneseq
    %v880 = vshrl.u32 %v879, 7
    %v881 = vsub.s32 %v878, %v880
    %v882 = vrot.slane %v874, %v881
    %v884 = vunpack.c.l.s4 1983009808
    %v885 = vunpack.c.0.s8 %v884
    %v886 = vlaneseq
    %v887 = vshrl.u32 %v886, 7
    %v888 = vsub.s32 %v885, %v887
    %v889 = vrot.slane %v875, %v888
    %v890 = vcombine.low %v833, %v845
    %v891 = vcombine.high %v833, %v845
    %v893 = vunpack.c.l.s4 1983009808
    %v894 = vunpack.c.0.s8 %v893
    %v895 = vlaneseq
    %v896 = vshrl.u32 %v895, 7
    %v897 = vsub.s32 %v894, %v896
    %v898 = vrot.slane %v890, %v897
    %v900 = vunpack.c.l.s4 1983009808
    %v901 = vunpack.c.0.s8 %v900
    %v902 = vlaneseq
    %v903 = vshrl.u32 %v902, 7
    %v904 = vsub.s32 %v901, %v903
    %v905 = vrot.slane %v891, %v904
    %v906 = vcombine.low %v851, %v863
    %v907 = vcombine.high %v851, %v863
    %v909 = vunpack.c.l.s4 1983009808
    %v910 = vunpack.c.0.s8 %v909
    %v911 = vlaneseq
    %v912 = vshrl.u32 %v911, 7
    %v913 = vsub.s32 %v910, %v912
    %v914 = vrot.slane %v906, %v913
    %v916 = vunpack.c.l.s4 1983009808
    %v917 = vunpack.c.0.s8 %v916
    %v918 = vlaneseq
    %v919 = vshrl.u32 %v918, 7
    %v920 = vsub.s32 %v917, %v919
    %v921 = vrot.slane %v907, %v920
    %v922 = vcombine.low %v857, %v869
    %v923 = vcombine.high %v857, %v869
    %v925 = vunpack.c.l.s4 1983009808
    %v926 = vunpack.c.0.s8 %v925
    %v927 = vlaneseq
    %v928 = vshrl.u32 %v927, 7
    %v929 = vsub.s32 %v926, %v928
    %v930 = vrot.slane %v922, %v929
    %v932 = vunpack.c.l.s4 1983009808
    %v933 = vunpack.c.0.s8 %v932
    %v934 = vlaneseq
    %v935 = vshrl.u32 %v934, 7
    %v936 = vsub.s32 %v933, %v935
    %v937 = vrot.slane %v923, %v936
    %v938 = vcombine.low %v882, %v898
    %v939 = vcombine.high %v882, %v898
    %v941 = vunpack.c.l.s4 1934713408
    %v942 = vunpack.c.0.s8 %v941
    %v943 = vlaneseq
    %v944 = vshrl.u32 %v943, 7
    %v945 = vsub.s32 %v942, %v944
    %v946 = vrot.slane %v938, %v945
    %v948 = vunpack.c.l.s4 1934713408
    %v949 = vunpack.c.0.s8 %v948
    %v950 = vlaneseq
    %v951 = vshrl.u32 %v950, 7
    %v952 = vsub.s32 %v949, %v951
    %v953 = vrot.slane %v939, %v952
    %v954 = vcombine.low %v889, %v905
    %v955 = vcombine.high %v889, %v905
    %v957 = vunpack.c.l.s4 1934713408
    %v958 = vunpack.c.0.s8 %v957
    %v959 = vlaneseq
    %v960 = vshrl.u32 %v959, 7
    %v961 = vsub.s32 %v958, %v960
    %v962 = vrot.slane %v954, %v961
    %v964 = vunpack.c.l.s4 1934713408
    %v965 = vunpack.c.0.s8 %v964
    %v966 = vlaneseq
    %v967 = vshrl.u32 %v966, 7
    %v968 = vsub.s32 %v965, %v967
    %v969 = vrot.slane %v955, %v968
    %v970 = vcombine.low %v914, %v930
    %v971 = vcombine.high %v914, %v930
    %v973 = vunpack.c.l.s4 1934713408
    %v974 = vunpack.c.0.s8 %v973
    %v975 = vlaneseq
    %v976 = vshrl.u32 %v975, 7
    %v977 = vsub.s32 %v974, %v976
    %v978 = vrot.slane %v970, %v977
    %v980 = vunpack.c.l.s4 1934713408
    %v981 = vunpack.c.0.s8 %v980
    %v982 = vlaneseq
    %v983 = vshrl.u32 %v982, 7
    %v984 = vsub.s32 %v981, %v983
    %v985 = vrot.slane %v971, %v984
    %v986 = vcombine.low %v921, %v937
    %v987 = vcombine.high %v921, %v937
    %v989 = vunpack.c.l.s4 1934713408
    %v990 = vunpack.c.0.s8 %v989
    %v991 = vlaneseq
    %v992 = vshrl.u32 %v991, 7
    %v993 = vsub.s32 %v990, %v992
    %v994 = vrot.slane %v986, %v993
    %v996 = vunpack.c.l.s4 1934713408
    %v997 = vunpack.c.0.s8 %v996
    %v998 = vlaneseq
    %v999 = vshrl.u32 %v998, 7
    %v1000 = vsub.s32 %v997, %v999
    %v1001 = vrot.slane %v987, %v1000
    %v1002 = vcombine.low %v946, %v978
    %v1003 = vcombine.high %v946, %v978
    %v1004 = vcombine.low %v953, %v985
    %v1005 = vcombine.high %v953, %v985
    %v1006 = vcombine.low %v962, %v994
    %v1007 = vcombine.high %v962, %v994
    %v1008 = vcombine.low %v969, %v1001
    %v1009 = vcombine.high %v969, %v1001
    %v1010 = vcombine.low %v816, %v841
    %v1011 = vcombine.high %v816, %v841
    %v1013 = vunpack.c.l.s4 1983009808
    %v1014 = vunpack.c.0.s8 %v1013
    %v1015 = vlaneseq
    %v1016 = vshrl.u32 %v1015, 7
    %v1017 = vsub.s32 %v1014, %v1016
    %v1018 = vrot.slane %v1010, %v1017
    %v1020 = vunpack.c.l.s4 1983009808
    %v1021 = vunpack.c.0.s8 %v1020
    %v1022 = vlaneseq
    %v1023 = vshrl.u32 %v1022, 7
    %v1024 = vsub.s32 %v1021, %v1023
    %v1025 = vrot.slane %v1011, %v1024
    %v1026 = vcombine.low %v835, %v847
    %v1027 = vcombine.high %v835, %v847
    %v1029 = vunpack.c.l.s4 1983009808
    %v1030 = vunpack.c.0.s8 %v1029
    %v1031 = vlaneseq
    %v1032 = vshrl.u32 %v1031, 7
    %v1033 = vsub.s32 %v1030, %v1032
    %v1034 = vrot.slane %v1026, %v1033
    %v1036 = vunpack.c.l.s4 1983009808
    %v1037 = vunpack.c.0.s8 %v1036
    %v1038 = vlaneseq
    %v1039 = vshrl.u32 %v1038, 7
    %v1040 = vsub.s32 %v1037, %v1039
    %v1041 = vrot.slane %v1027, %v1040
    %v1042 = vcombine.low %v853, %v865
    %v1043 = vcombine.high %v853, %v865
    %v1045 = vunpack.c.l.s4 1983009808
    %v1046 = vunpack.c.0.s8 %v1045
    %v1047 = vlaneseq
    %v1048 = vshrl.u32 %v1047, 7
    %v1049 = vsub.s32 %v1046, %v1048
    %v1050 = vrot.slane %v1042, %v1049
    %v1052 = vunpack.c.l.s4 1983009808
    %v1053 = vunpack.c.0.s8 %v1052
    %v1054 = vlaneseq
    %v1055 = vshrl.u32 %v1054, 7
    %v1056 = vsub.s32 %v1053, %v1055
    %v1057 = vrot.slane %v1043, %v1056
    %v1058 = vcombine.low %v859, %v871
    %v1059 = vcombine.high %v859, %v871
    %v1061 = vunpack.c.l.s4 1983009808
    %v1062 = vunpack.c.0.s8 %v1061
    %v1063 = vlaneseq
    %v1064 = vshrl.u32 %v1063, 7
    %v1065 = vsub.s32 %v1062, %v1064
    %v1066 = vrot.slane %v1058, %v1065
    %v1068 = vunpack.c.l.s4 1983009808
    %v1069 = vunpack.c.0.s8 %v1068
    %v1070 = vlaneseq
    %v1071 = vshrl.u32 %v1070, 7
    %v1072 = vsub.s32 %v1069, %v1071
    %v1073 = vrot.slane %v1059, %v1072
    %v1074 = vcombine.low %v1018, %v1034
    %v1075 = vcombine.high %v1018, %v1034
    %v1077 = vunpack.c.l.s4 1934713408
    %v1078 = vunpack.c.0.s8 %v1077
    %v1079 = vlaneseq
    %v1080 = vshrl.u32 %v1079, 7
    %v1081 = vsub.s32 %v1078, %v1080
    %v1082 = vrot.slane %v1074, %v1081
    %v1084 = vunpack.c.l.s4 1934713408
    %v1085 = vunpack.c.0.s8 %v1084
    %v1086 = vlaneseq
    %v1087 = vshrl.u32 %v1086, 7
    %v1088 = vsub.s32 %v1085, %v1087
    %v1089 = vrot.slane %v1075, %v1088
    %v1090 = vcombine.low %v1025, %v1041
    %v1091 = vcombine.high %v1025, %v1041
    %v1093 = vunpack.c.l.s4 1934713408
    %v1094 = vunpack.c.0.s8 %v1093
    %v1095 = vlaneseq
    %v1096 = vshrl.u32 %v1095, 7
    %v1097 = vsub.s32 %v1094, %v1096
    %v1098 = vrot.slane %v1090, %v1097
    %v1100 = vunpack.c.l.s4 1934713408
    %v1101 = vunpack.c.0.s8 %v1100
    %v1102 = vlaneseq
    %v1103 = vshrl.u32 %v1102, 7
    %v1104 = vsub.s32 %v1101, %v1103
    %v1105 = vrot.slane %v1091, %v1104
    %v1106 = vcombine.low %v1050, %v1066
    %v1107 = vcombine.high %v1050, %v1066
    %v1109 = vunpack.c.l.s4 1934713408
    %v1110 = vunpack.c.0.s8 %v1109
    %v1111 = vlaneseq
    %v1112 = vshrl.u32 %v1111, 7
    %v1113 = vsub.s32 %v1110, %v1112
    %v1114 = vrot.slane %v1106, %v1113
    %v1116 = vunpack.c.l.s4 1934713408
    %v1117 = vunpack.c.0.s8 %v1116
    %v1118 = vlaneseq
    %v1119 = vshrl.u32 %v1118, 7
    %v1120 = vsub.s32 %v1117, %v1119
    %v1121 = vrot.slane %v1107, %v1120
    %v1122 = vcombine.low %v1057, %v1073
    %v1123 = vcombine.high %v1057, %v1073
    %v1125 = vunpack.c.l.s4 1934713408
    %v1126 = vunpack.c.0.s8 %v1125
    %v1127 = vlaneseq
    %v1128 = vshrl.u32 %v1127, 7
    %v1129 = vsub.s32 %v1126, %v1128
    %v1130 = vrot.slane %v1122, %v1129
    %v1132 = vunpack.c.l.s4 1934713408
    %v1133 = vunpack.c.0.s8 %v1132
    %v1134 = vlaneseq
    %v1135 = vshrl.u32 %v1134, 7
    %v1136 = vsub.s32 %v1133, %v1135
    %v1137 = vrot.slane %v1123, %v1136
    %v1138 = vcombine.low %v1082, %v1114
    %v1139 = vcombine.high %v1082, %v1114
    %v1140 = vcombine.low %v1089, %v1121
    %v1141 = vcombine.high %v1089, %v1121
    %v1142 = vcombine.low %v1098, %v1130
    %v1143 = vcombine.high %v1098, %v1130
    %v1144 = vcombine.low %v1105, %v1137
    %v1145 = vcombine.high %v1105, %v1137
    %1148 = vrot.lane.b32.xlu0 %v815, 112
    %v1149 = vpop.permute.xlu0 %1148
    %1150 = vrot.lane.b32.xlu0 %v817, 112
    %v1151 = vpop.permute.xlu0 %1150
    %1154 = vrot.lane.b32.xlu0 %v815, 96
    %v1155 = vpop.permute.xlu0 %1154
    %1156 = vrot.lane.b32.xlu0 %v817, 96
    %v1157 = vpop.permute.xlu0 %1156
    %1160 = vrot.lane.b32.xlu0 %v815, 80
    %v1161 = vpop.permute.xlu0 %1160
    %1162 = vrot.lane.b32.xlu0 %v817, 80
    %v1163 = vpop.permute.xlu0 %1162
    %1166 = vrot.lane.b32.xlu0 %v815, 64
    %v1167 = vpop.permute.xlu0 %1166
    %1168 = vrot.lane.b32.xlu0 %v817, 64
    %v1169 = vpop.permute.xlu0 %1168
    %1172 = vrot.lane.b32.xlu0 %v815, 48
    %v1173 = vpop.permute.xlu0 %1172
    %1174 = vrot.lane.b32.xlu0 %v817, 48
    %v1175 = vpop.permute.xlu0 %1174
    %1178 = vrot.lane.b32.xlu0 %v815, 32
    %v1179 = vpop.permute.xlu0 %1178
    %1180 = vrot.lane.b32.xlu0 %v817, 32
    %v1181 = vpop.permute.xlu0 %1180
    %1184 = vrot.lane.b32.xlu0 %v815, 16
    %v1185 = vpop.permute.xlu0 %1184
    %1186 = vrot.lane.b32.xlu0 %v817, 16
    %v1187 = vpop.permute.xlu0 %1186
    %v1190 = vcombine.low %v815, %v1155
    %v1191 = vcombine.high %v815, %v1155
    %v1193 = vunpack.c.l.s4 1983009808
    %v1194 = vunpack.c.0.s8 %v1193
    %v1195 = vlaneseq
    %v1196 = vshrl.u32 %v1195, 7
    %v1197 = vsub.s32 %v1194, %v1196
    %v1198 = vrot.slane %v1190, %v1197
    %v1200 = vunpack.c.l.s4 1983009808
    %v1201 = vunpack.c.0.s8 %v1200
    %v1202 = vlaneseq
    %v1203 = vshrl.u32 %v1202, 7
    %v1204 = vsub.s32 %v1201, %v1203
    %v1205 = vrot.slane %v1191, %v1204
    %v1206 = vcombine.low %v1149, %v1161
    %v1207 = vcombine.high %v1149, %v1161
    %v1209 = vunpack.c.l.s4 1983009808
    %v1210 = vunpack.c.0.s8 %v1209
    %v1211 = vlaneseq
    %v1212 = vshrl.u32 %v1211, 7
    %v1213 = vsub.s32 %v1210, %v1212
    %v1214 = vrot.slane %v1206, %v1213
    %v1216 = vunpack.c.l.s4 1983009808
    %v1217 = vunpack.c.0.s8 %v1216
    %v1218 = vlaneseq
    %v1219 = vshrl.u32 %v1218, 7
    %v1220 = vsub.s32 %v1217, %v1219
    %v1221 = vrot.slane %v1207, %v1220
    %v1222 = vcombine.low %v1167, %v1179
    %v1223 = vcombine.high %v1167, %v1179
    %v1225 = vunpack.c.l.s4 1983009808
    %v1226 = vunpack.c.0.s8 %v1225
    %v1227 = vlaneseq
    %v1228 = vshrl.u32 %v1227, 7
    %v1229 = vsub.s32 %v1226, %v1228
    %v1230 = vrot.slane %v1222, %v1229
    %v1232 = vunpack.c.l.s4 1983009808
    %v1233 = vunpack.c.0.s8 %v1232
    %v1234 = vlaneseq
    %v1235 = vshrl.u32 %v1234, 7
    %v1236 = vsub.s32 %v1233, %v1235
    %v1237 = vrot.slane %v1223, %v1236
    %v1238 = vcombine.low %v1173, %v1185
    %v1239 = vcombine.high %v1173, %v1185
    %v1241 = vunpack.c.l.s4 1983009808
    %v1242 = vunpack.c.0.s8 %v1241
    %v1243 = vlaneseq
    %v1244 = vshrl.u32 %v1243, 7
    %v1245 = vsub.s32 %v1242, %v1244
    %v1246 = vrot.slane %v1238, %v1245
    %v1248 = vunpack.c.l.s4 1983009808
    %v1249 = vunpack.c.0.s8 %v1248
    %v1250 = vlaneseq
    %v1251 = vshrl.u32 %v1250, 7
    %v1252 = vsub.s32 %v1249, %v1251
    %v1253 = vrot.slane %v1239, %v1252
    %v1254 = vcombine.low %v1198, %v1214
    %v1255 = vcombine.high %v1198, %v1214
    %v1257 = vunpack.c.l.s4 1934713408
    %v1258 = vunpack.c.0.s8 %v1257
    %v1259 = vlaneseq
    %v1260 = vshrl.u32 %v1259, 7
    %v1261 = vsub.s32 %v1258, %v1260
    %v1262 = vrot.slane %v1254, %v1261
    %v1264 = vunpack.c.l.s4 1934713408
    %v1265 = vunpack.c.0.s8 %v1264
    %v1266 = vlaneseq
    %v1267 = vshrl.u32 %v1266, 7
    %v1268 = vsub.s32 %v1265, %v1267
    %v1269 = vrot.slane %v1255, %v1268
    %v1270 = vcombine.low %v1205, %v1221
    %v1271 = vcombine.high %v1205, %v1221
    %v1273 = vunpack.c.l.s4 1934713408
    %v1274 = vunpack.c.0.s8 %v1273
    %v1275 = vlaneseq
    %v1276 = vshrl.u32 %v1275, 7
    %v1277 = vsub.s32 %v1274, %v1276
    %v1278 = vrot.slane %v1270, %v1277
    %v1280 = vunpack.c.l.s4 1934713408
    %v1281 = vunpack.c.0.s8 %v1280
    %v1282 = vlaneseq
    %v1283 = vshrl.u32 %v1282, 7
    %v1284 = vsub.s32 %v1281, %v1283
    %v1285 = vrot.slane %v1271, %v1284
    %v1286 = vcombine.low %v1230, %v1246
    %v1287 = vcombine.high %v1230, %v1246
    %v1289 = vunpack.c.l.s4 1934713408
    %v1290 = vunpack.c.0.s8 %v1289
    %v1291 = vlaneseq
    %v1292 = vshrl.u32 %v1291, 7
    %v1293 = vsub.s32 %v1290, %v1292
    %v1294 = vrot.slane %v1286, %v1293
    %v1296 = vunpack.c.l.s4 1934713408
    %v1297 = vunpack.c.0.s8 %v1296
    %v1298 = vlaneseq
    %v1299 = vshrl.u32 %v1298, 7
    %v1300 = vsub.s32 %v1297, %v1299
    %v1301 = vrot.slane %v1287, %v1300
    %v1302 = vcombine.low %v1237, %v1253
    %v1303 = vcombine.high %v1237, %v1253
    %v1305 = vunpack.c.l.s4 1934713408
    %v1306 = vunpack.c.0.s8 %v1305
    %v1307 = vlaneseq
    %v1308 = vshrl.u32 %v1307, 7
    %v1309 = vsub.s32 %v1306, %v1308
    %v1310 = vrot.slane %v1302, %v1309
    %v1312 = vunpack.c.l.s4 1934713408
    %v1313 = vunpack.c.0.s8 %v1312
    %v1314 = vlaneseq
    %v1315 = vshrl.u32 %v1314, 7
    %v1316 = vsub.s32 %v1313, %v1315
    %v1317 = vrot.slane %v1303, %v1316
    %v1318 = vcombine.low %v1262, %v1294
    %v1319 = vcombine.high %v1262, %v1294
    %v1320 = vcombine.low %v1269, %v1301
    %v1321 = vcombine.high %v1269, %v1301
    %v1322 = vcombine.low %v1278, %v1310
    %v1323 = vcombine.high %v1278, %v1310
    %v1324 = vcombine.low %v1285, %v1317
    %v1325 = vcombine.high %v1285, %v1317
    %v1326 = vcombine.low %v817, %v1157
    %v1327 = vcombine.high %v817, %v1157
    %v1329 = vunpack.c.l.s4 1983009808
    %v1330 = vunpack.c.0.s8 %v1329
    %v1331 = vlaneseq
    %v1332 = vshrl.u32 %v1331, 7
    %v1333 = vsub.s32 %v1330, %v1332
    %v1334 = vrot.slane %v1326, %v1333
    %v1336 = vunpack.c.l.s4 1983009808
    %v1337 = vunpack.c.0.s8 %v1336
    %v1338 = vlaneseq
    %v1339 = vshrl.u32 %v1338, 7
    %v1340 = vsub.s32 %v1337, %v1339
    %v1341 = vrot.slane %v1327, %v1340
    %v1342 = vcombine.low %v1151, %v1163
    %v1343 = vcombine.high %v1151, %v1163
    %v1345 = vunpack.c.l.s4 1983009808
    %v1346 = vunpack.c.0.s8 %v1345
    %v1347 = vlaneseq
    %v1348 = vshrl.u32 %v1347, 7
    %v1349 = vsub.s32 %v1346, %v1348
    %v1350 = vrot.slane %v1342, %v1349
    %v1352 = vunpack.c.l.s4 1983009808
    %v1353 = vunpack.c.0.s8 %v1352
    %v1354 = vlaneseq
    %v1355 = vshrl.u32 %v1354, 7
    %v1356 = vsub.s32 %v1353, %v1355
    %v1357 = vrot.slane %v1343, %v1356
    %v1358 = vcombine.low %v1169, %v1181
    %v1359 = vcombine.high %v1169, %v1181
    %v1361 = vunpack.c.l.s4 1983009808
    %v1362 = vunpack.c.0.s8 %v1361
    %v1363 = vlaneseq
    %v1364 = vshrl.u32 %v1363, 7
    %v1365 = vsub.s32 %v1362, %v1364
    %v1366 = vrot.slane %v1358, %v1365
    %v1368 = vunpack.c.l.s4 1983009808
    %v1369 = vunpack.c.0.s8 %v1368
    %v1370 = vlaneseq
    %v1371 = vshrl.u32 %v1370, 7
    %v1372 = vsub.s32 %v1369, %v1371
    %v1373 = vrot.slane %v1359, %v1372
    %v1374 = vcombine.low %v1175, %v1187
    %v1375 = vcombine.high %v1175, %v1187
    %v1377 = vunpack.c.l.s4 1983009808
    %v1378 = vunpack.c.0.s8 %v1377
    %v1379 = vlaneseq
    %v1380 = vshrl.u32 %v1379, 7
    %v1381 = vsub.s32 %v1378, %v1380
    %v1382 = vrot.slane %v1374, %v1381
    %v1384 = vunpack.c.l.s4 1983009808
    %v1385 = vunpack.c.0.s8 %v1384
    %v1386 = vlaneseq
    %v1387 = vshrl.u32 %v1386, 7
    %v1388 = vsub.s32 %v1385, %v1387
    %v1389 = vrot.slane %v1375, %v1388
    %v1390 = vcombine.low %v1334, %v1350
    %v1391 = vcombine.high %v1334, %v1350
    %v1393 = vunpack.c.l.s4 1934713408
    %v1394 = vunpack.c.0.s8 %v1393
    %v1395 = vlaneseq
    %v1396 = vshrl.u32 %v1395, 7
    %v1397 = vsub.s32 %v1394, %v1396
    %v1398 = vrot.slane %v1390, %v1397
    %v1400 = vunpack.c.l.s4 1934713408
    %v1401 = vunpack.c.0.s8 %v1400
    %v1402 = vlaneseq
    %v1403 = vshrl.u32 %v1402, 7
    %v1404 = vsub.s32 %v1401, %v1403
    %v1405 = vrot.slane %v1391, %v1404
    %v1406 = vcombine.low %v1341, %v1357
    %v1407 = vcombine.high %v1341, %v1357
    %v1409 = vunpack.c.l.s4 1934713408
    %v1410 = vunpack.c.0.s8 %v1409
    %v1411 = vlaneseq
    %v1412 = vshrl.u32 %v1411, 7
    %v1413 = vsub.s32 %v1410, %v1412
    %v1414 = vrot.slane %v1406, %v1413
    %v1416 = vunpack.c.l.s4 1934713408
    %v1417 = vunpack.c.0.s8 %v1416
    %v1418 = vlaneseq
    %v1419 = vshrl.u32 %v1418, 7
    %v1420 = vsub.s32 %v1417, %v1419
    %v1421 = vrot.slane %v1407, %v1420
    %v1422 = vcombine.low %v1366, %v1382
    %v1423 = vcombine.high %v1366, %v1382
    %v1425 = vunpack.c.l.s4 1934713408
    %v1426 = vunpack.c.0.s8 %v1425
    %v1427 = vlaneseq
    %v1428 = vshrl.u32 %v1427, 7
    %v1429 = vsub.s32 %v1426, %v1428
    %v1430 = vrot.slane %v1422, %v1429
    %v1432 = vunpack.c.l.s4 1934713408
    %v1433 = vunpack.c.0.s8 %v1432
    %v1434 = vlaneseq
    %v1435 = vshrl.u32 %v1434, 7
    %v1436 = vsub.s32 %v1433, %v1435
    %v1437 = vrot.slane %v1423, %v1436
    %v1438 = vcombine.low %v1373, %v1389
    %v1439 = vcombine.high %v1373, %v1389
    %v1441 = vunpack.c.l.s4 1934713408
    %v1442 = vunpack.c.0.s8 %v1441
    %v1443 = vlaneseq
    %v1444 = vshrl.u32 %v1443, 7
    %v1445 = vsub.s32 %v1442, %v1444
    %v1446 = vrot.slane %v1438, %v1445
    %v1448 = vunpack.c.l.s4 1934713408
    %v1449 = vunpack.c.0.s8 %v1448
    %v1450 = vlaneseq
    %v1451 = vshrl.u32 %v1450, 7
    %v1452 = vsub.s32 %v1449, %v1451
    %v1453 = vrot.slane %v1439, %v1452
    %v1454 = vcombine.low %v1398, %v1430
    %v1455 = vcombine.high %v1398, %v1430
    %v1456 = vcombine.low %v1405, %v1437
    %v1457 = vcombine.high %v1405, %v1437
    %v1458 = vcombine.low %v1414, %v1446
    %v1459 = vcombine.high %v1414, %v1446
    %v1460 = vcombine.low %v1421, %v1453
    %v1461 = vcombine.high %v1421, %v1453
    %1478 = vrot.lane.b32.xlu0 %v1318, 16
    %v1479 = vpop.permute.xlu0 %1478
    %1480 = vrot.lane.b32.xlu0 %v1319, 16
    %v1481 = vpop.permute.xlu0 %1480
    %1482 = vrot.lane.b32.xlu0 %v1320, 16
    %v1483 = vpop.permute.xlu0 %1482
    %1484 = vrot.lane.b32.xlu0 %v1321, 16
    %v1485 = vpop.permute.xlu0 %1484
    %1486 = vrot.lane.b32.xlu0 %v1322, 16
    %v1487 = vpop.permute.xlu0 %1486
    %1488 = vrot.lane.b32.xlu0 %v1323, 16
    %v1489 = vpop.permute.xlu0 %1488
    %1490 = vrot.lane.b32.xlu0 %v1324, 16
    %v1491 = vpop.permute.xlu0 %1490
    %1492 = vrot.lane.b32.xlu0 %v1325, 16
    %v1493 = vpop.permute.xlu0 %1492
    %1494 = vrot.lane.b32.xlu0 %v1454, 16
    %v1495 = vpop.permute.xlu0 %1494
    %1496 = vrot.lane.b32.xlu0 %v1455, 16
    %v1497 = vpop.permute.xlu0 %1496
    %1498 = vrot.lane.b32.xlu0 %v1456, 16
    %v1499 = vpop.permute.xlu0 %1498
    %1500 = vrot.lane.b32.xlu0 %v1457, 16
    %v1501 = vpop.permute.xlu0 %1500
    %1502 = vrot.lane.b32.xlu0 %v1458, 16
    %v1503 = vpop.permute.xlu0 %1502
    %1504 = vrot.lane.b32.xlu0 %v1459, 16
    %v1505 = vpop.permute.xlu0 %1504
    %1506 = vrot.lane.b32.xlu0 %v1460, 16
    %v1507 = vpop.permute.xlu0 %1506
    %1508 = vrot.lane.b32.xlu0 %v1461, 16
    %v1509 = vpop.permute.xlu0 %1508
    %vm1526 = vcmask 130048
    %v1527 = vsel %vm1526, %v1002, %v1479
    %v1528 = vsel %vm1526, %v1003, %v1481
    %v1529 = vsel %vm1526, %v1004, %v1483
    %v1530 = vsel %vm1526, %v1005, %v1485
    %v1531 = vsel %vm1526, %v1006, %v1487
    %v1532 = vsel %vm1526, %v1007, %v1489
    %v1533 = vsel %vm1526, %v1008, %v1491
    %v1534 = vsel %vm1526, %v1009, %v1493
    %v1535 = vsel %vm1526, %v1138, %v1495
    %v1536 = vsel %vm1526, %v1139, %v1497
    %v1537 = vsel %vm1526, %v1140, %v1499
    %v1538 = vsel %vm1526, %v1141, %v1501
    %v1539 = vsel %vm1526, %v1142, %v1503
    %v1540 = vsel %vm1526, %v1143, %v1505
    %v1541 = vsel %vm1526, %v1144, %v1507
    %v1542 = vsel %vm1526, %v1145, %v1509
    %v1543 = vcombine.low %v1527, %v1529
    %v1544 = vcombine.high %v1527, %v1529
    %v1546 = vunpack.c.l.s4 1983009808
    %v1547 = vunpack.c.0.s8 %v1546
    %v1548 = vlaneseq
    %v1549 = vshrl.u32 %v1548, 7
    %v1550 = vsub.s32 %v1547, %v1549
    %v1551 = vrot.slane %v1543, %v1550
    %v1553 = vunpack.c.l.s4 1983009808
    %v1554 = vunpack.c.0.s8 %v1553
    %v1555 = vlaneseq
    %v1556 = vshrl.u32 %v1555, 7
    %v1557 = vsub.s32 %v1554, %v1556
    %v1558 = vrot.slane %v1544, %v1557
    %v1559 = vcombine.low %v1528, %v1530
    %v1560 = vcombine.high %v1528, %v1530
    %v1562 = vunpack.c.l.s4 1983009808
    %v1563 = vunpack.c.0.s8 %v1562
    %v1564 = vlaneseq
    %v1565 = vshrl.u32 %v1564, 7
    %v1566 = vsub.s32 %v1563, %v1565
    %v1567 = vrot.slane %v1559, %v1566
    %v1569 = vunpack.c.l.s4 1983009808
    %v1570 = vunpack.c.0.s8 %v1569
    %v1571 = vlaneseq
    %v1572 = vshrl.u32 %v1571, 7
    %v1573 = vsub.s32 %v1570, %v1572
    %v1574 = vrot.slane %v1560, %v1573
    %v1575 = vcombine.low %v1531, %v1533
    %v1576 = vcombine.high %v1531, %v1533
    %v1578 = vunpack.c.l.s4 1983009808
    %v1579 = vunpack.c.0.s8 %v1578
    %v1580 = vlaneseq
    %v1581 = vshrl.u32 %v1580, 7
    %v1582 = vsub.s32 %v1579, %v1581
    %v1583 = vrot.slane %v1575, %v1582
    %v1585 = vunpack.c.l.s4 1983009808
    %v1586 = vunpack.c.0.s8 %v1585
    %v1587 = vlaneseq
    %v1588 = vshrl.u32 %v1587, 7
    %v1589 = vsub.s32 %v1586, %v1588
    %v1590 = vrot.slane %v1576, %v1589
    %v1591 = vcombine.low %v1532, %v1534
    %v1592 = vcombine.high %v1532, %v1534
    %v1594 = vunpack.c.l.s4 1983009808
    %v1595 = vunpack.c.0.s8 %v1594
    %v1596 = vlaneseq
    %v1597 = vshrl.u32 %v1596, 7
    %v1598 = vsub.s32 %v1595, %v1597
    %v1599 = vrot.slane %v1591, %v1598
    %v1601 = vunpack.c.l.s4 1983009808
    %v1602 = vunpack.c.0.s8 %v1601
    %v1603 = vlaneseq
    %v1604 = vshrl.u32 %v1603, 7
    %v1605 = vsub.s32 %v1602, %v1604
    %v1606 = vrot.slane %v1592, %v1605
    %v1607 = vcombine.low %v1551, %v1567
    %v1608 = vcombine.high %v1551, %v1567
    %v1610 = vunpack.c.l.s4 1934713408
    %v1611 = vunpack.c.0.s8 %v1610
    %v1612 = vlaneseq
    %v1613 = vshrl.u32 %v1612, 7
    %v1614 = vsub.s32 %v1611, %v1613
    %v1615 = vrot.slane %v1607, %v1614
    %v1617 = vunpack.c.l.s4 1934713408
    %v1618 = vunpack.c.0.s8 %v1617
    %v1619 = vlaneseq
    %v1620 = vshrl.u32 %v1619, 7
    %v1621 = vsub.s32 %v1618, %v1620
    %v1622 = vrot.slane %v1608, %v1621
    %v1623 = vcombine.low %v1558, %v1574
    %v1624 = vcombine.high %v1558, %v1574
    %v1626 = vunpack.c.l.s4 1934713408
    %v1627 = vunpack.c.0.s8 %v1626
    %v1628 = vlaneseq
    %v1629 = vshrl.u32 %v1628, 7
    %v1630 = vsub.s32 %v1627, %v1629
    %v1631 = vrot.slane %v1623, %v1630
    %v1633 = vunpack.c.l.s4 1934713408
    %v1634 = vunpack.c.0.s8 %v1633
    %v1635 = vlaneseq
    %v1636 = vshrl.u32 %v1635, 7
    %v1637 = vsub.s32 %v1634, %v1636
    %v1638 = vrot.slane %v1624, %v1637
    %v1639 = vcombine.low %v1583, %v1599
    %v1640 = vcombine.high %v1583, %v1599
    %v1642 = vunpack.c.l.s4 1934713408
    %v1643 = vunpack.c.0.s8 %v1642
    %v1644 = vlaneseq
    %v1645 = vshrl.u32 %v1644, 7
    %v1646 = vsub.s32 %v1643, %v1645
    %v1647 = vrot.slane %v1639, %v1646
    %v1649 = vunpack.c.l.s4 1934713408
    %v1650 = vunpack.c.0.s8 %v1649
    %v1651 = vlaneseq
    %v1652 = vshrl.u32 %v1651, 7
    %v1653 = vsub.s32 %v1650, %v1652
    %v1654 = vrot.slane %v1640, %v1653
    %v1655 = vcombine.low %v1590, %v1606
    %v1656 = vcombine.high %v1590, %v1606
    %v1658 = vunpack.c.l.s4 1934713408
    %v1659 = vunpack.c.0.s8 %v1658
    %v1660 = vlaneseq
    %v1661 = vshrl.u32 %v1660, 7
    %v1662 = vsub.s32 %v1659, %v1661
    %v1663 = vrot.slane %v1655, %v1662
    %v1665 = vunpack.c.l.s4 1934713408
    %v1666 = vunpack.c.0.s8 %v1665
    %v1667 = vlaneseq
    %v1668 = vshrl.u32 %v1667, 7
    %v1669 = vsub.s32 %v1666, %v1668
    %v1670 = vrot.slane %v1656, %v1669
    %v1671 = vcombine.low %v1615, %v1647
    %v1672 = vcombine.high %v1615, %v1647
    %v1673 = vcombine.low %v1622, %v1654
    %v1674 = vcombine.high %v1622, %v1654
    %v1675 = vcombine.low %v1631, %v1663
    %v1676 = vcombine.high %v1631, %v1663
    %v1677 = vcombine.low %v1638, %v1670
    %v1678 = vcombine.high %v1638, %v1670
    %v1679 = vcombine.low %v1535, %v1537
    %v1680 = vcombine.high %v1535, %v1537
    %v1682 = vunpack.c.l.s4 1983009808
    %v1683 = vunpack.c.0.s8 %v1682
    %v1684 = vlaneseq
    %v1685 = vshrl.u32 %v1684, 7
    %v1686 = vsub.s32 %v1683, %v1685
    %v1687 = vrot.slane %v1679, %v1686
    %v1689 = vunpack.c.l.s4 1983009808
    %v1690 = vunpack.c.0.s8 %v1689
    %v1691 = vlaneseq
    %v1692 = vshrl.u32 %v1691, 7
    %v1693 = vsub.s32 %v1690, %v1692
    %v1694 = vrot.slane %v1680, %v1693
    %v1695 = vcombine.low %v1536, %v1538
    %v1696 = vcombine.high %v1536, %v1538
    %v1698 = vunpack.c.l.s4 1983009808
    %v1699 = vunpack.c.0.s8 %v1698
    %v1700 = vlaneseq
    %v1701 = vshrl.u32 %v1700, 7
    %v1702 = vsub.s32 %v1699, %v1701
    %v1703 = vrot.slane %v1695, %v1702
    %v1705 = vunpack.c.l.s4 1983009808
    %v1706 = vunpack.c.0.s8 %v1705
    %v1707 = vlaneseq
    %v1708 = vshrl.u32 %v1707, 7
    %v1709 = vsub.s32 %v1706, %v1708
    %v1710 = vrot.slane %v1696, %v1709
    %v1711 = vcombine.low %v1539, %v1541
    %v1712 = vcombine.high %v1539, %v1541
    %v1714 = vunpack.c.l.s4 1983009808
    %v1715 = vunpack.c.0.s8 %v1714
    %v1716 = vlaneseq
    %v1717 = vshrl.u32 %v1716, 7
    %v1718 = vsub.s32 %v1715, %v1717
    %v1719 = vrot.slane %v1711, %v1718
    %v1721 = vunpack.c.l.s4 1983009808
    %v1722 = vunpack.c.0.s8 %v1721
    %v1723 = vlaneseq
    %v1724 = vshrl.u32 %v1723, 7
    %v1725 = vsub.s32 %v1722, %v1724
    %v1726 = vrot.slane %v1712, %v1725
    %v1727 = vcombine.low %v1540, %v1542
    %v1728 = vcombine.high %v1540, %v1542
    %v1730 = vunpack.c.l.s4 1983009808
    %v1731 = vunpack.c.0.s8 %v1730
    %v1732 = vlaneseq
    %v1733 = vshrl.u32 %v1732, 7
    %v1734 = vsub.s32 %v1731, %v1733
    %v1735 = vrot.slane %v1727, %v1734
    %v1737 = vunpack.c.l.s4 1983009808
    %v1738 = vunpack.c.0.s8 %v1737
    %v1739 = vlaneseq
    %v1740 = vshrl.u32 %v1739, 7
    %v1741 = vsub.s32 %v1738, %v1740
    %v1742 = vrot.slane %v1728, %v1741
    %v1743 = vcombine.low %v1687, %v1703
    %v1744 = vcombine.high %v1687, %v1703
    %v1746 = vunpack.c.l.s4 1934713408
    %v1747 = vunpack.c.0.s8 %v1746
    %v1748 = vlaneseq
    %v1749 = vshrl.u32 %v1748, 7
    %v1750 = vsub.s32 %v1747, %v1749
    %v1751 = vrot.slane %v1743, %v1750
    %v1753 = vunpack.c.l.s4 1934713408
    %v1754 = vunpack.c.0.s8 %v1753
    %v1755 = vlaneseq
    %v1756 = vshrl.u32 %v1755, 7
    %v1757 = vsub.s32 %v1754, %v1756
    %v1758 = vrot.slane %v1744, %v1757
    %v1759 = vcombine.low %v1694, %v1710
    %v1760 = vcombine.high %v1694, %v1710
    %v1762 = vunpack.c.l.s4 1934713408
    %v1763 = vunpack.c.0.s8 %v1762
    %v1764 = vlaneseq
    %v1765 = vshrl.u32 %v1764, 7
    %v1766 = vsub.s32 %v1763, %v1765
    %v1767 = vrot.slane %v1759, %v1766
    %v1769 = vunpack.c.l.s4 1934713408
    %v1770 = vunpack.c.0.s8 %v1769
    %v1771 = vlaneseq
    %v1772 = vshrl.u32 %v1771, 7
    %v1773 = vsub.s32 %v1770, %v1772
    %v1774 = vrot.slane %v1760, %v1773
    %v1775 = vcombine.low %v1719, %v1735
    %v1776 = vcombine.high %v1719, %v1735
    %v1778 = vunpack.c.l.s4 1934713408
    %v1779 = vunpack.c.0.s8 %v1778
    %v1780 = vlaneseq
    %v1781 = vshrl.u32 %v1780, 7
    %v1782 = vsub.s32 %v1779, %v1781
    %v1783 = vrot.slane %v1775, %v1782
    %v1785 = vunpack.c.l.s4 1934713408
    %v1786 = vunpack.c.0.s8 %v1785
    %v1787 = vlaneseq
    %v1788 = vshrl.u32 %v1787, 7
    %v1789 = vsub.s32 %v1786, %v1788
    %v1790 = vrot.slane %v1776, %v1789
    %v1791 = vcombine.low %v1726, %v1742
    %v1792 = vcombine.high %v1726, %v1742
    %v1794 = vunpack.c.l.s4 1934713408
    %v1795 = vunpack.c.0.s8 %v1794
    %v1796 = vlaneseq
    %v1797 = vshrl.u32 %v1796, 7
    %v1798 = vsub.s32 %v1795, %v1797
    %v1799 = vrot.slane %v1791, %v1798
    %v1801 = vunpack.c.l.s4 1934713408
    %v1802 = vunpack.c.0.s8 %v1801
    %v1803 = vlaneseq
    %v1804 = vshrl.u32 %v1803, 7
    %v1805 = vsub.s32 %v1802, %v1804
    %v1806 = vrot.slane %v1792, %v1805
    %v1807 = vcombine.low %v1751, %v1783
    %v1808 = vcombine.high %v1751, %v1783
    %v1809 = vcombine.low %v1758, %v1790
    %v1810 = vcombine.high %v1758, %v1790
    %v1811 = vcombine.low %v1767, %v1799
    %v1812 = vcombine.high %v1767, %v1799
    %v1813 = vcombine.low %v1774, %v1806
    %v1814 = vcombine.high %v1774, %v1806
    %v1815 = vpack.c.bf16 %v1807, %v1671
    %v1816 = vpack.c.bf16 %v1808, %v1672
    %v1817 = vpack.c.bf16 %v1809, %v1673
    %v1818 = vpack.c.bf16 %v1810, %v1674
    %v1819 = vpack.c.bf16 %v1811, %v1675
    %v1820 = vpack.c.bf16 %v1812, %v1676
    %v1821 = vpack.c.bf16 %v1813, %v1677
    %v1822 = vpack.c.bf16 %v1814, %v1678
    %1825 = vrot.lane.b32.xlu0 %v826, 112
    %v1826 = vpop.permute.xlu0 %1825
    %1827 = vrot.lane.b32.xlu0 %v828, 112
    %v1828 = vpop.permute.xlu0 %1827
    %1831 = vrot.lane.b32.xlu0 %v826, 96
    %v1832 = vpop.permute.xlu0 %1831
    %1833 = vrot.lane.b32.xlu0 %v828, 96
    %v1834 = vpop.permute.xlu0 %1833
    %1837 = vrot.lane.b32.xlu0 %v826, 80
    %v1838 = vpop.permute.xlu0 %1837
    %1839 = vrot.lane.b32.xlu0 %v828, 80
    %v1840 = vpop.permute.xlu0 %1839
    %1843 = vrot.lane.b32.xlu0 %v826, 64
    %v1844 = vpop.permute.xlu0 %1843
    %1845 = vrot.lane.b32.xlu0 %v828, 64
    %v1846 = vpop.permute.xlu0 %1845
    %1849 = vrot.lane.b32.xlu0 %v826, 48
    %v1850 = vpop.permute.xlu0 %1849
    %1851 = vrot.lane.b32.xlu0 %v828, 48
    %v1852 = vpop.permute.xlu0 %1851
    %1855 = vrot.lane.b32.xlu0 %v826, 32
    %v1856 = vpop.permute.xlu0 %1855
    %1857 = vrot.lane.b32.xlu0 %v828, 32
    %v1858 = vpop.permute.xlu0 %1857
    %1861 = vrot.lane.b32.xlu0 %v826, 16
    %v1862 = vpop.permute.xlu0 %1861
    %1863 = vrot.lane.b32.xlu0 %v828, 16
    %v1864 = vpop.permute.xlu0 %1863
    %v1867 = vcombine.low %v826, %v1832
    %v1868 = vcombine.high %v826, %v1832
    %v1870 = vunpack.c.l.s4 1983009808
    %v1871 = vunpack.c.0.s8 %v1870
    %v1872 = vlaneseq
    %v1873 = vshrl.u32 %v1872, 7
    %v1874 = vsub.s32 %v1871, %v1873
    %v1875 = vrot.slane %v1867, %v1874
    %v1877 = vunpack.c.l.s4 1983009808
    %v1878 = vunpack.c.0.s8 %v1877
    %v1879 = vlaneseq
    %v1880 = vshrl.u32 %v1879, 7
    %v1881 = vsub.s32 %v1878, %v1880
    %v1882 = vrot.slane %v1868, %v1881
    %v1883 = vcombine.low %v1826, %v1838
    %v1884 = vcombine.high %v1826, %v1838
    %v1886 = vunpack.c.l.s4 1983009808
    %v1887 = vunpack.c.0.s8 %v1886
    %v1888 = vlaneseq
    %v1889 = vshrl.u32 %v1888, 7
    %v1890 = vsub.s32 %v1887, %v1889
    %v1891 = vrot.slane %v1883, %v1890
    %v1893 = vunpack.c.l.s4 1983009808
    %v1894 = vunpack.c.0.s8 %v1893
    %v1895 = vlaneseq
    %v1896 = vshrl.u32 %v1895, 7
    %v1897 = vsub.s32 %v1894, %v1896
    %v1898 = vrot.slane %v1884, %v1897
    %v1899 = vcombine.low %v1844, %v1856
    %v1900 = vcombine.high %v1844, %v1856
    %v1902 = vunpack.c.l.s4 1983009808
    %v1903 = vunpack.c.0.s8 %v1902
    %v1904 = vlaneseq
    %v1905 = vshrl.u32 %v1904, 7
    %v1906 = vsub.s32 %v1903, %v1905
    %v1907 = vrot.slane %v1899, %v1906
    %v1909 = vunpack.c.l.s4 1983009808
    %v1910 = vunpack.c.0.s8 %v1909
    %v1911 = vlaneseq
    %v1912 = vshrl.u32 %v1911, 7
    %v1913 = vsub.s32 %v1910, %v1912
    %v1914 = vrot.slane %v1900, %v1913
    %v1915 = vcombine.low %v1850, %v1862
    %v1916 = vcombine.high %v1850, %v1862
    %v1918 = vunpack.c.l.s4 1983009808
    %v1919 = vunpack.c.0.s8 %v1918
    %v1920 = vlaneseq
    %v1921 = vshrl.u32 %v1920, 7
    %v1922 = vsub.s32 %v1919, %v1921
    %v1923 = vrot.slane %v1915, %v1922
    %v1925 = vunpack.c.l.s4 1983009808
    %v1926 = vunpack.c.0.s8 %v1925
    %v1927 = vlaneseq
    %v1928 = vshrl.u32 %v1927, 7
    %v1929 = vsub.s32 %v1926, %v1928
    %v1930 = vrot.slane %v1916, %v1929
    %v1931 = vcombine.low %v1875, %v1891
    %v1932 = vcombine.high %v1875, %v1891
    %v1934 = vunpack.c.l.s4 1934713408
    %v1935 = vunpack.c.0.s8 %v1934
    %v1936 = vlaneseq
    %v1937 = vshrl.u32 %v1936, 7
    %v1938 = vsub.s32 %v1935, %v1937
    %v1939 = vrot.slane %v1931, %v1938
    %v1941 = vunpack.c.l.s4 1934713408
    %v1942 = vunpack.c.0.s8 %v1941
    %v1943 = vlaneseq
    %v1944 = vshrl.u32 %v1943, 7
    %v1945 = vsub.s32 %v1942, %v1944
    %v1946 = vrot.slane %v1932, %v1945
    %v1947 = vcombine.low %v1882, %v1898
    %v1948 = vcombine.high %v1882, %v1898
    %v1950 = vunpack.c.l.s4 1934713408
    %v1951 = vunpack.c.0.s8 %v1950
    %v1952 = vlaneseq
    %v1953 = vshrl.u32 %v1952, 7
    %v1954 = vsub.s32 %v1951, %v1953
    %v1955 = vrot.slane %v1947, %v1954
    %v1957 = vunpack.c.l.s4 1934713408
    %v1958 = vunpack.c.0.s8 %v1957
    %v1959 = vlaneseq
    %v1960 = vshrl.u32 %v1959, 7
    %v1961 = vsub.s32 %v1958, %v1960
    %v1962 = vrot.slane %v1948, %v1961
    %v1963 = vcombine.low %v1907, %v1923
    %v1964 = vcombine.high %v1907, %v1923
    %v1966 = vunpack.c.l.s4 1934713408
    %v1967 = vunpack.c.0.s8 %v1966
    %v1968 = vlaneseq
    %v1969 = vshrl.u32 %v1968, 7
    %v1970 = vsub.s32 %v1967, %v1969
    %v1971 = vrot.slane %v1963, %v1970
    %v1973 = vunpack.c.l.s4 1934713408
    %v1974 = vunpack.c.0.s8 %v1973
    %v1975 = vlaneseq
    %v1976 = vshrl.u32 %v1975, 7
    %v1977 = vsub.s32 %v1974, %v1976
    %v1978 = vrot.slane %v1964, %v1977
    %v1979 = vcombine.low %v1914, %v1930
    %v1980 = vcombine.high %v1914, %v1930
    %v1982 = vunpack.c.l.s4 1934713408
    %v1983 = vunpack.c.0.s8 %v1982
    %v1984 = vlaneseq
    %v1985 = vshrl.u32 %v1984, 7
    %v1986 = vsub.s32 %v1983, %v1985
    %v1987 = vrot.slane %v1979, %v1986
    %v1989 = vunpack.c.l.s4 1934713408
    %v1990 = vunpack.c.0.s8 %v1989
    %v1991 = vlaneseq
    %v1992 = vshrl.u32 %v1991, 7
    %v1993 = vsub.s32 %v1990, %v1992
    %v1994 = vrot.slane %v1980, %v1993
    %v1995 = vcombine.low %v1939, %v1971
    %v1996 = vcombine.high %v1939, %v1971
    %v1997 = vcombine.low %v1946, %v1978
    %v1998 = vcombine.high %v1946, %v1978
    %v1999 = vcombine.low %v1955, %v1987
    %v2000 = vcombine.high %v1955, %v1987
    %v2001 = vcombine.low %v1962, %v1994
    %v2002 = vcombine.high %v1962, %v1994
    %v2003 = vcombine.low %v828, %v1834
    %v2004 = vcombine.high %v828, %v1834
    %v2006 = vunpack.c.l.s4 1983009808
    %v2007 = vunpack.c.0.s8 %v2006
    %v2008 = vlaneseq
    %v2009 = vshrl.u32 %v2008, 7
    %v2010 = vsub.s32 %v2007, %v2009
    %v2011 = vrot.slane %v2003, %v2010
    %v2013 = vunpack.c.l.s4 1983009808
    %v2014 = vunpack.c.0.s8 %v2013
    %v2015 = vlaneseq
    %v2016 = vshrl.u32 %v2015, 7
    %v2017 = vsub.s32 %v2014, %v2016
    %v2018 = vrot.slane %v2004, %v2017
    %v2019 = vcombine.low %v1828, %v1840
    %v2020 = vcombine.high %v1828, %v1840
    %v2022 = vunpack.c.l.s4 1983009808
    %v2023 = vunpack.c.0.s8 %v2022
    %v2024 = vlaneseq
    %v2025 = vshrl.u32 %v2024, 7
    %v2026 = vsub.s32 %v2023, %v2025
    %v2027 = vrot.slane %v2019, %v2026
    %v2029 = vunpack.c.l.s4 1983009808
    %v2030 = vunpack.c.0.s8 %v2029
    %v2031 = vlaneseq
    %v2032 = vshrl.u32 %v2031, 7
    %v2033 = vsub.s32 %v2030, %v2032
    %v2034 = vrot.slane %v2020, %v2033
    %v2035 = vcombine.low %v1846, %v1858
    %v2036 = vcombine.high %v1846, %v1858
    %v2038 = vunpack.c.l.s4 1983009808
    %v2039 = vunpack.c.0.s8 %v2038
    %v2040 = vlaneseq
    %v2041 = vshrl.u32 %v2040, 7
    %v2042 = vsub.s32 %v2039, %v2041
    %v2043 = vrot.slane %v2035, %v2042
    %v2045 = vunpack.c.l.s4 1983009808
    %v2046 = vunpack.c.0.s8 %v2045
    %v2047 = vlaneseq
    %v2048 = vshrl.u32 %v2047, 7
    %v2049 = vsub.s32 %v2046, %v2048
    %v2050 = vrot.slane %v2036, %v2049
    %v2051 = vcombine.low %v1852, %v1864
    %v2052 = vcombine.high %v1852, %v1864
    %v2054 = vunpack.c.l.s4 1983009808
    %v2055 = vunpack.c.0.s8 %v2054
    %v2056 = vlaneseq
    %v2057 = vshrl.u32 %v2056, 7
    %v2058 = vsub.s32 %v2055, %v2057
    %v2059 = vrot.slane %v2051, %v2058
    %v2061 = vunpack.c.l.s4 1983009808
    %v2062 = vunpack.c.0.s8 %v2061
    %v2063 = vlaneseq
    %v2064 = vshrl.u32 %v2063, 7
    %v2065 = vsub.s32 %v2062, %v2064
    %v2066 = vrot.slane %v2052, %v2065
    %v2067 = vcombine.low %v2011, %v2027
    %v2068 = vcombine.high %v2011, %v2027
    %v2070 = vunpack.c.l.s4 1934713408
    %v2071 = vunpack.c.0.s8 %v2070
    %v2072 = vlaneseq
    %v2073 = vshrl.u32 %v2072, 7
    %v2074 = vsub.s32 %v2071, %v2073
    %v2075 = vrot.slane %v2067, %v2074
    %v2077 = vunpack.c.l.s4 1934713408
    %v2078 = vunpack.c.0.s8 %v2077
    %v2079 = vlaneseq
    %v2080 = vshrl.u32 %v2079, 7
    %v2081 = vsub.s32 %v2078, %v2080
    %v2082 = vrot.slane %v2068, %v2081
    %v2083 = vcombine.low %v2018, %v2034
    %v2084 = vcombine.high %v2018, %v2034
    %v2086 = vunpack.c.l.s4 1934713408
    %v2087 = vunpack.c.0.s8 %v2086
    %v2088 = vlaneseq
    %v2089 = vshrl.u32 %v2088, 7
    %v2090 = vsub.s32 %v2087, %v2089
    %v2091 = vrot.slane %v2083, %v2090
    %v2093 = vunpack.c.l.s4 1934713408
    %v2094 = vunpack.c.0.s8 %v2093
    %v2095 = vlaneseq
    %v2096 = vshrl.u32 %v2095, 7
    %v2097 = vsub.s32 %v2094, %v2096
    %v2098 = vrot.slane %v2084, %v2097
    %v2099 = vcombine.low %v2043, %v2059
    %v2100 = vcombine.high %v2043, %v2059
    %v2102 = vunpack.c.l.s4 1934713408
    %v2103 = vunpack.c.0.s8 %v2102
    %v2104 = vlaneseq
    %v2105 = vshrl.u32 %v2104, 7
    %v2106 = vsub.s32 %v2103, %v2105
    %v2107 = vrot.slane %v2099, %v2106
    %v2109 = vunpack.c.l.s4 1934713408
    %v2110 = vunpack.c.0.s8 %v2109
    %v2111 = vlaneseq
    %v2112 = vshrl.u32 %v2111, 7
    %v2113 = vsub.s32 %v2110, %v2112
    %v2114 = vrot.slane %v2100, %v2113
    %v2115 = vcombine.low %v2050, %v2066
    %v2116 = vcombine.high %v2050, %v2066
    %v2118 = vunpack.c.l.s4 1934713408
    %v2119 = vunpack.c.0.s8 %v2118
    %v2120 = vlaneseq
    %v2121 = vshrl.u32 %v2120, 7
    %v2122 = vsub.s32 %v2119, %v2121
    %v2123 = vrot.slane %v2115, %v2122
    %v2125 = vunpack.c.l.s4 1934713408
    %v2126 = vunpack.c.0.s8 %v2125
    %v2127 = vlaneseq
    %v2128 = vshrl.u32 %v2127, 7
    %v2129 = vsub.s32 %v2126, %v2128
    %v2130 = vrot.slane %v2116, %v2129
    %v2131 = vcombine.low %v2075, %v2107
    %v2132 = vcombine.high %v2075, %v2107
    %v2133 = vcombine.low %v2082, %v2114
    %v2134 = vcombine.high %v2082, %v2114
    %v2135 = vcombine.low %v2091, %v2123
    %v2136 = vcombine.high %v2091, %v2123
    %v2137 = vcombine.low %v2098, %v2130
    %v2138 = vcombine.high %v2098, %v2130
    %2141 = vrot.lane.b32.xlu0 %v827, 112
    %v2142 = vpop.permute.xlu0 %2141
    %2143 = vrot.lane.b32.xlu0 %v829, 112
    %v2144 = vpop.permute.xlu0 %2143
    %2147 = vrot.lane.b32.xlu0 %v827, 96
    %v2148 = vpop.permute.xlu0 %2147
    %2149 = vrot.lane.b32.xlu0 %v829, 96
    %v2150 = vpop.permute.xlu0 %2149
    %2153 = vrot.lane.b32.xlu0 %v827, 80
    %v2154 = vpop.permute.xlu0 %2153
    %2155 = vrot.lane.b32.xlu0 %v829, 80
    %v2156 = vpop.permute.xlu0 %2155
    %2159 = vrot.lane.b32.xlu0 %v827, 64
    %v2160 = vpop.permute.xlu0 %2159
    %2161 = vrot.lane.b32.xlu0 %v829, 64
    %v2162 = vpop.permute.xlu0 %2161
    %2165 = vrot.lane.b32.xlu0 %v827, 48
    %v2166 = vpop.permute.xlu0 %2165
    %2167 = vrot.lane.b32.xlu0 %v829, 48
    %v2168 = vpop.permute.xlu0 %2167
    %2171 = vrot.lane.b32.xlu0 %v827, 32
    %v2172 = vpop.permute.xlu0 %2171
    %2173 = vrot.lane.b32.xlu0 %v829, 32
    %v2174 = vpop.permute.xlu0 %2173
    %2177 = vrot.lane.b32.xlu0 %v827, 16
    %v2178 = vpop.permute.xlu0 %2177
    %2179 = vrot.lane.b32.xlu0 %v829, 16
    %v2180 = vpop.permute.xlu0 %2179
    %v2183 = vcombine.low %v827, %v2148
    %v2184 = vcombine.high %v827, %v2148
    %v2186 = vunpack.c.l.s4 1983009808
    %v2187 = vunpack.c.0.s8 %v2186
    %v2188 = vlaneseq
    %v2189 = vshrl.u32 %v2188, 7
    %v2190 = vsub.s32 %v2187, %v2189
    %v2191 = vrot.slane %v2183, %v2190
    %v2193 = vunpack.c.l.s4 1983009808
    %v2194 = vunpack.c.0.s8 %v2193
    %v2195 = vlaneseq
    %v2196 = vshrl.u32 %v2195, 7
    %v2197 = vsub.s32 %v2194, %v2196
    %v2198 = vrot.slane %v2184, %v2197
    %v2199 = vcombine.low %v2142, %v2154
    %v2200 = vcombine.high %v2142, %v2154
    %v2202 = vunpack.c.l.s4 1983009808
    %v2203 = vunpack.c.0.s8 %v2202
    %v2204 = vlaneseq
    %v2205 = vshrl.u32 %v2204, 7
    %v2206 = vsub.s32 %v2203, %v2205
    %v2207 = vrot.slane %v2199, %v2206
    %v2209 = vunpack.c.l.s4 1983009808
    %v2210 = vunpack.c.0.s8 %v2209
    %v2211 = vlaneseq
    %v2212 = vshrl.u32 %v2211, 7
    %v2213 = vsub.s32 %v2210, %v2212
    %v2214 = vrot.slane %v2200, %v2213
    %v2215 = vcombine.low %v2160, %v2172
    %v2216 = vcombine.high %v2160, %v2172
    %v2218 = vunpack.c.l.s4 1983009808
    %v2219 = vunpack.c.0.s8 %v2218
    %v2220 = vlaneseq
    %v2221 = vshrl.u32 %v2220, 7
    %v2222 = vsub.s32 %v2219, %v2221
    %v2223 = vrot.slane %v2215, %v2222
    %v2225 = vunpack.c.l.s4 1983009808
    %v2226 = vunpack.c.0.s8 %v2225
    %v2227 = vlaneseq
    %v2228 = vshrl.u32 %v2227, 7
    %v2229 = vsub.s32 %v2226, %v2228
    %v2230 = vrot.slane %v2216, %v2229
    %v2231 = vcombine.low %v2166, %v2178
    %v2232 = vcombine.high %v2166, %v2178
    %v2234 = vunpack.c.l.s4 1983009808
    %v2235 = vunpack.c.0.s8 %v2234
    %v2236 = vlaneseq
    %v2237 = vshrl.u32 %v2236, 7
    %v2238 = vsub.s32 %v2235, %v2237
    %v2239 = vrot.slane %v2231, %v2238
    %v2241 = vunpack.c.l.s4 1983009808
    %v2242 = vunpack.c.0.s8 %v2241
    %v2243 = vlaneseq
    %v2244 = vshrl.u32 %v2243, 7
    %v2245 = vsub.s32 %v2242, %v2244
    %v2246 = vrot.slane %v2232, %v2245
    %v2247 = vcombine.low %v2191, %v2207
    %v2248 = vcombine.high %v2191, %v2207
    %v2250 = vunpack.c.l.s4 1934713408
    %v2251 = vunpack.c.0.s8 %v2250
    %v2252 = vlaneseq
    %v2253 = vshrl.u32 %v2252, 7
    %v2254 = vsub.s32 %v2251, %v2253
    %v2255 = vrot.slane %v2247, %v2254
    %v2257 = vunpack.c.l.s4 1934713408
    %v2258 = vunpack.c.0.s8 %v2257
    %v2259 = vlaneseq
    %v2260 = vshrl.u32 %v2259, 7
    %v2261 = vsub.s32 %v2258, %v2260
    %v2262 = vrot.slane %v2248, %v2261
    %v2263 = vcombine.low %v2198, %v2214
    %v2264 = vcombine.high %v2198, %v2214
    %v2266 = vunpack.c.l.s4 1934713408
    %v2267 = vunpack.c.0.s8 %v2266
    %v2268 = vlaneseq
    %v2269 = vshrl.u32 %v2268, 7
    %v2270 = vsub.s32 %v2267, %v2269
    %v2271 = vrot.slane %v2263, %v2270
    %v2273 = vunpack.c.l.s4 1934713408
    %v2274 = vunpack.c.0.s8 %v2273
    %v2275 = vlaneseq
    %v2276 = vshrl.u32 %v2275, 7
    %v2277 = vsub.s32 %v2274, %v2276
    %v2278 = vrot.slane %v2264, %v2277
    %v2279 = vcombine.low %v2223, %v2239
    %v2280 = vcombine.high %v2223, %v2239
    %v2282 = vunpack.c.l.s4 1934713408
    %v2283 = vunpack.c.0.s8 %v2282
    %v2284 = vlaneseq
    %v2285 = vshrl.u32 %v2284, 7
    %v2286 = vsub.s32 %v2283, %v2285
    %v2287 = vrot.slane %v2279, %v2286
    %v2289 = vunpack.c.l.s4 1934713408
    %v2290 = vunpack.c.0.s8 %v2289
    %v2291 = vlaneseq
    %v2292 = vshrl.u32 %v2291, 7
    %v2293 = vsub.s32 %v2290, %v2292
    %v2294 = vrot.slane %v2280, %v2293
    %v2295 = vcombine.low %v2230, %v2246
    %v2296 = vcombine.high %v2230, %v2246
    %v2298 = vunpack.c.l.s4 1934713408
    %v2299 = vunpack.c.0.s8 %v2298
    %v2300 = vlaneseq
    %v2301 = vshrl.u32 %v2300, 7
    %v2302 = vsub.s32 %v2299, %v2301
    %v2303 = vrot.slane %v2295, %v2302
    %v2305 = vunpack.c.l.s4 1934713408
    %v2306 = vunpack.c.0.s8 %v2305
    %v2307 = vlaneseq
    %v2308 = vshrl.u32 %v2307, 7
    %v2309 = vsub.s32 %v2306, %v2308
    %v2310 = vrot.slane %v2296, %v2309
    %v2311 = vcombine.low %v2255, %v2287
    %v2312 = vcombine.high %v2255, %v2287
    %v2313 = vcombine.low %v2262, %v2294
    %v2314 = vcombine.high %v2262, %v2294
    %v2315 = vcombine.low %v2271, %v2303
    %v2316 = vcombine.high %v2271, %v2303
    %v2317 = vcombine.low %v2278, %v2310
    %v2318 = vcombine.high %v2278, %v2310
    %v2319 = vcombine.low %v829, %v2150
    %v2320 = vcombine.high %v829, %v2150
    %v2322 = vunpack.c.l.s4 1983009808
    %v2323 = vunpack.c.0.s8 %v2322
    %v2324 = vlaneseq
    %v2325 = vshrl.u32 %v2324, 7
    %v2326 = vsub.s32 %v2323, %v2325
    %v2327 = vrot.slane %v2319, %v2326
    %v2329 = vunpack.c.l.s4 1983009808
    %v2330 = vunpack.c.0.s8 %v2329
    %v2331 = vlaneseq
    %v2332 = vshrl.u32 %v2331, 7
    %v2333 = vsub.s32 %v2330, %v2332
    %v2334 = vrot.slane %v2320, %v2333
    %v2335 = vcombine.low %v2144, %v2156
    %v2336 = vcombine.high %v2144, %v2156
    %v2338 = vunpack.c.l.s4 1983009808
    %v2339 = vunpack.c.0.s8 %v2338
    %v2340 = vlaneseq
    %v2341 = vshrl.u32 %v2340, 7
    %v2342 = vsub.s32 %v2339, %v2341
    %v2343 = vrot.slane %v2335, %v2342
    %v2345 = vunpack.c.l.s4 1983009808
    %v2346 = vunpack.c.0.s8 %v2345
    %v2347 = vlaneseq
    %v2348 = vshrl.u32 %v2347, 7
    %v2349 = vsub.s32 %v2346, %v2348
    %v2350 = vrot.slane %v2336, %v2349
    %v2351 = vcombine.low %v2162, %v2174
    %v2352 = vcombine.high %v2162, %v2174
    %v2354 = vunpack.c.l.s4 1983009808
    %v2355 = vunpack.c.0.s8 %v2354
    %v2356 = vlaneseq
    %v2357 = vshrl.u32 %v2356, 7
    %v2358 = vsub.s32 %v2355, %v2357
    %v2359 = vrot.slane %v2351, %v2358
    %v2361 = vunpack.c.l.s4 1983009808
    %v2362 = vunpack.c.0.s8 %v2361
    %v2363 = vlaneseq
    %v2364 = vshrl.u32 %v2363, 7
    %v2365 = vsub.s32 %v2362, %v2364
    %v2366 = vrot.slane %v2352, %v2365
    %v2367 = vcombine.low %v2168, %v2180
    %v2368 = vcombine.high %v2168, %v2180
    %v2370 = vunpack.c.l.s4 1983009808
    %v2371 = vunpack.c.0.s8 %v2370
    %v2372 = vlaneseq
    %v2373 = vshrl.u32 %v2372, 7
    %v2374 = vsub.s32 %v2371, %v2373
    %v2375 = vrot.slane %v2367, %v2374
    %v2377 = vunpack.c.l.s4 1983009808
    %v2378 = vunpack.c.0.s8 %v2377
    %v2379 = vlaneseq
    %v2380 = vshrl.u32 %v2379, 7
    %v2381 = vsub.s32 %v2378, %v2380
    %v2382 = vrot.slane %v2368, %v2381
    %v2383 = vcombine.low %v2327, %v2343
    %v2384 = vcombine.high %v2327, %v2343
    %v2386 = vunpack.c.l.s4 1934713408
    %v2387 = vunpack.c.0.s8 %v2386
    %v2388 = vlaneseq
    %v2389 = vshrl.u32 %v2388, 7
    %v2390 = vsub.s32 %v2387, %v2389
    %v2391 = vrot.slane %v2383, %v2390
    %v2393 = vunpack.c.l.s4 1934713408
    %v2394 = vunpack.c.0.s8 %v2393
    %v2395 = vlaneseq
    %v2396 = vshrl.u32 %v2395, 7
    %v2397 = vsub.s32 %v2394, %v2396
    %v2398 = vrot.slane %v2384, %v2397
    %v2399 = vcombine.low %v2334, %v2350
    %v2400 = vcombine.high %v2334, %v2350
    %v2402 = vunpack.c.l.s4 1934713408
    %v2403 = vunpack.c.0.s8 %v2402
    %v2404 = vlaneseq
    %v2405 = vshrl.u32 %v2404, 7
    %v2406 = vsub.s32 %v2403, %v2405
    %v2407 = vrot.slane %v2399, %v2406
    %v2409 = vunpack.c.l.s4 1934713408
    %v2410 = vunpack.c.0.s8 %v2409
    %v2411 = vlaneseq
    %v2412 = vshrl.u32 %v2411, 7
    %v2413 = vsub.s32 %v2410, %v2412
    %v2414 = vrot.slane %v2400, %v2413
    %v2415 = vcombine.low %v2359, %v2375
    %v2416 = vcombine.high %v2359, %v2375
    %v2418 = vunpack.c.l.s4 1934713408
    %v2419 = vunpack.c.0.s8 %v2418
    %v2420 = vlaneseq
    %v2421 = vshrl.u32 %v2420, 7
    %v2422 = vsub.s32 %v2419, %v2421
    %v2423 = vrot.slane %v2415, %v2422
    %v2425 = vunpack.c.l.s4 1934713408
    %v2426 = vunpack.c.0.s8 %v2425
    %v2427 = vlaneseq
    %v2428 = vshrl.u32 %v2427, 7
    %v2429 = vsub.s32 %v2426, %v2428
    %v2430 = vrot.slane %v2416, %v2429
    %v2431 = vcombine.low %v2366, %v2382
    %v2432 = vcombine.high %v2366, %v2382
    %v2434 = vunpack.c.l.s4 1934713408
    %v2435 = vunpack.c.0.s8 %v2434
    %v2436 = vlaneseq
    %v2437 = vshrl.u32 %v2436, 7
    %v2438 = vsub.s32 %v2435, %v2437
    %v2439 = vrot.slane %v2431, %v2438
    %v2441 = vunpack.c.l.s4 1934713408
    %v2442 = vunpack.c.0.s8 %v2441
    %v2443 = vlaneseq
    %v2444 = vshrl.u32 %v2443, 7
    %v2445 = vsub.s32 %v2442, %v2444
    %v2446 = vrot.slane %v2432, %v2445
    %v2447 = vcombine.low %v2391, %v2423
    %v2448 = vcombine.high %v2391, %v2423
    %v2449 = vcombine.low %v2398, %v2430
    %v2450 = vcombine.high %v2398, %v2430
    %v2451 = vcombine.low %v2407, %v2439
    %v2452 = vcombine.high %v2407, %v2439
    %v2453 = vcombine.low %v2414, %v2446
    %v2454 = vcombine.high %v2414, %v2446
    %2471 = vrot.lane.b32.xlu0 %v2311, 16
    %v2472 = vpop.permute.xlu0 %2471
    %2473 = vrot.lane.b32.xlu0 %v2312, 16
    %v2474 = vpop.permute.xlu0 %2473
    %2475 = vrot.lane.b32.xlu0 %v2313, 16
    %v2476 = vpop.permute.xlu0 %2475
    %2477 = vrot.lane.b32.xlu0 %v2314, 16
    %v2478 = vpop.permute.xlu0 %2477
    %2479 = vrot.lane.b32.xlu0 %v2315, 16
    %v2480 = vpop.permute.xlu0 %2479
    %2481 = vrot.lane.b32.xlu0 %v2316, 16
    %v2482 = vpop.permute.xlu0 %2481
    %2483 = vrot.lane.b32.xlu0 %v2317, 16
    %v2484 = vpop.permute.xlu0 %2483
    %2485 = vrot.lane.b32.xlu0 %v2318, 16
    %v2486 = vpop.permute.xlu0 %2485
    %2487 = vrot.lane.b32.xlu0 %v2447, 16
    %v2488 = vpop.permute.xlu0 %2487
    %2489 = vrot.lane.b32.xlu0 %v2448, 16
    %v2490 = vpop.permute.xlu0 %2489
    %2491 = vrot.lane.b32.xlu0 %v2449, 16
    %v2492 = vpop.permute.xlu0 %2491
    %2493 = vrot.lane.b32.xlu0 %v2450, 16
    %v2494 = vpop.permute.xlu0 %2493
    %2495 = vrot.lane.b32.xlu0 %v2451, 16
    %v2496 = vpop.permute.xlu0 %2495
    %2497 = vrot.lane.b32.xlu0 %v2452, 16
    %v2498 = vpop.permute.xlu0 %2497
    %2499 = vrot.lane.b32.xlu0 %v2453, 16
    %v2500 = vpop.permute.xlu0 %2499
    %2501 = vrot.lane.b32.xlu0 %v2454, 16
    %v2502 = vpop.permute.xlu0 %2501
    %v2519 = vsel %vm1526, %v1995, %v2472
    %v2520 = vsel %vm1526, %v1996, %v2474
    %v2521 = vsel %vm1526, %v1997, %v2476
    %v2522 = vsel %vm1526, %v1998, %v2478
    %v2523 = vsel %vm1526, %v1999, %v2480
    %v2524 = vsel %vm1526, %v2000, %v2482
    %v2525 = vsel %vm1526, %v2001, %v2484
    %v2526 = vsel %vm1526, %v2002, %v2486
    %v2527 = vsel %vm1526, %v2131, %v2488
    %v2528 = vsel %vm1526, %v2132, %v2490
    %v2529 = vsel %vm1526, %v2133, %v2492
    %v2530 = vsel %vm1526, %v2134, %v2494
    %v2531 = vsel %vm1526, %v2135, %v2496
    %v2532 = vsel %vm1526, %v2136, %v2498
    %v2533 = vsel %vm1526, %v2137, %v2500
    %v2534 = vsel %vm1526, %v2138, %v2502
    %v2535 = vcombine.low %v2519, %v2521
    %v2536 = vcombine.high %v2519, %v2521
    %v2538 = vunpack.c.l.s4 1983009808
    %v2539 = vunpack.c.0.s8 %v2538
    %v2540 = vlaneseq
    %v2541 = vshrl.u32 %v2540, 7
    %v2542 = vsub.s32 %v2539, %v2541
    %v2543 = vrot.slane %v2535, %v2542
    %v2545 = vunpack.c.l.s4 1983009808
    %v2546 = vunpack.c.0.s8 %v2545
    %v2547 = vlaneseq
    %v2548 = vshrl.u32 %v2547, 7
    %v2549 = vsub.s32 %v2546, %v2548
    %v2550 = vrot.slane %v2536, %v2549
    %v2551 = vcombine.low %v2520, %v2522
    %v2552 = vcombine.high %v2520, %v2522
    %v2554 = vunpack.c.l.s4 1983009808
    %v2555 = vunpack.c.0.s8 %v2554
    %v2556 = vlaneseq
    %v2557 = vshrl.u32 %v2556, 7
    %v2558 = vsub.s32 %v2555, %v2557
    %v2559 = vrot.slane %v2551, %v2558
    %v2561 = vunpack.c.l.s4 1983009808
    %v2562 = vunpack.c.0.s8 %v2561
    %v2563 = vlaneseq
    %v2564 = vshrl.u32 %v2563, 7
    %v2565 = vsub.s32 %v2562, %v2564
    %v2566 = vrot.slane %v2552, %v2565
    %v2567 = vcombine.low %v2523, %v2525
    %v2568 = vcombine.high %v2523, %v2525
    %v2570 = vunpack.c.l.s4 1983009808
    %v2571 = vunpack.c.0.s8 %v2570
    %v2572 = vlaneseq
    %v2573 = vshrl.u32 %v2572, 7
    %v2574 = vsub.s32 %v2571, %v2573
    %v2575 = vrot.slane %v2567, %v2574
    %v2577 = vunpack.c.l.s4 1983009808
    %v2578 = vunpack.c.0.s8 %v2577
    %v2579 = vlaneseq
    %v2580 = vshrl.u32 %v2579, 7
    %v2581 = vsub.s32 %v2578, %v2580
    %v2582 = vrot.slane %v2568, %v2581
    %v2583 = vcombine.low %v2524, %v2526
    %v2584 = vcombine.high %v2524, %v2526
    %v2586 = vunpack.c.l.s4 1983009808
    %v2587 = vunpack.c.0.s8 %v2586
    %v2588 = vlaneseq
    %v2589 = vshrl.u32 %v2588, 7
    %v2590 = vsub.s32 %v2587, %v2589
    %v2591 = vrot.slane %v2583, %v2590
    %v2593 = vunpack.c.l.s4 1983009808
    %v2594 = vunpack.c.0.s8 %v2593
    %v2595 = vlaneseq
    %v2596 = vshrl.u32 %v2595, 7
    %v2597 = vsub.s32 %v2594, %v2596
    %v2598 = vrot.slane %v2584, %v2597
    %v2599 = vcombine.low %v2543, %v2559
    %v2600 = vcombine.high %v2543, %v2559
    %v2602 = vunpack.c.l.s4 1934713408
    %v2603 = vunpack.c.0.s8 %v2602
    %v2604 = vlaneseq
    %v2605 = vshrl.u32 %v2604, 7
    %v2606 = vsub.s32 %v2603, %v2605
    %v2607 = vrot.slane %v2599, %v2606
    %v2609 = vunpack.c.l.s4 1934713408
    %v2610 = vunpack.c.0.s8 %v2609
    %v2611 = vlaneseq
    %v2612 = vshrl.u32 %v2611, 7
    %v2613 = vsub.s32 %v2610, %v2612
    %v2614 = vrot.slane %v2600, %v2613
    %v2615 = vcombine.low %v2550, %v2566
    %v2616 = vcombine.high %v2550, %v2566
    %v2618 = vunpack.c.l.s4 1934713408
    %v2619 = vunpack.c.0.s8 %v2618
    %v2620 = vlaneseq
    %v2621 = vshrl.u32 %v2620, 7
    %v2622 = vsub.s32 %v2619, %v2621
    %v2623 = vrot.slane %v2615, %v2622
    %v2625 = vunpack.c.l.s4 1934713408
    %v2626 = vunpack.c.0.s8 %v2625
    %v2627 = vlaneseq
    %v2628 = vshrl.u32 %v2627, 7
    %v2629 = vsub.s32 %v2626, %v2628
    %v2630 = vrot.slane %v2616, %v2629
    %v2631 = vcombine.low %v2575, %v2591
    %v2632 = vcombine.high %v2575, %v2591
    %v2634 = vunpack.c.l.s4 1934713408
    %v2635 = vunpack.c.0.s8 %v2634
    %v2636 = vlaneseq
    %v2637 = vshrl.u32 %v2636, 7
    %v2638 = vsub.s32 %v2635, %v2637
    %v2639 = vrot.slane %v2631, %v2638
    %v2641 = vunpack.c.l.s4 1934713408
    %v2642 = vunpack.c.0.s8 %v2641
    %v2643 = vlaneseq
    %v2644 = vshrl.u32 %v2643, 7
    %v2645 = vsub.s32 %v2642, %v2644
    %v2646 = vrot.slane %v2632, %v2645
    %v2647 = vcombine.low %v2582, %v2598
    %v2648 = vcombine.high %v2582, %v2598
    %v2650 = vunpack.c.l.s4 1934713408
    %v2651 = vunpack.c.0.s8 %v2650
    %v2652 = vlaneseq
    %v2653 = vshrl.u32 %v2652, 7
    %v2654 = vsub.s32 %v2651, %v2653
    %v2655 = vrot.slane %v2647, %v2654
    %v2657 = vunpack.c.l.s4 1934713408
    %v2658 = vunpack.c.0.s8 %v2657
    %v2659 = vlaneseq
    %v2660 = vshrl.u32 %v2659, 7
    %v2661 = vsub.s32 %v2658, %v2660
    %v2662 = vrot.slane %v2648, %v2661
    %v2663 = vcombine.low %v2607, %v2639
    %v2664 = vcombine.high %v2607, %v2639
    %v2665 = vcombine.low %v2614, %v2646
    %v2666 = vcombine.high %v2614, %v2646
    %v2667 = vcombine.low %v2623, %v2655
    %v2668 = vcombine.high %v2623, %v2655
    %v2669 = vcombine.low %v2630, %v2662
    %v2670 = vcombine.high %v2630, %v2662
    %v2671 = vcombine.low %v2527, %v2529
    %v2672 = vcombine.high %v2527, %v2529
    %v2674 = vunpack.c.l.s4 1983009808
    %v2675 = vunpack.c.0.s8 %v2674
    %v2676 = vlaneseq
    %v2677 = vshrl.u32 %v2676, 7
    %v2678 = vsub.s32 %v2675, %v2677
    %v2679 = vrot.slane %v2671, %v2678
    %v2681 = vunpack.c.l.s4 1983009808
    %v2682 = vunpack.c.0.s8 %v2681
    %v2683 = vlaneseq
    %v2684 = vshrl.u32 %v2683, 7
    %v2685 = vsub.s32 %v2682, %v2684
    %v2686 = vrot.slane %v2672, %v2685
    %v2687 = vcombine.low %v2528, %v2530
    %v2688 = vcombine.high %v2528, %v2530
    %v2690 = vunpack.c.l.s4 1983009808
    %v2691 = vunpack.c.0.s8 %v2690
    %v2692 = vlaneseq
    %v2693 = vshrl.u32 %v2692, 7
    %v2694 = vsub.s32 %v2691, %v2693
    %v2695 = vrot.slane %v2687, %v2694
    %v2697 = vunpack.c.l.s4 1983009808
    %v2698 = vunpack.c.0.s8 %v2697
    %v2699 = vlaneseq
    %v2700 = vshrl.u32 %v2699, 7
    %v2701 = vsub.s32 %v2698, %v2700
    %v2702 = vrot.slane %v2688, %v2701
    %v2703 = vcombine.low %v2531, %v2533
    %v2704 = vcombine.high %v2531, %v2533
    %v2706 = vunpack.c.l.s4 1983009808
    %v2707 = vunpack.c.0.s8 %v2706
    %v2708 = vlaneseq
    %v2709 = vshrl.u32 %v2708, 7
    %v2710 = vsub.s32 %v2707, %v2709
    %v2711 = vrot.slane %v2703, %v2710
    %v2713 = vunpack.c.l.s4 1983009808
    %v2714 = vunpack.c.0.s8 %v2713
    %v2715 = vlaneseq
    %v2716 = vshrl.u32 %v2715, 7
    %v2717 = vsub.s32 %v2714, %v2716
    %v2718 = vrot.slane %v2704, %v2717
    %v2719 = vcombine.low %v2532, %v2534
    %v2720 = vcombine.high %v2532, %v2534
    %v2722 = vunpack.c.l.s4 1983009808
    %v2723 = vunpack.c.0.s8 %v2722
    %v2724 = vlaneseq
    %v2725 = vshrl.u32 %v2724, 7
    %v2726 = vsub.s32 %v2723, %v2725
    %v2727 = vrot.slane %v2719, %v2726
    %v2729 = vunpack.c.l.s4 1983009808
    %v2730 = vunpack.c.0.s8 %v2729
    %v2731 = vlaneseq
    %v2732 = vshrl.u32 %v2731, 7
    %v2733 = vsub.s32 %v2730, %v2732
    %v2734 = vrot.slane %v2720, %v2733
    %v2735 = vcombine.low %v2679, %v2695
    %v2736 = vcombine.high %v2679, %v2695
    %v2738 = vunpack.c.l.s4 1934713408
    %v2739 = vunpack.c.0.s8 %v2738
    %v2740 = vlaneseq
    %v2741 = vshrl.u32 %v2740, 7
    %v2742 = vsub.s32 %v2739, %v2741
    %v2743 = vrot.slane %v2735, %v2742
    %v2745 = vunpack.c.l.s4 1934713408
    %v2746 = vunpack.c.0.s8 %v2745
    %v2747 = vlaneseq
    %v2748 = vshrl.u32 %v2747, 7
    %v2749 = vsub.s32 %v2746, %v2748
    %v2750 = vrot.slane %v2736, %v2749
    %v2751 = vcombine.low %v2686, %v2702
    %v2752 = vcombine.high %v2686, %v2702
    %v2754 = vunpack.c.l.s4 1934713408
    %v2755 = vunpack.c.0.s8 %v2754
    %v2756 = vlaneseq
    %v2757 = vshrl.u32 %v2756, 7
    %v2758 = vsub.s32 %v2755, %v2757
    %v2759 = vrot.slane %v2751, %v2758
    %v2761 = vunpack.c.l.s4 1934713408
    %v2762 = vunpack.c.0.s8 %v2761
    %v2763 = vlaneseq
    %v2764 = vshrl.u32 %v2763, 7
    %v2765 = vsub.s32 %v2762, %v2764
    %v2766 = vrot.slane %v2752, %v2765
    %v2767 = vcombine.low %v2711, %v2727
    %v2768 = vcombine.high %v2711, %v2727
    %v2770 = vunpack.c.l.s4 1934713408
    %v2771 = vunpack.c.0.s8 %v2770
    %v2772 = vlaneseq
    %v2773 = vshrl.u32 %v2772, 7
    %v2774 = vsub.s32 %v2771, %v2773
    %v2775 = vrot.slane %v2767, %v2774
    %v2777 = vunpack.c.l.s4 1934713408
    %v2778 = vunpack.c.0.s8 %v2777
    %v2779 = vlaneseq
    %v2780 = vshrl.u32 %v2779, 7
    %v2781 = vsub.s32 %v2778, %v2780
    %v2782 = vrot.slane %v2768, %v2781
    %v2783 = vcombine.low %v2718, %v2734
    %v2784 = vcombine.high %v2718, %v2734
    %v2786 = vunpack.c.l.s4 1934713408
    %v2787 = vunpack.c.0.s8 %v2786
    %v2788 = vlaneseq
    %v2789 = vshrl.u32 %v2788, 7
    %v2790 = vsub.s32 %v2787, %v2789
    %v2791 = vrot.slane %v2783, %v2790
    %v2793 = vunpack.c.l.s4 1934713408
    %v2794 = vunpack.c.0.s8 %v2793
    %v2795 = vlaneseq
    %v2796 = vshrl.u32 %v2795, 7
    %v2797 = vsub.s32 %v2794, %v2796
    %v2798 = vrot.slane %v2784, %v2797
    %v2799 = vcombine.low %v2743, %v2775
    %v2800 = vcombine.high %v2743, %v2775
    %v2801 = vcombine.low %v2750, %v2782
    %v2802 = vcombine.high %v2750, %v2782
    %v2803 = vcombine.low %v2759, %v2791
    %v2804 = vcombine.high %v2759, %v2791
    %v2805 = vcombine.low %v2766, %v2798
    %v2806 = vcombine.high %v2766, %v2798
    %v2807 = vpack.c.bf16 %v2799, %v2663
    %v2808 = vpack.c.bf16 %v2800, %v2664
    %v2809 = vpack.c.bf16 %v2801, %v2665
    %v2810 = vpack.c.bf16 %v2802, %v2666
    %v2811 = vpack.c.bf16 %v2803, %v2667
    %v2812 = vpack.c.bf16 %v2804, %v2668
    %v2813 = vpack.c.bf16 %v2805, %v2669
    %v2814 = vpack.c.bf16 %v2806, %v2670
    %2817 = vrot.lane.b32.xlu0 %v790, 96
    %v2818 = vpop.permute.xlu0 %2817
    %2819 = vrot.lane.b32.xlu0 %v794, 96
    %v2820 = vpop.permute.xlu0 %2819
    %2823 = vrot.lane.b32.xlu0 %v790, 64
    %v2824 = vpop.permute.xlu0 %2823
    %2825 = vrot.lane.b32.xlu0 %v794, 64
    %v2826 = vpop.permute.xlu0 %2825
    %2829 = vrot.lane.b32.xlu0 %v790, 32
    %v2830 = vpop.permute.xlu0 %2829
    %2831 = vrot.lane.b32.xlu0 %v794, 32
    %v2832 = vpop.permute.xlu0 %2831
    %2837 = vrot.lane.b32.xlu0 %v792, 96
    %v2838 = vpop.permute.xlu0 %2837
    %2839 = vrot.lane.b32.xlu0 %v796, 96
    %v2840 = vpop.permute.xlu0 %2839
    %2843 = vrot.lane.b32.xlu0 %v792, 64
    %v2844 = vpop.permute.xlu0 %2843
    %2845 = vrot.lane.b32.xlu0 %v796, 64
    %v2846 = vpop.permute.xlu0 %2845
    %2849 = vrot.lane.b32.xlu0 %v792, 32
    %v2850 = vpop.permute.xlu0 %2849
    %2851 = vrot.lane.b32.xlu0 %v796, 32
    %v2852 = vpop.permute.xlu0 %2851
    %v2855 = vcombine.low %v790, %v2824
    %v2856 = vcombine.high %v790, %v2824
    %v2858 = vunpack.c.l.s4 1983009808
    %v2859 = vunpack.c.0.s8 %v2858
    %v2860 = vlaneseq
    %v2861 = vshrl.u32 %v2860, 7
    %v2862 = vsub.s32 %v2859, %v2861
    %v2863 = vrot.slane %v2855, %v2862
    %v2865 = vunpack.c.l.s4 1983009808
    %v2866 = vunpack.c.0.s8 %v2865
    %v2867 = vlaneseq
    %v2868 = vshrl.u32 %v2867, 7
    %v2869 = vsub.s32 %v2866, %v2868
    %v2870 = vrot.slane %v2856, %v2869
    %v2871 = vcombine.low %v2818, %v2830
    %v2872 = vcombine.high %v2818, %v2830
    %v2874 = vunpack.c.l.s4 1983009808
    %v2875 = vunpack.c.0.s8 %v2874
    %v2876 = vlaneseq
    %v2877 = vshrl.u32 %v2876, 7
    %v2878 = vsub.s32 %v2875, %v2877
    %v2879 = vrot.slane %v2871, %v2878
    %v2881 = vunpack.c.l.s4 1983009808
    %v2882 = vunpack.c.0.s8 %v2881
    %v2883 = vlaneseq
    %v2884 = vshrl.u32 %v2883, 7
    %v2885 = vsub.s32 %v2882, %v2884
    %v2886 = vrot.slane %v2872, %v2885
    %v2887 = vcombine.low %v792, %v2844
    %v2888 = vcombine.high %v792, %v2844
    %v2890 = vunpack.c.l.s4 1983009808
    %v2891 = vunpack.c.0.s8 %v2890
    %v2892 = vlaneseq
    %v2893 = vshrl.u32 %v2892, 7
    %v2894 = vsub.s32 %v2891, %v2893
    %v2895 = vrot.slane %v2887, %v2894
    %v2897 = vunpack.c.l.s4 1983009808
    %v2898 = vunpack.c.0.s8 %v2897
    %v2899 = vlaneseq
    %v2900 = vshrl.u32 %v2899, 7
    %v2901 = vsub.s32 %v2898, %v2900
    %v2902 = vrot.slane %v2888, %v2901
    %v2903 = vcombine.low %v2838, %v2850
    %v2904 = vcombine.high %v2838, %v2850
    %v2906 = vunpack.c.l.s4 1983009808
    %v2907 = vunpack.c.0.s8 %v2906
    %v2908 = vlaneseq
    %v2909 = vshrl.u32 %v2908, 7
    %v2910 = vsub.s32 %v2907, %v2909
    %v2911 = vrot.slane %v2903, %v2910
    %v2913 = vunpack.c.l.s4 1983009808
    %v2914 = vunpack.c.0.s8 %v2913
    %v2915 = vlaneseq
    %v2916 = vshrl.u32 %v2915, 7
    %v2917 = vsub.s32 %v2914, %v2916
    %v2918 = vrot.slane %v2904, %v2917
    %v2919 = vcombine.low %v2863, %v2879
    %v2920 = vcombine.high %v2863, %v2879
    %v2922 = vunpack.c.l.s4 1934713408
    %v2923 = vunpack.c.0.s8 %v2922
    %v2924 = vlaneseq
    %v2925 = vshrl.u32 %v2924, 7
    %v2926 = vsub.s32 %v2923, %v2925
    %v2927 = vrot.slane %v2919, %v2926
    %v2929 = vunpack.c.l.s4 1934713408
    %v2930 = vunpack.c.0.s8 %v2929
    %v2931 = vlaneseq
    %v2932 = vshrl.u32 %v2931, 7
    %v2933 = vsub.s32 %v2930, %v2932
    %v2934 = vrot.slane %v2920, %v2933
    %v2935 = vcombine.low %v2870, %v2886
    %v2936 = vcombine.high %v2870, %v2886
    %v2938 = vunpack.c.l.s4 1934713408
    %v2939 = vunpack.c.0.s8 %v2938
    %v2940 = vlaneseq
    %v2941 = vshrl.u32 %v2940, 7
    %v2942 = vsub.s32 %v2939, %v2941
    %v2943 = vrot.slane %v2935, %v2942
    %v2945 = vunpack.c.l.s4 1934713408
    %v2946 = vunpack.c.0.s8 %v2945
    %v2947 = vlaneseq
    %v2948 = vshrl.u32 %v2947, 7
    %v2949 = vsub.s32 %v2946, %v2948
    %v2950 = vrot.slane %v2936, %v2949
    %v2951 = vcombine.low %v2895, %v2911
    %v2952 = vcombine.high %v2895, %v2911
    %v2954 = vunpack.c.l.s4 1934713408
    %v2955 = vunpack.c.0.s8 %v2954
    %v2956 = vlaneseq
    %v2957 = vshrl.u32 %v2956, 7
    %v2958 = vsub.s32 %v2955, %v2957
    %v2959 = vrot.slane %v2951, %v2958
    %v2961 = vunpack.c.l.s4 1934713408
    %v2962 = vunpack.c.0.s8 %v2961
    %v2963 = vlaneseq
    %v2964 = vshrl.u32 %v2963, 7
    %v2965 = vsub.s32 %v2962, %v2964
    %v2966 = vrot.slane %v2952, %v2965
    %v2967 = vcombine.low %v2902, %v2918
    %v2968 = vcombine.high %v2902, %v2918
    %v2970 = vunpack.c.l.s4 1934713408
    %v2971 = vunpack.c.0.s8 %v2970
    %v2972 = vlaneseq
    %v2973 = vshrl.u32 %v2972, 7
    %v2974 = vsub.s32 %v2971, %v2973
    %v2975 = vrot.slane %v2967, %v2974
    %v2977 = vunpack.c.l.s4 1934713408
    %v2978 = vunpack.c.0.s8 %v2977
    %v2979 = vlaneseq
    %v2980 = vshrl.u32 %v2979, 7
    %v2981 = vsub.s32 %v2978, %v2980
    %v2982 = vrot.slane %v2968, %v2981
    %v2983 = vcombine.low %v2927, %v2959
    %v2984 = vcombine.high %v2927, %v2959
    %v2985 = vcombine.low %v2934, %v2966
    %v2986 = vcombine.high %v2934, %v2966
    %v2987 = vcombine.low %v2943, %v2975
    %v2988 = vcombine.high %v2943, %v2975
    %v2989 = vcombine.low %v2950, %v2982
    %v2990 = vcombine.high %v2950, %v2982
    %v2991 = vcombine.low %v794, %v2826
    %v2992 = vcombine.high %v794, %v2826
    %v2994 = vunpack.c.l.s4 1983009808
    %v2995 = vunpack.c.0.s8 %v2994
    %v2996 = vlaneseq
    %v2997 = vshrl.u32 %v2996, 7
    %v2998 = vsub.s32 %v2995, %v2997
    %v2999 = vrot.slane %v2991, %v2998
    %v3001 = vunpack.c.l.s4 1983009808
    %v3002 = vunpack.c.0.s8 %v3001
    %v3003 = vlaneseq
    %v3004 = vshrl.u32 %v3003, 7
    %v3005 = vsub.s32 %v3002, %v3004
    %v3006 = vrot.slane %v2992, %v3005
    %v3007 = vcombine.low %v2820, %v2832
    %v3008 = vcombine.high %v2820, %v2832
    %v3010 = vunpack.c.l.s4 1983009808
    %v3011 = vunpack.c.0.s8 %v3010
    %v3012 = vlaneseq
    %v3013 = vshrl.u32 %v3012, 7
    %v3014 = vsub.s32 %v3011, %v3013
    %v3015 = vrot.slane %v3007, %v3014
    %v3017 = vunpack.c.l.s4 1983009808
    %v3018 = vunpack.c.0.s8 %v3017
    %v3019 = vlaneseq
    %v3020 = vshrl.u32 %v3019, 7
    %v3021 = vsub.s32 %v3018, %v3020
    %v3022 = vrot.slane %v3008, %v3021
    %v3023 = vcombine.low %v796, %v2846
    %v3024 = vcombine.high %v796, %v2846
    %v3026 = vunpack.c.l.s4 1983009808
    %v3027 = vunpack.c.0.s8 %v3026
    %v3028 = vlaneseq
    %v3029 = vshrl.u32 %v3028, 7
    %v3030 = vsub.s32 %v3027, %v3029
    %v3031 = vrot.slane %v3023, %v3030
    %v3033 = vunpack.c.l.s4 1983009808
    %v3034 = vunpack.c.0.s8 %v3033
    %v3035 = vlaneseq
    %v3036 = vshrl.u32 %v3035, 7
    %v3037 = vsub.s32 %v3034, %v3036
    %v3038 = vrot.slane %v3024, %v3037
    %v3039 = vcombine.low %v2840, %v2852
    %v3040 = vcombine.high %v2840, %v2852
    %v3042 = vunpack.c.l.s4 1983009808
    %v3043 = vunpack.c.0.s8 %v3042
    %v3044 = vlaneseq
    %v3045 = vshrl.u32 %v3044, 7
    %v3046 = vsub.s32 %v3043, %v3045
    %v3047 = vrot.slane %v3039, %v3046
    %v3049 = vunpack.c.l.s4 1983009808
    %v3050 = vunpack.c.0.s8 %v3049
    %v3051 = vlaneseq
    %v3052 = vshrl.u32 %v3051, 7
    %v3053 = vsub.s32 %v3050, %v3052
    %v3054 = vrot.slane %v3040, %v3053
    %v3055 = vcombine.low %v2999, %v3015
    %v3056 = vcombine.high %v2999, %v3015
    %v3058 = vunpack.c.l.s4 1934713408
    %v3059 = vunpack.c.0.s8 %v3058
    %v3060 = vlaneseq
    %v3061 = vshrl.u32 %v3060, 7
    %v3062 = vsub.s32 %v3059, %v3061
    %v3063 = vrot.slane %v3055, %v3062
    %v3065 = vunpack.c.l.s4 1934713408
    %v3066 = vunpack.c.0.s8 %v3065
    %v3067 = vlaneseq
    %v3068 = vshrl.u32 %v3067, 7
    %v3069 = vsub.s32 %v3066, %v3068
    %v3070 = vrot.slane %v3056, %v3069
    %v3071 = vcombine.low %v3006, %v3022
    %v3072 = vcombine.high %v3006, %v3022
    %v3074 = vunpack.c.l.s4 1934713408
    %v3075 = vunpack.c.0.s8 %v3074
    %v3076 = vlaneseq
    %v3077 = vshrl.u32 %v3076, 7
    %v3078 = vsub.s32 %v3075, %v3077
    %v3079 = vrot.slane %v3071, %v3078
    %v3081 = vunpack.c.l.s4 1934713408
    %v3082 = vunpack.c.0.s8 %v3081
    %v3083 = vlaneseq
    %v3084 = vshrl.u32 %v3083, 7
    %v3085 = vsub.s32 %v3082, %v3084
    %v3086 = vrot.slane %v3072, %v3085
    %v3087 = vcombine.low %v3031, %v3047
    %v3088 = vcombine.high %v3031, %v3047
    %v3090 = vunpack.c.l.s4 1934713408
    %v3091 = vunpack.c.0.s8 %v3090
    %v3092 = vlaneseq
    %v3093 = vshrl.u32 %v3092, 7
    %v3094 = vsub.s32 %v3091, %v3093
    %v3095 = vrot.slane %v3087, %v3094
    %v3097 = vunpack.c.l.s4 1934713408
    %v3098 = vunpack.c.0.s8 %v3097
    %v3099 = vlaneseq
    %v3100 = vshrl.u32 %v3099, 7
    %v3101 = vsub.s32 %v3098, %v3100
    %v3102 = vrot.slane %v3088, %v3101
    %v3103 = vcombine.low %v3038, %v3054
    %v3104 = vcombine.high %v3038, %v3054
    %v3106 = vunpack.c.l.s4 1934713408
    %v3107 = vunpack.c.0.s8 %v3106
    %v3108 = vlaneseq
    %v3109 = vshrl.u32 %v3108, 7
    %v3110 = vsub.s32 %v3107, %v3109
    %v3111 = vrot.slane %v3103, %v3110
    %v3113 = vunpack.c.l.s4 1934713408
    %v3114 = vunpack.c.0.s8 %v3113
    %v3115 = vlaneseq
    %v3116 = vshrl.u32 %v3115, 7
    %v3117 = vsub.s32 %v3114, %v3116
    %v3118 = vrot.slane %v3104, %v3117
    %v3119 = vcombine.low %v3063, %v3095
    %v3120 = vcombine.high %v3063, %v3095
    %v3121 = vcombine.low %v3070, %v3102
    %v3122 = vcombine.high %v3070, %v3102
    %v3123 = vcombine.low %v3079, %v3111
    %v3124 = vcombine.high %v3079, %v3111
    %v3125 = vcombine.low %v3086, %v3118
    %v3126 = vcombine.high %v3086, %v3118
    %v3127 = vcombine.low %v2983, %v2985
    %v3128 = vcombine.high %v2983, %v2985
    %v3130 = vunpack.c.l.s4 1983009808
    %v3131 = vunpack.c.0.s8 %v3130
    %v3132 = vlaneseq
    %v3133 = vshrl.u32 %v3132, 7
    %v3134 = vsub.s32 %v3131, %v3133
    %v3135 = vrot.slane %v3127, %v3134
    %v3137 = vunpack.c.l.s4 1983009808
    %v3138 = vunpack.c.0.s8 %v3137
    %v3139 = vlaneseq
    %v3140 = vshrl.u32 %v3139, 7
    %v3141 = vsub.s32 %v3138, %v3140
    %v3142 = vrot.slane %v3128, %v3141
    %v3143 = vcombine.low %v2984, %v2986
    %v3144 = vcombine.high %v2984, %v2986
    %v3146 = vunpack.c.l.s4 1983009808
    %v3147 = vunpack.c.0.s8 %v3146
    %v3148 = vlaneseq
    %v3149 = vshrl.u32 %v3148, 7
    %v3150 = vsub.s32 %v3147, %v3149
    %v3151 = vrot.slane %v3143, %v3150
    %v3153 = vunpack.c.l.s4 1983009808
    %v3154 = vunpack.c.0.s8 %v3153
    %v3155 = vlaneseq
    %v3156 = vshrl.u32 %v3155, 7
    %v3157 = vsub.s32 %v3154, %v3156
    %v3158 = vrot.slane %v3144, %v3157
    %v3159 = vcombine.low %v2987, %v2989
    %v3160 = vcombine.high %v2987, %v2989
    %v3162 = vunpack.c.l.s4 1983009808
    %v3163 = vunpack.c.0.s8 %v3162
    %v3164 = vlaneseq
    %v3165 = vshrl.u32 %v3164, 7
    %v3166 = vsub.s32 %v3163, %v3165
    %v3167 = vrot.slane %v3159, %v3166
    %v3169 = vunpack.c.l.s4 1983009808
    %v3170 = vunpack.c.0.s8 %v3169
    %v3171 = vlaneseq
    %v3172 = vshrl.u32 %v3171, 7
    %v3173 = vsub.s32 %v3170, %v3172
    %v3174 = vrot.slane %v3160, %v3173
    %v3175 = vcombine.low %v2988, %v2990
    %v3176 = vcombine.high %v2988, %v2990
    %v3178 = vunpack.c.l.s4 1983009808
    %v3179 = vunpack.c.0.s8 %v3178
    %v3180 = vlaneseq
    %v3181 = vshrl.u32 %v3180, 7
    %v3182 = vsub.s32 %v3179, %v3181
    %v3183 = vrot.slane %v3175, %v3182
    %v3185 = vunpack.c.l.s4 1983009808
    %v3186 = vunpack.c.0.s8 %v3185
    %v3187 = vlaneseq
    %v3188 = vshrl.u32 %v3187, 7
    %v3189 = vsub.s32 %v3186, %v3188
    %v3190 = vrot.slane %v3176, %v3189
    %v3191 = vcombine.low %v3135, %v3151
    %v3192 = vcombine.high %v3135, %v3151
    %v3194 = vunpack.c.l.s4 1934713408
    %v3195 = vunpack.c.0.s8 %v3194
    %v3196 = vlaneseq
    %v3197 = vshrl.u32 %v3196, 7
    %v3198 = vsub.s32 %v3195, %v3197
    %v3199 = vrot.slane %v3191, %v3198
    %v3201 = vunpack.c.l.s4 1934713408
    %v3202 = vunpack.c.0.s8 %v3201
    %v3203 = vlaneseq
    %v3204 = vshrl.u32 %v3203, 7
    %v3205 = vsub.s32 %v3202, %v3204
    %v3206 = vrot.slane %v3192, %v3205
    %v3207 = vcombine.low %v3142, %v3158
    %v3208 = vcombine.high %v3142, %v3158
    %v3210 = vunpack.c.l.s4 1934713408
    %v3211 = vunpack.c.0.s8 %v3210
    %v3212 = vlaneseq
    %v3213 = vshrl.u32 %v3212, 7
    %v3214 = vsub.s32 %v3211, %v3213
    %v3215 = vrot.slane %v3207, %v3214
    %v3217 = vunpack.c.l.s4 1934713408
    %v3218 = vunpack.c.0.s8 %v3217
    %v3219 = vlaneseq
    %v3220 = vshrl.u32 %v3219, 7
    %v3221 = vsub.s32 %v3218, %v3220
    %v3222 = vrot.slane %v3208, %v3221
    %v3223 = vcombine.low %v3167, %v3183
    %v3224 = vcombine.high %v3167, %v3183
    %v3226 = vunpack.c.l.s4 1934713408
    %v3227 = vunpack.c.0.s8 %v3226
    %v3228 = vlaneseq
    %v3229 = vshrl.u32 %v3228, 7
    %v3230 = vsub.s32 %v3227, %v3229
    %v3231 = vrot.slane %v3223, %v3230
    %v3233 = vunpack.c.l.s4 1934713408
    %v3234 = vunpack.c.0.s8 %v3233
    %v3235 = vlaneseq
    %v3236 = vshrl.u32 %v3235, 7
    %v3237 = vsub.s32 %v3234, %v3236
    %v3238 = vrot.slane %v3224, %v3237
    %v3239 = vcombine.low %v3174, %v3190
    %v3240 = vcombine.high %v3174, %v3190
    %v3242 = vunpack.c.l.s4 1934713408
    %v3243 = vunpack.c.0.s8 %v3242
    %v3244 = vlaneseq
    %v3245 = vshrl.u32 %v3244, 7
    %v3246 = vsub.s32 %v3243, %v3245
    %v3247 = vrot.slane %v3239, %v3246
    %v3249 = vunpack.c.l.s4 1934713408
    %v3250 = vunpack.c.0.s8 %v3249
    %v3251 = vlaneseq
    %v3252 = vshrl.u32 %v3251, 7
    %v3253 = vsub.s32 %v3250, %v3252
    %v3254 = vrot.slane %v3240, %v3253
    %v3255 = vcombine.low %v3199, %v3231
    %v3256 = vcombine.high %v3199, %v3231
    %v3257 = vcombine.low %v3206, %v3238
    %v3258 = vcombine.high %v3206, %v3238
    %v3259 = vcombine.low %v3215, %v3247
    %v3260 = vcombine.high %v3215, %v3247
    %v3261 = vcombine.low %v3222, %v3254
    %v3262 = vcombine.high %v3222, %v3254
    %v3263 = vcombine.low %v3119, %v3121
    %v3264 = vcombine.high %v3119, %v3121
    %v3266 = vunpack.c.l.s4 1983009808
    %v3267 = vunpack.c.0.s8 %v3266
    %v3268 = vlaneseq
    %v3269 = vshrl.u32 %v3268, 7
    %v3270 = vsub.s32 %v3267, %v3269
    %v3271 = vrot.slane %v3263, %v3270
    %v3273 = vunpack.c.l.s4 1983009808
    %v3274 = vunpack.c.0.s8 %v3273
    %v3275 = vlaneseq
    %v3276 = vshrl.u32 %v3275, 7
    %v3277 = vsub.s32 %v3274, %v3276
    %v3278 = vrot.slane %v3264, %v3277
    %v3279 = vcombine.low %v3120, %v3122
    %v3280 = vcombine.high %v3120, %v3122
    %v3282 = vunpack.c.l.s4 1983009808
    %v3283 = vunpack.c.0.s8 %v3282
    %v3284 = vlaneseq
    %v3285 = vshrl.u32 %v3284, 7
    %v3286 = vsub.s32 %v3283, %v3285
    %v3287 = vrot.slane %v3279, %v3286
    %v3289 = vunpack.c.l.s4 1983009808
    %v3290 = vunpack.c.0.s8 %v3289
    %v3291 = vlaneseq
    %v3292 = vshrl.u32 %v3291, 7
    %v3293 = vsub.s32 %v3290, %v3292
    %v3294 = vrot.slane %v3280, %v3293
    %v3295 = vcombine.low %v3123, %v3125
    %v3296 = vcombine.high %v3123, %v3125
    %v3298 = vunpack.c.l.s4 1983009808
    %v3299 = vunpack.c.0.s8 %v3298
    %v3300 = vlaneseq
    %v3301 = vshrl.u32 %v3300, 7
    %v3302 = vsub.s32 %v3299, %v3301
    %v3303 = vrot.slane %v3295, %v3302
    %v3305 = vunpack.c.l.s4 1983009808
    %v3306 = vunpack.c.0.s8 %v3305
    %v3307 = vlaneseq
    %v3308 = vshrl.u32 %v3307, 7
    %v3309 = vsub.s32 %v3306, %v3308
    %v3310 = vrot.slane %v3296, %v3309
    %v3311 = vcombine.low %v3124, %v3126
    %v3312 = vcombine.high %v3124, %v3126
    %v3314 = vunpack.c.l.s4 1983009808
    %v3315 = vunpack.c.0.s8 %v3314
    %v3316 = vlaneseq
    %v3317 = vshrl.u32 %v3316, 7
    %v3318 = vsub.s32 %v3315, %v3317
    %v3319 = vrot.slane %v3311, %v3318
    %v3321 = vunpack.c.l.s4 1983009808
    %v3322 = vunpack.c.0.s8 %v3321
    %v3323 = vlaneseq
    %v3324 = vshrl.u32 %v3323, 7
    %v3325 = vsub.s32 %v3322, %v3324
    %v3326 = vrot.slane %v3312, %v3325
    %v3327 = vcombine.low %v3271, %v3287
    %v3328 = vcombine.high %v3271, %v3287
    %v3330 = vunpack.c.l.s4 1934713408
    %v3331 = vunpack.c.0.s8 %v3330
    %v3332 = vlaneseq
    %v3333 = vshrl.u32 %v3332, 7
    %v3334 = vsub.s32 %v3331, %v3333
    %v3335 = vrot.slane %v3327, %v3334
    %v3337 = vunpack.c.l.s4 1934713408
    %v3338 = vunpack.c.0.s8 %v3337
    %v3339 = vlaneseq
    %v3340 = vshrl.u32 %v3339, 7
    %v3341 = vsub.s32 %v3338, %v3340
    %v3342 = vrot.slane %v3328, %v3341
    %v3343 = vcombine.low %v3278, %v3294
    %v3344 = vcombine.high %v3278, %v3294
    %v3346 = vunpack.c.l.s4 1934713408
    %v3347 = vunpack.c.0.s8 %v3346
    %v3348 = vlaneseq
    %v3349 = vshrl.u32 %v3348, 7
    %v3350 = vsub.s32 %v3347, %v3349
    %v3351 = vrot.slane %v3343, %v3350
    %v3353 = vunpack.c.l.s4 1934713408
    %v3354 = vunpack.c.0.s8 %v3353
    %v3355 = vlaneseq
    %v3356 = vshrl.u32 %v3355, 7
    %v3357 = vsub.s32 %v3354, %v3356
    %v3358 = vrot.slane %v3344, %v3357
    %v3359 = vcombine.low %v3303, %v3319
    %v3360 = vcombine.high %v3303, %v3319
    %v3362 = vunpack.c.l.s4 1934713408
    %v3363 = vunpack.c.0.s8 %v3362
    %v3364 = vlaneseq
    %v3365 = vshrl.u32 %v3364, 7
    %v3366 = vsub.s32 %v3363, %v3365
    %v3367 = vrot.slane %v3359, %v3366
    %v3369 = vunpack.c.l.s4 1934713408
    %v3370 = vunpack.c.0.s8 %v3369
    %v3371 = vlaneseq
    %v3372 = vshrl.u32 %v3371, 7
    %v3373 = vsub.s32 %v3370, %v3372
    %v3374 = vrot.slane %v3360, %v3373
    %v3375 = vcombine.low %v3310, %v3326
    %v3376 = vcombine.high %v3310, %v3326
    %v3378 = vunpack.c.l.s4 1934713408
    %v3379 = vunpack.c.0.s8 %v3378
    %v3380 = vlaneseq
    %v3381 = vshrl.u32 %v3380, 7
    %v3382 = vsub.s32 %v3379, %v3381
    %v3383 = vrot.slane %v3375, %v3382
    %v3385 = vunpack.c.l.s4 1934713408
    %v3386 = vunpack.c.0.s8 %v3385
    %v3387 = vlaneseq
    %v3388 = vshrl.u32 %v3387, 7
    %v3389 = vsub.s32 %v3386, %v3388
    %v3390 = vrot.slane %v3376, %v3389
    %v3391 = vcombine.low %v3335, %v3367
    %v3392 = vcombine.high %v3335, %v3367
    %v3393 = vcombine.low %v3342, %v3374
    %v3394 = vcombine.high %v3342, %v3374
    %v3395 = vcombine.low %v3351, %v3383
    %v3396 = vcombine.high %v3351, %v3383
    %v3397 = vcombine.low %v3358, %v3390
    %v3398 = vcombine.high %v3358, %v3390
    %v3399 = vpack.c.bf16 %v3391, %v3255
    %v3400 = vpack.c.bf16 %v3392, %v3256
    %v3401 = vpack.c.bf16 %v3393, %v3257
    %v3402 = vpack.c.bf16 %v3394, %v3258
    %v3403 = vpack.c.bf16 %v3395, %v3259
    %v3404 = vpack.c.bf16 %v3396, %v3260
    %v3405 = vpack.c.bf16 %v3397, %v3261
    %v3406 = vpack.c.bf16 %v3398, %v3262
    %vm3407 = vcmask 261120
    %v3409 = vsel %vm3407, %v1815, 0
    %v3412 = vsel %vm3407, %v2807, 0
    %3414 = vmatprep.subr.bf16.mxu0 0
    %3415 = vmatpush1.bf16.xpose.msra.mxu0 %v3412
    %3416 = vmatprep.subr.bf16.mxu0 0
    %3417 = vmatpush1.bf16.xpose.msra.mxu0 0
    %3418 = vmatprep.subr.bf16.mxu0 0
    %3419 = vmatpush1.bf16.xpose.msra.mxu0 0
    %3420 = vmatprep.subr.bf16.mxu0 0
    %3421 = vmatpush1.bf16.xpose.msra.mxu0 0
    %3422 = vmatprep.subr.bf16.mxu0 0
    %3423 = vmatpush1.bf16.xpose.msra.mxu0 0
    %3424 = vmatprep.subr.bf16.mxu0 0
    %3425 = vmatpush1.bf16.xpose.msra.mxu0 0
    %3426 = vmatprep.subr.bf16.mxu0 0
    %3427 = vmatpush1.bf16.xpose.msra.mxu0 0
    %3428 = vmatprep.subr.bf16.mxu0 0
    %3429 = vmatpush1.bf16.xpose.msra.mxu0 0
    %3430 = vmatprep.subr.bf16.mxu0 0
    %3431 = vmatpush1.bf16.xpose.msra.mxu0 0
    %3432 = vmatprep.subr.bf16.mxu0 0
    %3433 = vmatpush1.bf16.xpose.msra.mxu0 0
    %3434 = vmatprep.subr.bf16.mxu0 0
    %3435 = vmatpush1.bf16.xpose.msra.mxu0 0
    %3436 = vmatprep.subr.bf16.mxu0 0
    %3437 = vmatpush1.bf16.xpose.msra.mxu0 0
    %3438 = vmatprep.subr.bf16.mxu0 0
    %3439 = vmatpush1.bf16.xpose.msra.mxu0 0
    %3440 = vmatprep.subr.bf16.mxu0 0
    %3441 = vmatpush1.bf16.xpose.msra.mxu0 0
    %3442 = vmatprep.subr.bf16.mxu0 0
    %3443 = vmatpush1.bf16.xpose.msra.mxu0 0
    %3444 = vmatprep.subr.bf16.mxu0 0
    %3445 = vmatpush1.bf16.xpose.msra.mxu0 0
    %3446 = vmatprep.mubr.bf16.mxu0 0
    %3447 = vmatmul.mubr.bf16.gmra.mrb[0].mxu0 %v3409
    %v3448 = vpop.f32.mrb[0].mxu0
    %v3449 = vadd.f32 0.0, %v3448
    %v3450 = vpop.f32.mrb[0].mxu0
    %v3451 = vpop.f32.mrb[0].mxu0
    %v3452 = vadd.f32 0.0, %v3451
    %v3453 = vpop.f32.mrb[0].mxu0
    %3454 = vdwg.mxu0
    %v3456 = vsel %vm3407, %v1816, 0
    %v3459 = vsel %vm3407, %v2808, 0
    %3461 = vmatprep.subr.bf16.mxu0 0
    %3462 = vmatpush1.bf16.xpose.msra.mxu0 %v3459
    %3463 = vmatprep.subr.bf16.mxu0 0
    %3464 = vmatpush1.bf16.xpose.msra.mxu0 0
    %3465 = vmatprep.subr.bf16.mxu0 0
    %3466 = vmatpush1.bf16.xpose.msra.mxu0 0
    %3467 = vmatprep.subr.bf16.mxu0 0
    %3468 = vmatpush1.bf16.xpose.msra.mxu0 0
    %3469 = vmatprep.subr.bf16.mxu0 0
    %3470 = vmatpush1.bf16.xpose.msra.mxu0 0
    %3471 = vmatprep.subr.bf16.mxu0 0
    %3472 = vmatpush1.bf16.xpose.msra.mxu0 0
    %3473 = vmatprep.subr.bf16.mxu0 0
    %3474 = vmatpush1.bf16.xpose.msra.mxu0 0
    %3475 = vmatprep.subr.bf16.mxu0 0
    %3476 = vmatpush1.bf16.xpose.msra.mxu0 0
    %3477 = vmatprep.subr.bf16.mxu0 0
    %3478 = vmatpush1.bf16.xpose.msra.mxu0 0
    %3479 = vmatprep.subr.bf16.mxu0 0
    %3480 = vmatpush1.bf16.xpose.msra.mxu0 0
    %3481 = vmatprep.subr.bf16.mxu0 0
    %3482 = vmatpush1.bf16.xpose.msra.mxu0 0
    %3483 = vmatprep.subr.bf16.mxu0 0
    %3484 = vmatpush1.bf16.xpose.msra.mxu0 0
    %3485 = vmatprep.subr.bf16.mxu0 0
    %3486 = vmatpush1.bf16.xpose.msra.mxu0 0
    %3487 = vmatprep.subr.bf16.mxu0 0
    %3488 = vmatpush1.bf16.xpose.msra.mxu0 0
    %3489 = vmatprep.subr.bf16.mxu0 0
    %3490 = vmatpush1.bf16.xpose.msra.mxu0 0
    %3491 = vmatprep.subr.bf16.mxu0 0
    %3492 = vmatpush1.bf16.xpose.msra.mxu0 0
    %3493 = vmatprep.mubr.bf16.mxu0 0
    %3494 = vmatmul.mubr.bf16.gmra.mrb[0].mxu0 %v3456
    %v3495 = vpop.f32.mrb[0].mxu0
    %v3496 = vadd.f32 0.0, %v3495
    %v3497 = vpop.f32.mrb[0].mxu0
    %v3498 = vpop.f32.mrb[0].mxu0
    %v3499 = vadd.f32 0.0, %v3498
    %v3500 = vpop.f32.mrb[0].mxu0
    %3501 = vdwg.mxu0
    %v3503 = vsel %vm3407, %v1817, 0
    %v3506 = vsel %vm3407, %v2809, 0
    %3508 = vmatprep.subr.bf16.mxu0 0
    %3509 = vmatpush1.bf16.xpose.msra.mxu0 %v3506
    %3510 = vmatprep.subr.bf16.mxu0 0
    %3511 = vmatpush1.bf16.xpose.msra.mxu0 0
    %3512 = vmatprep.subr.bf16.mxu0 0
    %3513 = vmatpush1.bf16.xpose.msra.mxu0 0
    %3514 = vmatprep.subr.bf16.mxu0 0
    %3515 = vmatpush1.bf16.xpose.msra.mxu0 0
    %3516 = vmatprep.subr.bf16.mxu0 0
    %3517 = vmatpush1.bf16.xpose.msra.mxu0 0
    %3518 = vmatprep.subr.bf16.mxu0 0
    %3519 = vmatpush1.bf16.xpose.msra.mxu0 0
    %3520 = vmatprep.subr.bf16.mxu0 0
    %3521 = vmatpush1.bf16.xpose.msra.mxu0 0
    %3522 = vmatprep.subr.bf16.mxu0 0
    %3523 = vmatpush1.bf16.xpose.msra.mxu0 0
    %3524 = vmatprep.subr.bf16.mxu0 0
    %3525 = vmatpush1.bf16.xpose.msra.mxu0 0
    %3526 = vmatprep.subr.bf16.mxu0 0
    %3527 = vmatpush1.bf16.xpose.msra.mxu0 0
    %3528 = vmatprep.subr.bf16.mxu0 0
    %3529 = vmatpush1.bf16.xpose.msra.mxu0 0
    %3530 = vmatprep.subr.bf16.mxu0 0
    %3531 = vmatpush1.bf16.xpose.msra.mxu0 0
    %3532 = vmatprep.subr.bf16.mxu0 0
    %3533 = vmatpush1.bf16.xpose.msra.mxu0 0
    %3534 = vmatprep.subr.bf16.mxu0 0
    %3535 = vmatpush1.bf16.xpose.msra.mxu0 0
    %3536 = vmatprep.subr.bf16.mxu0 0
    %3537 = vmatpush1.bf16.xpose.msra.mxu0 0
    %3538 = vmatprep.subr.bf16.mxu0 0
    %3539 = vmatpush1.bf16.xpose.msra.mxu0 0
    %3540 = vmatprep.mubr.bf16.mxu0 0
    %3541 = vmatmul.mubr.bf16.gmra.mrb[0].mxu0 %v3503
    %v3542 = vpop.f32.mrb[0].mxu0
    %v3543 = vadd.f32 0.0, %v3542
    %v3544 = vpop.f32.mrb[0].mxu0
    %v3545 = vpop.f32.mrb[0].mxu0
    %v3546 = vadd.f32 0.0, %v3545
    %v3547 = vpop.f32.mrb[0].mxu0
    %3548 = vdwg.mxu0
    %v3550 = vsel %vm3407, %v1818, 0
    %v3553 = vsel %vm3407, %v2810, 0
    %3555 = vmatprep.subr.bf16.mxu0 0
    %3556 = vmatpush1.bf16.xpose.msra.mxu0 %v3553
    %3557 = vmatprep.subr.bf16.mxu0 0
    %3558 = vmatpush1.bf16.xpose.msra.mxu0 0
    %3559 = vmatprep.subr.bf16.mxu0 0
    %3560 = vmatpush1.bf16.xpose.msra.mxu0 0
    %3561 = vmatprep.subr.bf16.mxu0 0
    %3562 = vmatpush1.bf16.xpose.msra.mxu0 0
    %3563 = vmatprep.subr.bf16.mxu0 0
    %3564 = vmatpush1.bf16.xpose.msra.mxu0 0
    %3565 = vmatprep.subr.bf16.mxu0 0
    %3566 = vmatpush1.bf16.xpose.msra.mxu0 0
    %3567 = vmatprep.subr.bf16.mxu0 0
    %3568 = vmatpush1.bf16.xpose.msra.mxu0 0
    %3569 = vmatprep.subr.bf16.mxu0 0
    %3570 = vmatpush1.bf16.xpose.msra.mxu0 0
    %3571 = vmatprep.subr.bf16.mxu0 0
    %3572 = vmatpush1.bf16.xpose.msra.mxu0 0
    %3573 = vmatprep.subr.bf16.mxu0 0
    %3574 = vmatpush1.bf16.xpose.msra.mxu0 0
    %3575 = vmatprep.subr.bf16.mxu0 0
    %3576 = vmatpush1.bf16.xpose.msra.mxu0 0
    %3577 = vmatprep.subr.bf16.mxu0 0
    %3578 = vmatpush1.bf16.xpose.msra.mxu0 0
    %3579 = vmatprep.subr.bf16.mxu0 0
    %3580 = vmatpush1.bf16.xpose.msra.mxu0 0
    %3581 = vmatprep.subr.bf16.mxu0 0
    %3582 = vmatpush1.bf16.xpose.msra.mxu0 0
    %3583 = vmatprep.subr.bf16.mxu0 0
    %3584 = vmatpush1.bf16.xpose.msra.mxu0 0
    %3585 = vmatprep.subr.bf16.mxu0 0
    %3586 = vmatpush1.bf16.xpose.msra.mxu0 0
    %3587 = vmatprep.mubr.bf16.mxu0 0
    %3588 = vmatmul.mubr.bf16.gmra.mrb[0].mxu0 %v3550
    %v3589 = vpop.f32.mrb[0].mxu0
    %v3590 = vadd.f32 0.0, %v3589
    %v3591 = vpop.f32.mrb[0].mxu0
    %v3592 = vpop.f32.mrb[0].mxu0
    %v3593 = vadd.f32 0.0, %v3592
    %v3594 = vpop.f32.mrb[0].mxu0
    %3595 = vdwg.mxu0
    %v3597 = vsel %vm3407, %v1819, 0
    %v3600 = vsel %vm3407, %v2811, 0
    %3602 = vmatprep.subr.bf16.mxu0 0
    %3603 = vmatpush1.bf16.xpose.msra.mxu0 %v3600
    %3604 = vmatprep.subr.bf16.mxu0 0
    %3605 = vmatpush1.bf16.xpose.msra.mxu0 0
    %3606 = vmatprep.subr.bf16.mxu0 0
    %3607 = vmatpush1.bf16.xpose.msra.mxu0 0
    %3608 = vmatprep.subr.bf16.mxu0 0
    %3609 = vmatpush1.bf16.xpose.msra.mxu0 0
    %3610 = vmatprep.subr.bf16.mxu0 0
    %3611 = vmatpush1.bf16.xpose.msra.mxu0 0
    %3612 = vmatprep.subr.bf16.mxu0 0
    %3613 = vmatpush1.bf16.xpose.msra.mxu0 0
    %3614 = vmatprep.subr.bf16.mxu0 0
    %3615 = vmatpush1.bf16.xpose.msra.mxu0 0
    %3616 = vmatprep.subr.bf16.mxu0 0
    %3617 = vmatpush1.bf16.xpose.msra.mxu0 0
    %3618 = vmatprep.subr.bf16.mxu0 0
    %3619 = vmatpush1.bf16.xpose.msra.mxu0 0
    %3620 = vmatprep.subr.bf16.mxu0 0
    %3621 = vmatpush1.bf16.xpose.msra.mxu0 0
    %3622 = vmatprep.subr.bf16.mxu0 0
    %3623 = vmatpush1.bf16.xpose.msra.mxu0 0
    %3624 = vmatprep.subr.bf16.mxu0 0
    %3625 = vmatpush1.bf16.xpose.msra.mxu0 0
    %3626 = vmatprep.subr.bf16.mxu0 0
    %3627 = vmatpush1.bf16.xpose.msra.mxu0 0
    %3628 = vmatprep.subr.bf16.mxu0 0
    %3629 = vmatpush1.bf16.xpose.msra.mxu0 0
    %3630 = vmatprep.subr.bf16.mxu0 0
    %3631 = vmatpush1.bf16.xpose.msra.mxu0 0
    %3632 = vmatprep.subr.bf16.mxu0 0
    %3633 = vmatpush1.bf16.xpose.msra.mxu0 0
    %3634 = vmatprep.mubr.bf16.mxu0 0
    %3635 = vmatmul.mubr.bf16.gmra.mrb[0].mxu0 %v3597
    %v3636 = vpop.f32.mrb[0].mxu0
    %v3637 = vadd.f32 0.0, %v3636
    %v3638 = vpop.f32.mrb[0].mxu0
    %v3639 = vpop.f32.mrb[0].mxu0
    %v3640 = vadd.f32 0.0, %v3639
    %v3641 = vpop.f32.mrb[0].mxu0
    %3642 = vdwg.mxu0
    %v3644 = vsel %vm3407, %v1820, 0
    %v3647 = vsel %vm3407, %v2812, 0
    %3649 = vmatprep.subr.bf16.mxu0 0
    %3650 = vmatpush1.bf16.xpose.msra.mxu0 %v3647
    %3651 = vmatprep.subr.bf16.mxu0 0
    %3652 = vmatpush1.bf16.xpose.msra.mxu0 0
    %3653 = vmatprep.subr.bf16.mxu0 0
    %3654 = vmatpush1.bf16.xpose.msra.mxu0 0
    %3655 = vmatprep.subr.bf16.mxu0 0
    %3656 = vmatpush1.bf16.xpose.msra.mxu0 0
    %3657 = vmatprep.subr.bf16.mxu0 0
    %3658 = vmatpush1.bf16.xpose.msra.mxu0 0
    %3659 = vmatprep.subr.bf16.mxu0 0
    %3660 = vmatpush1.bf16.xpose.msra.mxu0 0
    %3661 = vmatprep.subr.bf16.mxu0 0
    %3662 = vmatpush1.bf16.xpose.msra.mxu0 0
    %3663 = vmatprep.subr.bf16.mxu0 0
    %3664 = vmatpush1.bf16.xpose.msra.mxu0 0
    %3665 = vmatprep.subr.bf16.mxu0 0
    %3666 = vmatpush1.bf16.xpose.msra.mxu0 0
    %3667 = vmatprep.subr.bf16.mxu0 0
    %3668 = vmatpush1.bf16.xpose.msra.mxu0 0
    %3669 = vmatprep.subr.bf16.mxu0 0
    %3670 = vmatpush1.bf16.xpose.msra.mxu0 0
    %3671 = vmatprep.subr.bf16.mxu0 0
    %3672 = vmatpush1.bf16.xpose.msra.mxu0 0
    %3673 = vmatprep.subr.bf16.mxu0 0
    %3674 = vmatpush1.bf16.xpose.msra.mxu0 0
    %3675 = vmatprep.subr.bf16.mxu0 0
    %3676 = vmatpush1.bf16.xpose.msra.mxu0 0
    %3677 = vmatprep.subr.bf16.mxu0 0
    %3678 = vmatpush1.bf16.xpose.msra.mxu0 0
    %3679 = vmatprep.subr.bf16.mxu0 0
    %3680 = vmatpush1.bf16.xpose.msra.mxu0 0
    %3681 = vmatprep.mubr.bf16.mxu0 0
    %3682 = vmatmul.mubr.bf16.gmra.mrb[0].mxu0 %v3644
    %v3683 = vpop.f32.mrb[0].mxu0
    %v3684 = vadd.f32 0.0, %v3683
    %v3685 = vpop.f32.mrb[0].mxu0
    %v3686 = vpop.f32.mrb[0].mxu0
    %v3687 = vadd.f32 0.0, %v3686
    %v3688 = vpop.f32.mrb[0].mxu0
    %3689 = vdwg.mxu0
    %v3691 = vsel %vm3407, %v1821, 0
    %v3694 = vsel %vm3407, %v2813, 0
    %3696 = vmatprep.subr.bf16.mxu0 0
    %3697 = vmatpush1.bf16.xpose.msra.mxu0 %v3694
    %3698 = vmatprep.subr.bf16.mxu0 0
    %3699 = vmatpush1.bf16.xpose.msra.mxu0 0
    %3700 = vmatprep.subr.bf16.mxu0 0
    %3701 = vmatpush1.bf16.xpose.msra.mxu0 0
    %3702 = vmatprep.subr.bf16.mxu0 0
    %3703 = vmatpush1.bf16.xpose.msra.mxu0 0
    %3704 = vmatprep.subr.bf16.mxu0 0
    %3705 = vmatpush1.bf16.xpose.msra.mxu0 0
    %3706 = vmatprep.subr.bf16.mxu0 0
    %3707 = vmatpush1.bf16.xpose.msra.mxu0 0
    %3708 = vmatprep.subr.bf16.mxu0 0
    %3709 = vmatpush1.bf16.xpose.msra.mxu0 0
    %3710 = vmatprep.subr.bf16.mxu0 0
    %3711 = vmatpush1.bf16.xpose.msra.mxu0 0
    %3712 = vmatprep.subr.bf16.mxu0 0
    %3713 = vmatpush1.bf16.xpose.msra.mxu0 0
    %3714 = vmatprep.subr.bf16.mxu0 0
    %3715 = vmatpush1.bf16.xpose.msra.mxu0 0
    %3716 = vmatprep.subr.bf16.mxu0 0
    %3717 = vmatpush1.bf16.xpose.msra.mxu0 0
    %3718 = vmatprep.subr.bf16.mxu0 0
    %3719 = vmatpush1.bf16.xpose.msra.mxu0 0
    %3720 = vmatprep.subr.bf16.mxu0 0
    %3721 = vmatpush1.bf16.xpose.msra.mxu0 0
    %3722 = vmatprep.subr.bf16.mxu0 0
    %3723 = vmatpush1.bf16.xpose.msra.mxu0 0
    %3724 = vmatprep.subr.bf16.mxu0 0
    %3725 = vmatpush1.bf16.xpose.msra.mxu0 0
    %3726 = vmatprep.subr.bf16.mxu0 0
    %3727 = vmatpush1.bf16.xpose.msra.mxu0 0
    %3728 = vmatprep.mubr.bf16.mxu0 0
    %3729 = vmatmul.mubr.bf16.gmra.mrb[0].mxu0 %v3691
    %v3730 = vpop.f32.mrb[0].mxu0
    %v3731 = vadd.f32 0.0, %v3730
    %v3732 = vpop.f32.mrb[0].mxu0
    %v3733 = vpop.f32.mrb[0].mxu0
    %v3734 = vadd.f32 0.0, %v3733
    %v3735 = vpop.f32.mrb[0].mxu0
    %3736 = vdwg.mxu0
    %v3738 = vsel %vm3407, %v1822, 0
    %v3741 = vsel %vm3407, %v2814, 0
    %3743 = vmatprep.subr.bf16.mxu0 0
    %3744 = vmatpush1.bf16.xpose.msra.mxu0 %v3741
    %3745 = vmatprep.subr.bf16.mxu0 0
    %3746 = vmatpush1.bf16.xpose.msra.mxu0 0
    %3747 = vmatprep.subr.bf16.mxu0 0
    %3748 = vmatpush1.bf16.xpose.msra.mxu0 0
    %3749 = vmatprep.subr.bf16.mxu0 0
    %3750 = vmatpush1.bf16.xpose.msra.mxu0 0
    %3751 = vmatprep.subr.bf16.mxu0 0
    %3752 = vmatpush1.bf16.xpose.msra.mxu0 0
    %3753 = vmatprep.subr.bf16.mxu0 0
    %3754 = vmatpush1.bf16.xpose.msra.mxu0 0
    %3755 = vmatprep.subr.bf16.mxu0 0
    %3756 = vmatpush1.bf16.xpose.msra.mxu0 0
    %3757 = vmatprep.subr.bf16.mxu0 0
    %3758 = vmatpush1.bf16.xpose.msra.mxu0 0
    %3759 = vmatprep.subr.bf16.mxu0 0
    %3760 = vmatpush1.bf16.xpose.msra.mxu0 0
    %3761 = vmatprep.subr.bf16.mxu0 0
    %3762 = vmatpush1.bf16.xpose.msra.mxu0 0
    %3763 = vmatprep.subr.bf16.mxu0 0
    %3764 = vmatpush1.bf16.xpose.msra.mxu0 0
    %3765 = vmatprep.subr.bf16.mxu0 0
    %3766 = vmatpush1.bf16.xpose.msra.mxu0 0
    %3767 = vmatprep.subr.bf16.mxu0 0
    %3768 = vmatpush1.bf16.xpose.msra.mxu0 0
    %3769 = vmatprep.subr.bf16.mxu0 0
    %3770 = vmatpush1.bf16.xpose.msra.mxu0 0
    %3771 = vmatprep.subr.bf16.mxu0 0
    %3772 = vmatpush1.bf16.xpose.msra.mxu0 0
    %3773 = vmatprep.subr.bf16.mxu0 0
    %3774 = vmatpush1.bf16.xpose.msra.mxu0 0
    %3775 = vmatprep.mubr.bf16.mxu0 0
    %3776 = vmatmul.mubr.bf16.gmra.mrb[0].mxu0 %v3738
    %v3777 = vpop.f32.mrb[0].mxu0
    %v3778 = vadd.f32 0.0, %v3777
    %v3779 = vpop.f32.mrb[0].mxu0
    %v3780 = vpop.f32.mrb[0].mxu0
    %v3781 = vadd.f32 0.0, %v3780
    %v3782 = vpop.f32.mrb[0].mxu0
    %3783 = vdwg.mxu0
    %v3784 = vlaneseq
    %v3785 = vshrl.u32 %v3784, 7
    %v3786 = vadd.s32 %v3785, 8
    %v3787 = vlaneseq
    %v3788 = vand.u32 %v3787, 127
    %s3789 = sld [smem:[#allocation3]]
    %vm3790 = vcmp.ge.s32.totalorder %v3785, 0
    %vm3791 = vcmp.ge.s32.totalorder %v3786, 0
    %vm3792 = vcmp.lt.s32.totalorder %v3785, 8
    %vm3793 = vcmp.lt.s32.totalorder %v3786, 8
    %vm3794 = vmand %vm3790, %vm3792
    %vm3795 = vmand %vm3791, %vm3793
    %vm3796 = vcmp.ge.s32.totalorder %v3788, 0
    %vm3797 = vcmp.lt.s32.totalorder %v3788, 8
    %vm3798 = vmand %vm3796, %vm3797
    %vm3799 = vmand %vm3794, %vm3798
    %vm3800 = vmand %vm3795, %vm3798
    %v3801 = vstv %s3789
    %vm3802 = vcmp.lt.s32.totalorder %v3785, %v3801
    %vm3803 = vcmp.lt.s32.totalorder %v3786, %v3801
    %vm3804 = vmand %vm3794, %vm3802
    %vm3805 = vmand %vm3795, %vm3803
    %vm3806 = vcmp.lt.s32.totalorder %v3788, %v3801
    %vm3807 = vmand %vm3798, %vm3806
    %vm3808 = vmand %vm3804, %vm3807
    %vm3809 = vmand %vm3805, %vm3807
    %s3810 = sld [smem:[#allocation3 + $0x1]]
    %s3811 = sadd.s32 %s3810, 8
    %vm3812 = vcmp.ge.s32.totalorder %v3785, 8
    %vm3813 = vcmp.ge.s32.totalorder %v3786, 8
    %vm3814 = vcmp.lt.s32.totalorder %v3785, 16
    %vm3815 = vcmp.lt.s32.totalorder %v3786, 16
    %vm3816 = vmand %vm3812, %vm3814
    %vm3817 = vmand %vm3813, %vm3815
    %vm3818 = vcmp.ge.s32.totalorder %v3788, 8
    %vm3819 = vcmp.lt.s32.totalorder %v3788, 16
    %vm3820 = vmand %vm3818, %vm3819
    %vm3821 = vmand %vm3816, %vm3820
    %vm3822 = vmand %vm3817, %vm3820
    %v3823 = vstv %s3811
    %vm3824 = vcmp.lt.s32.totalorder %v3785, %v3823
    %vm3825 = vcmp.lt.s32.totalorder %v3786, %v3823
    %vm3826 = vmand %vm3816, %vm3824
    %vm3827 = vmand %vm3817, %vm3825
    %vm3828 = vcmp.lt.s32.totalorder %v3788, %v3823
    %vm3829 = vmand %vm3820, %vm3828
    %vm3830 = vmand %vm3826, %vm3829
    %vm3831 = vmand %vm3827, %vm3829
    %vm3832 = vmor %vm3799, %vm3821
    %vm3833 = vmor %vm3800, %vm3822
    %vm3834 = vmor %vm3808, %vm3830
    %vm3835 = vmor %vm3809, %vm3831
    %v3836 = vsel %vm3832, -1e+09, -inf
    %v3837 = vsel %vm3833, -1e+09, -inf
    %v3838 = vsel %vm3834, 1, 0
    %v3839 = vsel %vm3835, 1, 0
    %vm3840 = vcmp.eq.s32.totalorder %v3838, 1
    %vm3841 = vcmp.eq.s32.totalorder %v3839, 1
    %v3842 = vsel %vm3840, %v3449, %v3836
    %v3843 = vsel %vm3841, %v3452, %v3837
    %v3844 = vsel %vm3840, %v3496, %v3836
    %v3845 = vsel %vm3841, %v3499, %v3837
    %v3846 = vsel %vm3840, %v3543, %v3836
    %v3847 = vsel %vm3841, %v3546, %v3837
    %v3848 = vsel %vm3840, %v3590, %v3836
    %v3849 = vsel %vm3841, %v3593, %v3837
    %v3850 = vsel %vm3840, %v3637, %v3836
    %v3851 = vsel %vm3841, %v3640, %v3837
    %v3852 = vsel %vm3840, %v3684, %v3836
    %v3853 = vsel %vm3841, %v3687, %v3837
    %v3854 = vsel %vm3840, %v3731, %v3836
    %v3855 = vsel %vm3841, %v3734, %v3837
    %v3856 = vsel %vm3840, %v3778, %v3836
    %v3857 = vsel %vm3841, %v3781, %v3837
    %v3858 = vsel %vm1526, %v3842, -inf
    %3859 = vmax.xlane.f32.xlu0 %v3858
    %v3860 = vpop.xlane.xlu0 %3859
    %v3861 = vsel %vm1526, %v3843, -inf
    %3862 = vmax.xlane.f32.xlu0 %v3861
    %v3863 = vpop.xlane.xlu0 %3862
    %v3864 = vsel %vm1526, %v3844, -inf
    %3865 = vmax.xlane.f32.xlu0 %v3864
    %v3866 = vpop.xlane.xlu0 %3865
    %v3867 = vsel %vm1526, %v3845, -inf
    %3868 = vmax.xlane.f32.xlu0 %v3867
    %v3869 = vpop.xlane.xlu0 %3868
    %v3870 = vsel %vm1526, %v3846, -inf
    %3871 = vmax.xlane.f32.xlu0 %v3870
    %v3872 = vpop.xlane.xlu0 %3871
    %v3873 = vsel %vm1526, %v3847, -inf
    %3874 = vmax.xlane.f32.xlu0 %v3873
    %v3875 = vpop.xlane.xlu0 %3874
    %v3876 = vsel %vm1526, %v3848, -inf
    %3877 = vmax.xlane.f32.xlu0 %v3876
    %v3878 = vpop.xlane.xlu0 %3877
    %v3879 = vsel %vm1526, %v3849, -inf
    %3880 = vmax.xlane.f32.xlu0 %v3879
    %v3881 = vpop.xlane.xlu0 %3880
    %v3882 = vsel %vm1526, %v3850, -inf
    %3883 = vmax.xlane.f32.xlu0 %v3882
    %v3884 = vpop.xlane.xlu0 %3883
    %v3885 = vsel %vm1526, %v3851, -inf
    %3886 = vmax.xlane.f32.xlu0 %v3885
    %v3887 = vpop.xlane.xlu0 %3886
    %v3888 = vsel %vm1526, %v3852, -inf
    %3889 = vmax.xlane.f32.xlu0 %v3888
    %v3890 = vpop.xlane.xlu0 %3889
    %v3891 = vsel %vm1526, %v3853, -inf
    %3892 = vmax.xlane.f32.xlu0 %v3891
    %v3893 = vpop.xlane.xlu0 %3892
    %v3894 = vsel %vm1526, %v3854, -inf
    %3895 = vmax.xlane.f32.xlu0 %v3894
    %v3896 = vpop.xlane.xlu0 %3895
    %v3897 = vsel %vm1526, %v3855, -inf
    %3898 = vmax.xlane.f32.xlu0 %v3897
    %v3899 = vpop.xlane.xlu0 %3898
    %v3900 = vsel %vm1526, %v3856, -inf
    %3901 = vmax.xlane.f32.xlu0 %v3900
    %v3902 = vpop.xlane.xlu0 %3901
    %v3903 = vsel %vm1526, %v3857, -inf
    %3904 = vmax.xlane.f32.xlu0 %v3903
    %v3905 = vpop.xlane.xlu0 %3904
    %v3906 = vsub.f32 %v3842, %v3860
    %v3907 = vsub.f32 %v3843, %v3863
    %v3908 = vsub.f32 %v3844, %v3866
    %v3909 = vsub.f32 %v3845, %v3869
    %v3910 = vsub.f32 %v3846, %v3872
    %v3911 = vsub.f32 %v3847, %v3875
    %v3912 = vsub.f32 %v3848, %v3878
    %v3913 = vsub.f32 %v3849, %v3881
    %v3914 = vsub.f32 %v3850, %v3884
    %v3915 = vsub.f32 %v3851, %v3887
    %v3916 = vsub.f32 %v3852, %v3890
    %v3917 = vsub.f32 %v3853, %v3893
    %v3918 = vsub.f32 %v3854, %v3896
    %v3919 = vsub.f32 %v3855, %v3899
    %v3920 = vsub.f32 %v3856, %v3902
    %v3921 = vsub.f32 %v3857, %v3905
    %v3922 = vmul.f32 %v3906, 1.442695
    %v3923 = vpow.pop %v3922
    %v3924 = vmul.f32 %v3907, 1.442695
    %v3925 = vpow.pop %v3924
    %v3926 = vmul.f32 %v3908, 1.442695
    %v3927 = vpow.pop %v3926
    %v3928 = vmul.f32 %v3909, 1.442695
    %v3929 = vpow.pop %v3928
    %v3930 = vmul.f32 %v3910, 1.442695
    %v3931 = vpow.pop %v3930
    %v3932 = vmul.f32 %v3911, 1.442695
    %v3933 = vpow.pop %v3932
    %v3934 = vmul.f32 %v3912, 1.442695
    %v3935 = vpow.pop %v3934
    %v3936 = vmul.f32 %v3913, 1.442695
    %v3937 = vpow.pop %v3936
    %v3938 = vmul.f32 %v3914, 1.442695
    %v3939 = vpow.pop %v3938
    %v3940 = vmul.f32 %v3915, 1.442695
    %v3941 = vpow.pop %v3940
    %v3942 = vmul.f32 %v3916, 1.442695
    %v3943 = vpow.pop %v3942
    %v3944 = vmul.f32 %v3917, 1.442695
    %v3945 = vpow.pop %v3944
    %v3946 = vmul.f32 %v3918, 1.442695
    %v3947 = vpow.pop %v3946
    %v3948 = vmul.f32 %v3919, 1.442695
    %v3949 = vpow.pop %v3948
    %v3950 = vmul.f32 %v3920, 1.442695
    %v3951 = vpow.pop %v3950
    %v3952 = vmul.f32 %v3921, 1.442695
    %v3953 = vpow.pop %v3952
    %v3954 = vsel %vm1526, %v3923, 0.0
    %3955 = vadd.xlane.f32.xlu0 %v3954
    %v3956 = vpop.xlane.xlu0 %3955
    %v3957 = vsel %vm1526, %v3925, 0.0
    %3958 = vadd.xlane.f32.xlu0 %v3957
    %v3959 = vpop.xlane.xlu0 %3958
    %v3960 = vsel %vm1526, %v3927, 0.0
    %3961 = vadd.xlane.f32.xlu0 %v3960
    %v3962 = vpop.xlane.xlu0 %3961
    %v3963 = vsel %vm1526, %v3929, 0.0
    %3964 = vadd.xlane.f32.xlu0 %v3963
    %v3965 = vpop.xlane.xlu0 %3964
    %v3966 = vsel %vm1526, %v3931, 0.0
    %3967 = vadd.xlane.f32.xlu0 %v3966
    %v3968 = vpop.xlane.xlu0 %3967
    %v3969 = vsel %vm1526, %v3933, 0.0
    %3970 = vadd.xlane.f32.xlu0 %v3969
    %v3971 = vpop.xlane.xlu0 %3970
    %v3972 = vsel %vm1526, %v3935, 0.0
    %3973 = vadd.xlane.f32.xlu0 %v3972
    %v3974 = vpop.xlane.xlu0 %3973
    %v3975 = vsel %vm1526, %v3937, 0.0
    %3976 = vadd.xlane.f32.xlu0 %v3975
    %v3977 = vpop.xlane.xlu0 %3976
    %v3978 = vsel %vm1526, %v3939, 0.0
    %3979 = vadd.xlane.f32.xlu0 %v3978
    %v3980 = vpop.xlane.xlu0 %3979
    %v3981 = vsel %vm1526, %v3941, 0.0
    %3982 = vadd.xlane.f32.xlu0 %v3981
    %v3983 = vpop.xlane.xlu0 %3982
    %v3984 = vsel %vm1526, %v3943, 0.0
    %3985 = vadd.xlane.f32.xlu0 %v3984
    %v3986 = vpop.xlane.xlu0 %3985
    %v3987 = vsel %vm1526, %v3945, 0.0
    %3988 = vadd.xlane.f32.xlu0 %v3987
    %v3989 = vpop.xlane.xlu0 %3988
    %v3990 = vsel %vm1526, %v3947, 0.0
    %3991 = vadd.xlane.f32.xlu0 %v3990
    %v3992 = vpop.xlane.xlu0 %3991
    %v3993 = vsel %vm1526, %v3949, 0.0
    %3994 = vadd.xlane.f32.xlu0 %v3993
    %v3995 = vpop.xlane.xlu0 %3994
    %v3996 = vsel %vm1526, %v3951, 0.0
    %3997 = vadd.xlane.f32.xlu0 %v3996
    %v3998 = vpop.xlane.xlu0 %3997
    %v3999 = vsel %vm1526, %v3953, 0.0
    %4000 = vadd.xlane.f32.xlu0 %v3999
    %v4001 = vpop.xlane.xlu0 %4000
    %v4002 = vrcp.pop %v3956
    %v4003 = vrcp.pop %v3959
    %v4004 = vrcp.pop %v3962
    %v4005 = vrcp.pop %v3965
    %v4006 = vrcp.pop %v3968
    %v4007 = vrcp.pop %v3971
    %v4008 = vrcp.pop %v3974
    %v4009 = vrcp.pop %v3977
    %v4010 = vrcp.pop %v3980
    %v4011 = vrcp.pop %v3983
    %v4012 = vrcp.pop %v3986
    %v4013 = vrcp.pop %v3989
    %v4014 = vrcp.pop %v3992
    %v4015 = vrcp.pop %v3995
    %v4016 = vrcp.pop %v3998
    %v4017 = vrcp.pop %v4001
    %v4018 = vmul.f32 %v3923, %v4002
    %v4019 = vmul.f32 %v3925, %v4003
    %v4020 = vmul.f32 %v3927, %v4004
    %v4021 = vmul.f32 %v3929, %v4005
    %v4022 = vmul.f32 %v3931, %v4006
    %v4023 = vmul.f32 %v3933, %v4007
    %v4024 = vmul.f32 %v3935, %v4008
    %v4025 = vmul.f32 %v3937, %v4009
    %v4026 = vmul.f32 %v3939, %v4010
    %v4027 = vmul.f32 %v3941, %v4011
    %v4028 = vmul.f32 %v3943, %v4012
    %v4029 = vmul.f32 %v3945, %v4013
    %v4030 = vmul.f32 %v3947, %v4014
    %v4031 = vmul.f32 %v3949, %v4015
    %v4032 = vmul.f32 %v3951, %v4016
    %v4033 = vmul.f32 %v3953, %v4017
    %v4034 = vpack.c.bf16 %v4019, %v4018
    %v4035 = vpack.c.bf16 %v4021, %v4020
    %v4036 = vpack.c.bf16 %v4023, %v4022
    %v4037 = vpack.c.bf16 %v4025, %v4024
    %v4038 = vpack.c.bf16 %v4027, %v4026
    %v4039 = vpack.c.bf16 %v4029, %v4028
    %v4040 = vpack.c.bf16 %v4031, %v4030
    %v4041 = vpack.c.bf16 %v4033, %v4032
    %v4043 = vsel %vm1526, %v4034, 0
    %4045 = vmatprep.subr.bf16.mxu0 0
    %4046 = vmatpush1.bf16.msra.mxu0 %v3399
    %4047 = vmatprep.subr.bf16.mxu0 0
    %4048 = vmatpush1.bf16.msra.mxu0 0
    %4049 = vmatprep.subr.bf16.mxu0 0
    %4050 = vmatpush1.bf16.msra.mxu0 0
    %4051 = vmatprep.subr.bf16.mxu0 0
    %4052 = vmatpush1.bf16.msra.mxu0 0
    %4053 = vmatprep.subr.bf16.mxu0 0
    %4054 = vmatpush1.bf16.msra.mxu0 0
    %4055 = vmatprep.subr.bf16.mxu0 0
    %4056 = vmatpush1.bf16.msra.mxu0 0
    %4057 = vmatprep.subr.bf16.mxu0 0
    %4058 = vmatpush1.bf16.msra.mxu0 0
    %4059 = vmatprep.subr.bf16.mxu0 0
    %4060 = vmatpush1.bf16.msra.mxu0 0
    %4061 = vmatprep.subr.bf16.mxu0 0
    %4062 = vmatpush1.bf16.msra.mxu0 0
    %4063 = vmatprep.subr.bf16.mxu0 0
    %4064 = vmatpush1.bf16.msra.mxu0 0
    %4065 = vmatprep.subr.bf16.mxu0 0
    %4066 = vmatpush1.bf16.msra.mxu0 0
    %4067 = vmatprep.subr.bf16.mxu0 0
    %4068 = vmatpush1.bf16.msra.mxu0 0
    %4069 = vmatprep.subr.bf16.mxu0 0
    %4070 = vmatpush1.bf16.msra.mxu0 0
    %4071 = vmatprep.subr.bf16.mxu0 0
    %4072 = vmatpush1.bf16.msra.mxu0 0
    %4073 = vmatprep.subr.bf16.mxu0 0
    %4074 = vmatpush1.bf16.msra.mxu0 0
    %4075 = vmatprep.subr.bf16.mxu0 0
    %4076 = vmatpush1.bf16.msra.mxu0 0
    %4077 = vmatprep.mubr.bf16.mxu0 0
    %4078 = vmatmul.mubr.bf16.gmra.mrb[0].mxu0 %v4043
    %v4079 = vpop.f32.mrb[0].mxu0
    %v4080 = vadd.f32 0.0, %v4079
    %v4081 = vpop.f32.mrb[0].mxu0
    %v4082 = vpop.f32.mrb[0].mxu0
    %v4083 = vadd.f32 0.0, %v4082
    %v4084 = vpop.f32.mrb[0].mxu0
    %4085 = vdwg.mxu0
    %v4087 = vsel %vm1526, %v4035, 0
    %4089 = vmatprep.subr.bf16.mxu0 0
    %4090 = vmatpush1.bf16.msra.mxu0 %v3400
    %4091 = vmatprep.subr.bf16.mxu0 0
    %4092 = vmatpush1.bf16.msra.mxu0 0
    %4093 = vmatprep.subr.bf16.mxu0 0
    %4094 = vmatpush1.bf16.msra.mxu0 0
    %4095 = vmatprep.subr.bf16.mxu0 0
    %4096 = vmatpush1.bf16.msra.mxu0 0
    %4097 = vmatprep.subr.bf16.mxu0 0
    %4098 = vmatpush1.bf16.msra.mxu0 0
    %4099 = vmatprep.subr.bf16.mxu0 0
    %4100 = vmatpush1.bf16.msra.mxu0 0
    %4101 = vmatprep.subr.bf16.mxu0 0
    %4102 = vmatpush1.bf16.msra.mxu0 0
    %4103 = vmatprep.subr.bf16.mxu0 0
    %4104 = vmatpush1.bf16.msra.mxu0 0
    %4105 = vmatprep.subr.bf16.mxu0 0
    %4106 = vmatpush1.bf16.msra.mxu0 0
    %4107 = vmatprep.subr.bf16.mxu0 0
    %4108 = vmatpush1.bf16.msra.mxu0 0
    %4109 = vmatprep.subr.bf16.mxu0 0
    %4110 = vmatpush1.bf16.msra.mxu0 0
    %4111 = vmatprep.subr.bf16.mxu0 0
    %4112 = vmatpush1.bf16.msra.mxu0 0
    %4113 = vmatprep.subr.bf16.mxu0 0
    %4114 = vmatpush1.bf16.msra.mxu0 0
    %4115 = vmatprep.subr.bf16.mxu0 0
    %4116 = vmatpush1.bf16.msra.mxu0 0
    %4117 = vmatprep.subr.bf16.mxu0 0
    %4118 = vmatpush1.bf16.msra.mxu0 0
    %4119 = vmatprep.subr.bf16.mxu0 0
    %4120 = vmatpush1.bf16.msra.mxu0 0
    %4121 = vmatprep.mubr.bf16.mxu0 0
    %4122 = vmatmul.mubr.bf16.gmra.mrb[0].mxu0 %v4087
    %v4123 = vpop.f32.mrb[0].mxu0
    %v4124 = vadd.f32 0.0, %v4123
    %v4125 = vpop.f32.mrb[0].mxu0
    %v4126 = vpop.f32.mrb[0].mxu0
    %v4127 = vadd.f32 0.0, %v4126
    %v4128 = vpop.f32.mrb[0].mxu0
    %4129 = vdwg.mxu0
    %v4131 = vsel %vm1526, %v4036, 0
    %4133 = vmatprep.subr.bf16.mxu0 0
    %4134 = vmatpush1.bf16.msra.mxu0 %v3401
    %4135 = vmatprep.subr.bf16.mxu0 0
    %4136 = vmatpush1.bf16.msra.mxu0 0
    %4137 = vmatprep.subr.bf16.mxu0 0
    %4138 = vmatpush1.bf16.msra.mxu0 0
    %4139 = vmatprep.subr.bf16.mxu0 0
    %4140 = vmatpush1.bf16.msra.mxu0 0
    %4141 = vmatprep.subr.bf16.mxu0 0
    %4142 = vmatpush1.bf16.msra.mxu0 0
    %4143 = vmatprep.subr.bf16.mxu0 0
    %4144 = vmatpush1.bf16.msra.mxu0 0
    %4145 = vmatprep.subr.bf16.mxu0 0
    %4146 = vmatpush1.bf16.msra.mxu0 0
    %4147 = vmatprep.subr.bf16.mxu0 0
    %4148 = vmatpush1.bf16.msra.mxu0 0
    %4149 = vmatprep.subr.bf16.mxu0 0
    %4150 = vmatpush1.bf16.msra.mxu0 0
    %4151 = vmatprep.subr.bf16.mxu0 0
    %4152 = vmatpush1.bf16.msra.mxu0 0
    %4153 = vmatprep.subr.bf16.mxu0 0
    %4154 = vmatpush1.bf16.msra.mxu0 0
    %4155 = vmatprep.subr.bf16.mxu0 0
    %4156 = vmatpush1.bf16.msra.mxu0 0
    %4157 = vmatprep.subr.bf16.mxu0 0
    %4158 = vmatpush1.bf16.msra.mxu0 0
    %4159 = vmatprep.subr.bf16.mxu0 0
    %4160 = vmatpush1.bf16.msra.mxu0 0
    %4161 = vmatprep.subr.bf16.mxu0 0
    %4162 = vmatpush1.bf16.msra.mxu0 0
    %4163 = vmatprep.subr.bf16.mxu0 0
    %4164 = vmatpush1.bf16.msra.mxu0 0
    %4165 = vmatprep.mubr.bf16.mxu0 0
    %4166 = vmatmul.mubr.bf16.gmra.mrb[0].mxu0 %v4131
    %v4167 = vpop.f32.mrb[0].mxu0
    %v4168 = vadd.f32 0.0, %v4167
    %v4169 = vpop.f32.mrb[0].mxu0
    %v4170 = vpop.f32.mrb[0].mxu0
    %v4171 = vadd.f32 0.0, %v4170
    %v4172 = vpop.f32.mrb[0].mxu0
    %4173 = vdwg.mxu0
    %v4175 = vsel %vm1526, %v4037, 0
    %4177 = vmatprep.subr.bf16.mxu0 0
    %4178 = vmatpush1.bf16.msra.mxu0 %v3402
    %4179 = vmatprep.subr.bf16.mxu0 0
    %4180 = vmatpush1.bf16.msra.mxu0 0
    %4181 = vmatprep.subr.bf16.mxu0 0
    %4182 = vmatpush1.bf16.msra.mxu0 0
    %4183 = vmatprep.subr.bf16.mxu0 0
    %4184 = vmatpush1.bf16.msra.mxu0 0
    %4185 = vmatprep.subr.bf16.mxu0 0
    %4186 = vmatpush1.bf16.msra.mxu0 0
    %4187 = vmatprep.subr.bf16.mxu0 0
    %4188 = vmatpush1.bf16.msra.mxu0 0
    %4189 = vmatprep.subr.bf16.mxu0 0
    %4190 = vmatpush1.bf16.msra.mxu0 0
    %4191 = vmatprep.subr.bf16.mxu0 0
    %4192 = vmatpush1.bf16.msra.mxu0 0
    %4193 = vmatprep.subr.bf16.mxu0 0
    %4194 = vmatpush1.bf16.msra.mxu0 0
    %4195 = vmatprep.subr.bf16.mxu0 0
    %4196 = vmatpush1.bf16.msra.mxu0 0
    %4197 = vmatprep.subr.bf16.mxu0 0
    %4198 = vmatpush1.bf16.msra.mxu0 0
    %4199 = vmatprep.subr.bf16.mxu0 0
    %4200 = vmatpush1.bf16.msra.mxu0 0
    %4201 = vmatprep.subr.bf16.mxu0 0
    %4202 = vmatpush1.bf16.msra.mxu0 0
    %4203 = vmatprep.subr.bf16.mxu0 0
    %4204 = vmatpush1.bf16.msra.mxu0 0
    %4205 = vmatprep.subr.bf16.mxu0 0
    %4206 = vmatpush1.bf16.msra.mxu0 0
    %4207 = vmatprep.subr.bf16.mxu0 0
    %4208 = vmatpush1.bf16.msra.mxu0 0
    %4209 = vmatprep.mubr.bf16.mxu0 0
    %4210 = vmatmul.mubr.bf16.gmra.mrb[0].mxu0 %v4175
    %v4211 = vpop.f32.mrb[0].mxu0
    %v4212 = vadd.f32 0.0, %v4211
    %v4213 = vpop.f32.mrb[0].mxu0
    %v4214 = vpop.f32.mrb[0].mxu0
    %v4215 = vadd.f32 0.0, %v4214
    %v4216 = vpop.f32.mrb[0].mxu0
    %4217 = vdwg.mxu0
    %v4219 = vsel %vm1526, %v4038, 0
    %4221 = vmatprep.subr.bf16.mxu0 0
    %4222 = vmatpush1.bf16.msra.mxu0 %v3403
    %4223 = vmatprep.subr.bf16.mxu0 0
    %4224 = vmatpush1.bf16.msra.mxu0 0
    %4225 = vmatprep.subr.bf16.mxu0 0
    %4226 = vmatpush1.bf16.msra.mxu0 0
    %4227 = vmatprep.subr.bf16.mxu0 0
    %4228 = vmatpush1.bf16.msra.mxu0 0
    %4229 = vmatprep.subr.bf16.mxu0 0
    %4230 = vmatpush1.bf16.msra.mxu0 0
    %4231 = vmatprep.subr.bf16.mxu0 0
    %4232 = vmatpush1.bf16.msra.mxu0 0
    %4233 = vmatprep.subr.bf16.mxu0 0
    %4234 = vmatpush1.bf16.msra.mxu0 0
    %4235 = vmatprep.subr.bf16.mxu0 0
    %4236 = vmatpush1.bf16.msra.mxu0 0
    %4237 = vmatprep.subr.bf16.mxu0 0
    %4238 = vmatpush1.bf16.msra.mxu0 0
    %4239 = vmatprep.subr.bf16.mxu0 0
    %4240 = vmatpush1.bf16.msra.mxu0 0
    %4241 = vmatprep.subr.bf16.mxu0 0
    %4242 = vmatpush1.bf16.msra.mxu0 0
    %4243 = vmatprep.subr.bf16.mxu0 0
    %4244 = vmatpush1.bf16.msra.mxu0 0
    %4245 = vmatprep.subr.bf16.mxu0 0
    %4246 = vmatpush1.bf16.msra.mxu0 0
    %4247 = vmatprep.subr.bf16.mxu0 0
    %4248 = vmatpush1.bf16.msra.mxu0 0
    %4249 = vmatprep.subr.bf16.mxu0 0
    %4250 = vmatpush1.bf16.msra.mxu0 0
    %4251 = vmatprep.subr.bf16.mxu0 0
    %4252 = vmatpush1.bf16.msra.mxu0 0
    %4253 = vmatprep.mubr.bf16.mxu0 0
    %4254 = vmatmul.mubr.bf16.gmra.mrb[0].mxu0 %v4219
    %v4255 = vpop.f32.mrb[0].mxu0
    %v4256 = vadd.f32 0.0, %v4255
    %v4257 = vpop.f32.mrb[0].mxu0
    %v4258 = vpop.f32.mrb[0].mxu0
    %v4259 = vadd.f32 0.0, %v4258
    %v4260 = vpop.f32.mrb[0].mxu0
    %4261 = vdwg.mxu0
    %v4263 = vsel %vm1526, %v4039, 0
    %4265 = vmatprep.subr.bf16.mxu0 0
    %4266 = vmatpush1.bf16.msra.mxu0 %v3404
    %4267 = vmatprep.subr.bf16.mxu0 0
    %4268 = vmatpush1.bf16.msra.mxu0 0
    %4269 = vmatprep.subr.bf16.mxu0 0
    %4270 = vmatpush1.bf16.msra.mxu0 0
    %4271 = vmatprep.subr.bf16.mxu0 0
    %4272 = vmatpush1.bf16.msra.mxu0 0
    %4273 = vmatprep.subr.bf16.mxu0 0
    %4274 = vmatpush1.bf16.msra.mxu0 0
    %4275 = vmatprep.subr.bf16.mxu0 0
    %4276 = vmatpush1.bf16.msra.mxu0 0
    %4277 = vmatprep.subr.bf16.mxu0 0
    %4278 = vmatpush1.bf16.msra.mxu0 0
    %4279 = vmatprep.subr.bf16.mxu0 0
    %4280 = vmatpush1.bf16.msra.mxu0 0
    %4281 = vmatprep.subr.bf16.mxu0 0
    %4282 = vmatpush1.bf16.msra.mxu0 0
    %4283 = vmatprep.subr.bf16.mxu0 0
    %4284 = vmatpush1.bf16.msra.mxu0 0
    %4285 = vmatprep.subr.bf16.mxu0 0
    %4286 = vmatpush1.bf16.msra.mxu0 0
    %4287 = vmatprep.subr.bf16.mxu0 0
    %4288 = vmatpush1.bf16.msra.mxu0 0
    %4289 = vmatprep.subr.bf16.mxu0 0
    %4290 = vmatpush1.bf16.msra.mxu0 0
    %4291 = vmatprep.subr.bf16.mxu0 0
    %4292 = vmatpush1.bf16.msra.mxu0 0
    %4293 = vmatprep.subr.bf16.mxu0 0
    %4294 = vmatpush1.bf16.msra.mxu0 0
    %4295 = vmatprep.subr.bf16.mxu0 0
    %4296 = vmatpush1.bf16.msra.mxu0 0
    %4297 = vmatprep.mubr.bf16.mxu0 0
    %4298 = vmatmul.mubr.bf16.gmra.mrb[0].mxu0 %v4263
    %v4299 = vpop.f32.mrb[0].mxu0
    %v4300 = vadd.f32 0.0, %v4299
    %v4301 = vpop.f32.mrb[0].mxu0
    %v4302 = vpop.f32.mrb[0].mxu0
    %v4303 = vadd.f32 0.0, %v4302
    %v4304 = vpop.f32.mrb[0].mxu0
    %4305 = vdwg.mxu0
    %v4307 = vsel %vm1526, %v4040, 0
    %4309 = vmatprep.subr.bf16.mxu0 0
    %4310 = vmatpush1.bf16.msra.mxu0 %v3405
    %4311 = vmatprep.subr.bf16.mxu0 0
    %4312 = vmatpush1.bf16.msra.mxu0 0
    %4313 = vmatprep.subr.bf16.mxu0 0
    %4314 = vmatpush1.bf16.msra.mxu0 0
    %4315 = vmatprep.subr.bf16.mxu0 0
    %4316 = vmatpush1.bf16.msra.mxu0 0
    %4317 = vmatprep.subr.bf16.mxu0 0
    %4318 = vmatpush1.bf16.msra.mxu0 0
    %4319 = vmatprep.subr.bf16.mxu0 0
    %4320 = vmatpush1.bf16.msra.mxu0 0
    %4321 = vmatprep.subr.bf16.mxu0 0
    %4322 = vmatpush1.bf16.msra.mxu0 0
    %4323 = vmatprep.subr.bf16.mxu0 0
    %4324 = vmatpush1.bf16.msra.mxu0 0
    %4325 = vmatprep.subr.bf16.mxu0 0
    %4326 = vmatpush1.bf16.msra.mxu0 0
    %4327 = vmatprep.subr.bf16.mxu0 0
    %4328 = vmatpush1.bf16.msra.mxu0 0
    %4329 = vmatprep.subr.bf16.mxu0 0
    %4330 = vmatpush1.bf16.msra.mxu0 0
    %4331 = vmatprep.subr.bf16.mxu0 0
    %4332 = vmatpush1.bf16.msra.mxu0 0
    %4333 = vmatprep.subr.bf16.mxu0 0
    %4334 = vmatpush1.bf16.msra.mxu0 0
    %4335 = vmatprep.subr.bf16.mxu0 0
    %4336 = vmatpush1.bf16.msra.mxu0 0
    %4337 = vmatprep.subr.bf16.mxu0 0
    %4338 = vmatpush1.bf16.msra.mxu0 0
    %4339 = vmatprep.subr.bf16.mxu0 0
    %4340 = vmatpush1.bf16.msra.mxu0 0
    %4341 = vmatprep.mubr.bf16.mxu0 0
    %4342 = vmatmul.mubr.bf16.gmra.mrb[0].mxu0 %v4307
    %v4343 = vpop.f32.mrb[0].mxu0
    %v4344 = vadd.f32 0.0, %v4343
    %v4345 = vpop.f32.mrb[0].mxu0
    %v4346 = vpop.f32.mrb[0].mxu0
    %v4347 = vadd.f32 0.0, %v4346
    %v4348 = vpop.f32.mrb[0].mxu0
    %4349 = vdwg.mxu0
    %v4351 = vsel %vm1526, %v4041, 0
    %4353 = vmatprep.subr.bf16.mxu0 0
    %4354 = vmatpush1.bf16.msra.mxu0 %v3406
    %4355 = vmatprep.subr.bf16.mxu0 0
    %4356 = vmatpush1.bf16.msra.mxu0 0
    %4357 = vmatprep.subr.bf16.mxu0 0
    %4358 = vmatpush1.bf16.msra.mxu0 0
    %4359 = vmatprep.subr.bf16.mxu0 0
    %4360 = vmatpush1.bf16.msra.mxu0 0
    %4361 = vmatprep.subr.bf16.mxu0 0
    %4362 = vmatpush1.bf16.msra.mxu0 0
    %4363 = vmatprep.subr.bf16.mxu0 0
    %4364 = vmatpush1.bf16.msra.mxu0 0
    %4365 = vmatprep.subr.bf16.mxu0 0
    %4366 = vmatpush1.bf16.msra.mxu0 0
    %4367 = vmatprep.subr.bf16.mxu0 0
    %4368 = vmatpush1.bf16.msra.mxu0 0
    %4369 = vmatprep.subr.bf16.mxu0 0
    %4370 = vmatpush1.bf16.msra.mxu0 0
    %4371 = vmatprep.subr.bf16.mxu0 0
    %4372 = vmatpush1.bf16.msra.mxu0 0
    %4373 = vmatprep.subr.bf16.mxu0 0
    %4374 = vmatpush1.bf16.msra.mxu0 0
    %4375 = vmatprep.subr.bf16.mxu0 0
    %4376 = vmatpush1.bf16.msra.mxu0 0
    %4377 = vmatprep.subr.bf16.mxu0 0
    %4378 = vmatpush1.bf16.msra.mxu0 0
    %4379 = vmatprep.subr.bf16.mxu0 0
    %4380 = vmatpush1.bf16.msra.mxu0 0
    %4381 = vmatprep.subr.bf16.mxu0 0
    %4382 = vmatpush1.bf16.msra.mxu0 0
    %4383 = vmatprep.subr.bf16.mxu0 0
    %4384 = vmatpush1.bf16.msra.mxu0 0
    %4385 = vmatprep.mubr.bf16.mxu0 0
    %4386 = vmatmul.mubr.bf16.gmra.mrb[0].mxu0 %v4351
    %v4387 = vpop.f32.mrb[0].mxu0
    %v4388 = vadd.f32 0.0, %v4387
    %v4389 = vpop.f32.mrb[0].mxu0
    %v4390 = vpop.f32.mrb[0].mxu0
    %v4391 = vadd.f32 0.0, %v4390
    %v4392 = vpop.f32.mrb[0].mxu0
    %4393 = vdwg.mxu0
    %v4394 = vcombine.low %v4080, %v4168
    %v4395 = vcombine.high %v4080, %v4168
    %v4397 = vunpack.c.l.s4 1983009808
    %v4398 = vunpack.c.0.s8 %v4397
    %v4399 = vlaneseq
    %v4400 = vshrl.u32 %v4399, 7
    %v4401 = vsub.s32 %v4398, %v4400
    %v4402 = vrot.slane %v4394, %v4401
    %v4404 = vunpack.c.l.s4 1983009808
    %v4405 = vunpack.c.0.s8 %v4404
    %v4406 = vlaneseq
    %v4407 = vshrl.u32 %v4406, 7
    %v4408 = vsub.s32 %v4405, %v4407
    %v4409 = vrot.slane %v4395, %v4408
    %v4410 = vcombine.low %v4124, %v4212
    %v4411 = vcombine.high %v4124, %v4212
    %v4413 = vunpack.c.l.s4 1983009808
    %v4414 = vunpack.c.0.s8 %v4413
    %v4415 = vlaneseq
    %v4416 = vshrl.u32 %v4415, 7
    %v4417 = vsub.s32 %v4414, %v4416
    %v4418 = vrot.slane %v4410, %v4417
    %v4420 = vunpack.c.l.s4 1983009808
    %v4421 = vunpack.c.0.s8 %v4420
    %v4422 = vlaneseq
    %v4423 = vshrl.u32 %v4422, 7
    %v4424 = vsub.s32 %v4421, %v4423
    %v4425 = vrot.slane %v4411, %v4424
    %v4426 = vcombine.low %v4256, %v4344
    %v4427 = vcombine.high %v4256, %v4344
    %v4429 = vunpack.c.l.s4 1983009808
    %v4430 = vunpack.c.0.s8 %v4429
    %v4431 = vlaneseq
    %v4432 = vshrl.u32 %v4431, 7
    %v4433 = vsub.s32 %v4430, %v4432
    %v4434 = vrot.slane %v4426, %v4433
    %v4436 = vunpack.c.l.s4 1983009808
    %v4437 = vunpack.c.0.s8 %v4436
    %v4438 = vlaneseq
    %v4439 = vshrl.u32 %v4438, 7
    %v4440 = vsub.s32 %v4437, %v4439
    %v4441 = vrot.slane %v4427, %v4440
    %v4442 = vcombine.low %v4300, %v4388
    %v4443 = vcombine.high %v4300, %v4388
    %v4445 = vunpack.c.l.s4 1983009808
    %v4446 = vunpack.c.0.s8 %v4445
    %v4447 = vlaneseq
    %v4448 = vshrl.u32 %v4447, 7
    %v4449 = vsub.s32 %v4446, %v4448
    %v4450 = vrot.slane %v4442, %v4449
    %v4452 = vunpack.c.l.s4 1983009808
    %v4453 = vunpack.c.0.s8 %v4452
    %v4454 = vlaneseq
    %v4455 = vshrl.u32 %v4454, 7
    %v4456 = vsub.s32 %v4453, %v4455
    %v4457 = vrot.slane %v4443, %v4456
    %v4458 = vcombine.low %v4402, %v4418
    %v4459 = vcombine.high %v4402, %v4418
    %v4461 = vunpack.c.l.s4 1934713408
    %v4462 = vunpack.c.0.s8 %v4461
    %v4463 = vlaneseq
    %v4464 = vshrl.u32 %v4463, 7
    %v4465 = vsub.s32 %v4462, %v4464
    %v4466 = vrot.slane %v4458, %v4465
    %v4468 = vunpack.c.l.s4 1934713408
    %v4469 = vunpack.c.0.s8 %v4468
    %v4470 = vlaneseq
    %v4471 = vshrl.u32 %v4470, 7
    %v4472 = vsub.s32 %v4469, %v4471
    %v4473 = vrot.slane %v4459, %v4472
    %v4474 = vcombine.low %v4409, %v4425
    %v4475 = vcombine.high %v4409, %v4425
    %v4477 = vunpack.c.l.s4 1934713408
    %v4478 = vunpack.c.0.s8 %v4477
    %v4479 = vlaneseq
    %v4480 = vshrl.u32 %v4479, 7
    %v4481 = vsub.s32 %v4478, %v4480
    %v4482 = vrot.slane %v4474, %v4481
    %v4484 = vunpack.c.l.s4 1934713408
    %v4485 = vunpack.c.0.s8 %v4484
    %v4486 = vlaneseq
    %v4487 = vshrl.u32 %v4486, 7
    %v4488 = vsub.s32 %v4485, %v4487
    %v4489 = vrot.slane %v4475, %v4488
    %v4490 = vcombine.low %v4434, %v4450
    %v4491 = vcombine.high %v4434, %v4450
    %v4493 = vunpack.c.l.s4 1934713408
    %v4494 = vunpack.c.0.s8 %v4493
    %v4495 = vlaneseq
    %v4496 = vshrl.u32 %v4495, 7
    %v4497 = vsub.s32 %v4494, %v4496
    %v4498 = vrot.slane %v4490, %v4497
    %v4500 = vunpack.c.l.s4 1934713408
    %v4501 = vunpack.c.0.s8 %v4500
    %v4502 = vlaneseq
    %v4503 = vshrl.u32 %v4502, 7
    %v4504 = vsub.s32 %v4501, %v4503
    %v4505 = vrot.slane %v4491, %v4504
    %v4506 = vcombine.low %v4441, %v4457
    %v4507 = vcombine.high %v4441, %v4457
    %v4509 = vunpack.c.l.s4 1934713408
    %v4510 = vunpack.c.0.s8 %v4509
    %v4511 = vlaneseq
    %v4512 = vshrl.u32 %v4511, 7
    %v4513 = vsub.s32 %v4510, %v4512
    %v4514 = vrot.slane %v4506, %v4513
    %v4516 = vunpack.c.l.s4 1934713408
    %v4517 = vunpack.c.0.s8 %v4516
    %v4518 = vlaneseq
    %v4519 = vshrl.u32 %v4518, 7
    %v4520 = vsub.s32 %v4517, %v4519
    %v4521 = vrot.slane %v4507, %v4520
    %v4522 = vcombine.low %v4466, %v4498
    %v4523 = vcombine.high %v4466, %v4498
    %v4524 = vcombine.low %v4473, %v4505
    %v4525 = vcombine.high %v4473, %v4505
    %v4526 = vcombine.low %v4482, %v4514
    %v4527 = vcombine.high %v4482, %v4514
    %v4528 = vcombine.low %v4489, %v4521
    %v4529 = vcombine.high %v4489, %v4521
    %v4530 = vcombine.low %v4083, %v4171
    %v4531 = vcombine.high %v4083, %v4171
    %v4533 = vunpack.c.l.s4 1983009808
    %v4534 = vunpack.c.0.s8 %v4533
    %v4535 = vlaneseq
    %v4536 = vshrl.u32 %v4535, 7
    %v4537 = vsub.s32 %v4534, %v4536
    %v4538 = vrot.slane %v4530, %v4537
    %v4540 = vunpack.c.l.s4 1983009808
    %v4541 = vunpack.c.0.s8 %v4540
    %v4542 = vlaneseq
    %v4543 = vshrl.u32 %v4542, 7
    %v4544 = vsub.s32 %v4541, %v4543
    %v4545 = vrot.slane %v4531, %v4544
    %v4546 = vcombine.low %v4127, %v4215
    %v4547 = vcombine.high %v4127, %v4215
    %v4549 = vunpack.c.l.s4 1983009808
    %v4550 = vunpack.c.0.s8 %v4549
    %v4551 = vlaneseq
    %v4552 = vshrl.u32 %v4551, 7
    %v4553 = vsub.s32 %v4550, %v4552
    %v4554 = vrot.slane %v4546, %v4553
    %v4556 = vunpack.c.l.s4 1983009808
    %v4557 = vunpack.c.0.s8 %v4556
    %v4558 = vlaneseq
    %v4559 = vshrl.u32 %v4558, 7
    %v4560 = vsub.s32 %v4557, %v4559
    %v4561 = vrot.slane %v4547, %v4560
    %v4562 = vcombine.low %v4259, %v4347
    %v4563 = vcombine.high %v4259, %v4347
    %v4565 = vunpack.c.l.s4 1983009808
    %v4566 = vunpack.c.0.s8 %v4565
    %v4567 = vlaneseq
    %v4568 = vshrl.u32 %v4567, 7
    %v4569 = vsub.s32 %v4566, %v4568
    %v4570 = vrot.slane %v4562, %v4569
    %v4572 = vunpack.c.l.s4 1983009808
    %v4573 = vunpack.c.0.s8 %v4572
    %v4574 = vlaneseq
    %v4575 = vshrl.u32 %v4574, 7
    %v4576 = vsub.s32 %v4573, %v4575
    %v4577 = vrot.slane %v4563, %v4576
    %v4578 = vcombine.low %v4303, %v4391
    %v4579 = vcombine.high %v4303, %v4391
    %v4581 = vunpack.c.l.s4 1983009808
    %v4582 = vunpack.c.0.s8 %v4581
    %v4583 = vlaneseq
    %v4584 = vshrl.u32 %v4583, 7
    %v4585 = vsub.s32 %v4582, %v4584
    %v4586 = vrot.slane %v4578, %v4585
    %v4588 = vunpack.c.l.s4 1983009808
    %v4589 = vunpack.c.0.s8 %v4588
    %v4590 = vlaneseq
    %v4591 = vshrl.u32 %v4590, 7
    %v4592 = vsub.s32 %v4589, %v4591
    %v4593 = vrot.slane %v4579, %v4592
    %v4594 = vcombine.low %v4538, %v4554
    %v4595 = vcombine.high %v4538, %v4554
    %v4597 = vunpack.c.l.s4 1934713408
    %v4598 = vunpack.c.0.s8 %v4597
    %v4599 = vlaneseq
    %v4600 = vshrl.u32 %v4599, 7
    %v4601 = vsub.s32 %v4598, %v4600
    %v4602 = vrot.slane %v4594, %v4601
    %v4604 = vunpack.c.l.s4 1934713408
    %v4605 = vunpack.c.0.s8 %v4604
    %v4606 = vlaneseq
    %v4607 = vshrl.u32 %v4606, 7
    %v4608 = vsub.s32 %v4605, %v4607
    %v4609 = vrot.slane %v4595, %v4608
    %v4610 = vcombine.low %v4545, %v4561
    %v4611 = vcombine.high %v4545, %v4561
    %v4613 = vunpack.c.l.s4 1934713408
    %v4614 = vunpack.c.0.s8 %v4613
    %v4615 = vlaneseq
    %v4616 = vshrl.u32 %v4615, 7
    %v4617 = vsub.s32 %v4614, %v4616
    %v4618 = vrot.slane %v4610, %v4617
    %v4620 = vunpack.c.l.s4 1934713408
    %v4621 = vunpack.c.0.s8 %v4620
    %v4622 = vlaneseq
    %v4623 = vshrl.u32 %v4622, 7
    %v4624 = vsub.s32 %v4621, %v4623
    %v4625 = vrot.slane %v4611, %v4624
    %v4626 = vcombine.low %v4570, %v4586
    %v4627 = vcombine.high %v4570, %v4586
    %v4629 = vunpack.c.l.s4 1934713408
    %v4630 = vunpack.c.0.s8 %v4629
    %v4631 = vlaneseq
    %v4632 = vshrl.u32 %v4631, 7
    %v4633 = vsub.s32 %v4630, %v4632
    %v4634 = vrot.slane %v4626, %v4633
    %v4636 = vunpack.c.l.s4 1934713408
    %v4637 = vunpack.c.0.s8 %v4636
    %v4638 = vlaneseq
    %v4639 = vshrl.u32 %v4638, 7
    %v4640 = vsub.s32 %v4637, %v4639
    %v4641 = vrot.slane %v4627, %v4640
    %v4642 = vcombine.low %v4577, %v4593
    %v4643 = vcombine.high %v4577, %v4593
    %v4645 = vunpack.c.l.s4 1934713408
    %v4646 = vunpack.c.0.s8 %v4645
    %v4647 = vlaneseq
    %v4648 = vshrl.u32 %v4647, 7
    %v4649 = vsub.s32 %v4646, %v4648
    %v4650 = vrot.slane %v4642, %v4649
    %v4652 = vunpack.c.l.s4 1934713408
    %v4653 = vunpack.c.0.s8 %v4652
    %v4654 = vlaneseq
    %v4655 = vshrl.u32 %v4654, 7
    %v4656 = vsub.s32 %v4653, %v4655
    %v4657 = vrot.slane %v4643, %v4656
    %v4658 = vcombine.low %v4602, %v4634
    %v4659 = vcombine.high %v4602, %v4634
    %v4660 = vcombine.low %v4609, %v4641
    %v4661 = vcombine.high %v4609, %v4641
    %v4662 = vcombine.low %v4618, %v4650
    %v4663 = vcombine.high %v4618, %v4650
    %v4664 = vcombine.low %v4625, %v4657
    %v4665 = vcombine.high %v4625, %v4657
    %v4666 = vcombine.low %v4522, %v4524
    %v4667 = vcombine.high %v4522, %v4524
    %v4669 = vunpack.c.l.s4 1983009808
    %v4670 = vunpack.c.0.s8 %v4669
    %v4671 = vlaneseq
    %v4672 = vshrl.u32 %v4671, 7
    %v4673 = vsub.s32 %v4670, %v4672
    %v4674 = vrot.slane %v4666, %v4673
    %v4676 = vunpack.c.l.s4 1983009808
    %v4677 = vunpack.c.0.s8 %v4676
    %v4678 = vlaneseq
    %v4679 = vshrl.u32 %v4678, 7
    %v4680 = vsub.s32 %v4677, %v4679
    %v4681 = vrot.slane %v4667, %v4680
    %v4682 = vcombine.low %v4523, %v4525
    %v4683 = vcombine.high %v4523, %v4525
    %v4685 = vunpack.c.l.s4 1983009808
    %v4686 = vunpack.c.0.s8 %v4685
    %v4687 = vlaneseq
    %v4688 = vshrl.u32 %v4687, 7
    %v4689 = vsub.s32 %v4686, %v4688
    %v4690 = vrot.slane %v4682, %v4689
    %v4692 = vunpack.c.l.s4 1983009808
    %v4693 = vunpack.c.0.s8 %v4692
    %v4694 = vlaneseq
    %v4695 = vshrl.u32 %v4694, 7
    %v4696 = vsub.s32 %v4693, %v4695
    %v4697 = vrot.slane %v4683, %v4696
    %v4698 = vcombine.low %v4526, %v4528
    %v4699 = vcombine.high %v4526, %v4528
    %v4701 = vunpack.c.l.s4 1983009808
    %v4702 = vunpack.c.0.s8 %v4701
    %v4703 = vlaneseq
    %v4704 = vshrl.u32 %v4703, 7
    %v4705 = vsub.s32 %v4702, %v4704
    %v4706 = vrot.slane %v4698, %v4705
    %v4708 = vunpack.c.l.s4 1983009808
    %v4709 = vunpack.c.0.s8 %v4708
    %v4710 = vlaneseq
    %v4711 = vshrl.u32 %v4710, 7
    %v4712 = vsub.s32 %v4709, %v4711
    %v4713 = vrot.slane %v4699, %v4712
    %v4714 = vcombine.low %v4527, %v4529
    %v4715 = vcombine.high %v4527, %v4529
    %v4717 = vunpack.c.l.s4 1983009808
    %v4718 = vunpack.c.0.s8 %v4717
    %v4719 = vlaneseq
    %v4720 = vshrl.u32 %v4719, 7
    %v4721 = vsub.s32 %v4718, %v4720
    %v4722 = vrot.slane %v4714, %v4721
    %v4724 = vunpack.c.l.s4 1983009808
    %v4725 = vunpack.c.0.s8 %v4724
    %v4726 = vlaneseq
    %v4727 = vshrl.u32 %v4726, 7
    %v4728 = vsub.s32 %v4725, %v4727
    %v4729 = vrot.slane %v4715, %v4728
    %v4730 = vcombine.low %v4674, %v4690
    %v4731 = vcombine.high %v4674, %v4690
    %v4733 = vunpack.c.l.s4 1934713408
    %v4734 = vunpack.c.0.s8 %v4733
    %v4735 = vlaneseq
    %v4736 = vshrl.u32 %v4735, 7
    %v4737 = vsub.s32 %v4734, %v4736
    %v4738 = vrot.slane %v4730, %v4737
    %v4740 = vunpack.c.l.s4 1934713408
    %v4741 = vunpack.c.0.s8 %v4740
    %v4742 = vlaneseq
    %v4743 = vshrl.u32 %v4742, 7
    %v4744 = vsub.s32 %v4741, %v4743
    %v4745 = vrot.slane %v4731, %v4744
    %v4746 = vcombine.low %v4681, %v4697
    %v4747 = vcombine.high %v4681, %v4697
    %v4749 = vunpack.c.l.s4 1934713408
    %v4750 = vunpack.c.0.s8 %v4749
    %v4751 = vlaneseq
    %v4752 = vshrl.u32 %v4751, 7
    %v4753 = vsub.s32 %v4750, %v4752
    %v4754 = vrot.slane %v4746, %v4753
    %v4756 = vunpack.c.l.s4 1934713408
    %v4757 = vunpack.c.0.s8 %v4756
    %v4758 = vlaneseq
    %v4759 = vshrl.u32 %v4758, 7
    %v4760 = vsub.s32 %v4757, %v4759
    %v4761 = vrot.slane %v4747, %v4760
    %v4762 = vcombine.low %v4706, %v4722
    %v4763 = vcombine.high %v4706, %v4722
    %v4765 = vunpack.c.l.s4 1934713408
    %v4766 = vunpack.c.0.s8 %v4765
    %v4767 = vlaneseq
    %v4768 = vshrl.u32 %v4767, 7
    %v4769 = vsub.s32 %v4766, %v4768
    %v4770 = vrot.slane %v4762, %v4769
    %v4772 = vunpack.c.l.s4 1934713408
    %v4773 = vunpack.c.0.s8 %v4772
    %v4774 = vlaneseq
    %v4775 = vshrl.u32 %v4774, 7
    %v4776 = vsub.s32 %v4773, %v4775
    %v4777 = vrot.slane %v4763, %v4776
    %v4778 = vcombine.low %v4713, %v4729
    %v4779 = vcombine.high %v4713, %v4729
    %v4781 = vunpack.c.l.s4 1934713408
    %v4782 = vunpack.c.0.s8 %v4781
    %v4783 = vlaneseq
    %v4784 = vshrl.u32 %v4783, 7
    %v4785 = vsub.s32 %v4782, %v4784
    %v4786 = vrot.slane %v4778, %v4785
    %v4788 = vunpack.c.l.s4 1934713408
    %v4789 = vunpack.c.0.s8 %v4788
    %v4790 = vlaneseq
    %v4791 = vshrl.u32 %v4790, 7
    %v4792 = vsub.s32 %v4789, %v4791
    %v4793 = vrot.slane %v4779, %v4792
    %v4794 = vcombine.low %v4738, %v4770
    %v4795 = vcombine.high %v4738, %v4770
    %v4796 = vcombine.low %v4745, %v4777
    %v4797 = vcombine.high %v4745, %v4777
    %v4798 = vcombine.low %v4754, %v4786
    %v4799 = vcombine.high %v4754, %v4786
    %v4800 = vcombine.low %v4761, %v4793
    %v4801 = vcombine.high %v4761, %v4793
    %v4802 = vcombine.low %v4658, %v4660
    %v4803 = vcombine.high %v4658, %v4660
    %v4805 = vunpack.c.l.s4 1983009808
    %v4806 = vunpack.c.0.s8 %v4805
    %v4807 = vlaneseq
    %v4808 = vshrl.u32 %v4807, 7
    %v4809 = vsub.s32 %v4806, %v4808
    %v4810 = vrot.slane %v4802, %v4809
    %v4812 = vunpack.c.l.s4 1983009808
    %v4813 = vunpack.c.0.s8 %v4812
    %v4814 = vlaneseq
    %v4815 = vshrl.u32 %v4814, 7
    %v4816 = vsub.s32 %v4813, %v4815
    %v4817 = vrot.slane %v4803, %v4816
    %v4818 = vcombine.low %v4659, %v4661
    %v4819 = vcombine.high %v4659, %v4661
    %v4821 = vunpack.c.l.s4 1983009808
    %v4822 = vunpack.c.0.s8 %v4821
    %v4823 = vlaneseq
    %v4824 = vshrl.u32 %v4823, 7
    %v4825 = vsub.s32 %v4822, %v4824
    %v4826 = vrot.slane %v4818, %v4825
    %v4828 = vunpack.c.l.s4 1983009808
    %v4829 = vunpack.c.0.s8 %v4828
    %v4830 = vlaneseq
    %v4831 = vshrl.u32 %v4830, 7
    %v4832 = vsub.s32 %v4829, %v4831
    %v4833 = vrot.slane %v4819, %v4832
    %v4834 = vcombine.low %v4662, %v4664
    %v4835 = vcombine.high %v4662, %v4664
    %v4837 = vunpack.c.l.s4 1983009808
    %v4838 = vunpack.c.0.s8 %v4837
    %v4839 = vlaneseq
    %v4840 = vshrl.u32 %v4839, 7
    %v4841 = vsub.s32 %v4838, %v4840
    %v4842 = vrot.slane %v4834, %v4841
    %v4844 = vunpack.c.l.s4 1983009808
    %v4845 = vunpack.c.0.s8 %v4844
    %v4846 = vlaneseq
    %v4847 = vshrl.u32 %v4846, 7
    %v4848 = vsub.s32 %v4845, %v4847
    %v4849 = vrot.slane %v4835, %v4848
    %v4850 = vcombine.low %v4663, %v4665
    %v4851 = vcombine.high %v4663, %v4665
    %v4853 = vunpack.c.l.s4 1983009808
    %v4854 = vunpack.c.0.s8 %v4853
    %v4855 = vlaneseq
    %v4856 = vshrl.u32 %v4855, 7
    %v4857 = vsub.s32 %v4854, %v4856
    %v4858 = vrot.slane %v4850, %v4857
    %v4860 = vunpack.c.l.s4 1983009808
    %v4861 = vunpack.c.0.s8 %v4860
    %v4862 = vlaneseq
    %v4863 = vshrl.u32 %v4862, 7
    %v4864 = vsub.s32 %v4861, %v4863
    %v4865 = vrot.slane %v4851, %v4864
    %v4866 = vcombine.low %v4810, %v4826
    %v4867 = vcombine.high %v4810, %v4826
    %v4869 = vunpack.c.l.s4 1934713408
    %v4870 = vunpack.c.0.s8 %v4869
    %v4871 = vlaneseq
    %v4872 = vshrl.u32 %v4871, 7
    %v4873 = vsub.s32 %v4870, %v4872
    %v4874 = vrot.slane %v4866, %v4873
    %v4876 = vunpack.c.l.s4 1934713408
    %v4877 = vunpack.c.0.s8 %v4876
    %v4878 = vlaneseq
    %v4879 = vshrl.u32 %v4878, 7
    %v4880 = vsub.s32 %v4877, %v4879
    %v4881 = vrot.slane %v4867, %v4880
    %v4882 = vcombine.low %v4817, %v4833
    %v4883 = vcombine.high %v4817, %v4833
    %v4885 = vunpack.c.l.s4 1934713408
    %v4886 = vunpack.c.0.s8 %v4885
    %v4887 = vlaneseq
    %v4888 = vshrl.u32 %v4887, 7
    %v4889 = vsub.s32 %v4886, %v4888
    %v4890 = vrot.slane %v4882, %v4889
    %v4892 = vunpack.c.l.s4 1934713408
    %v4893 = vunpack.c.0.s8 %v4892
    %v4894 = vlaneseq
    %v4895 = vshrl.u32 %v4894, 7
    %v4896 = vsub.s32 %v4893, %v4895
    %v4897 = vrot.slane %v4883, %v4896
    %v4898 = vcombine.low %v4842, %v4858
    %v4899 = vcombine.high %v4842, %v4858
    %v4901 = vunpack.c.l.s4 1934713408
    %v4902 = vunpack.c.0.s8 %v4901
    %v4903 = vlaneseq
    %v4904 = vshrl.u32 %v4903, 7
    %v4905 = vsub.s32 %v4902, %v4904
    %v4906 = vrot.slane %v4898, %v4905
    %v4908 = vunpack.c.l.s4 1934713408
    %v4909 = vunpack.c.0.s8 %v4908
    %v4910 = vlaneseq
    %v4911 = vshrl.u32 %v4910, 7
    %v4912 = vsub.s32 %v4909, %v4911
    %v4913 = vrot.slane %v4899, %v4912
    %v4914 = vcombine.low %v4849, %v4865
    %v4915 = vcombine.high %v4849, %v4865
    %v4917 = vunpack.c.l.s4 1934713408
    %v4918 = vunpack.c.0.s8 %v4917
    %v4919 = vlaneseq
    %v4920 = vshrl.u32 %v4919, 7
    %v4921 = vsub.s32 %v4918, %v4920
    %v4922 = vrot.slane %v4914, %v4921
    %v4924 = vunpack.c.l.s4 1934713408
    %v4925 = vunpack.c.0.s8 %v4924
    %v4926 = vlaneseq
    %v4927 = vshrl.u32 %v4926, 7
    %v4928 = vsub.s32 %v4925, %v4927
    %v4929 = vrot.slane %v4915, %v4928
    %v4930 = vcombine.low %v4874, %v4906
    %v4931 = vcombine.high %v4874, %v4906
    %v4932 = vcombine.low %v4881, %v4913
    %v4933 = vcombine.high %v4881, %v4913
    %v4934 = vcombine.low %v4890, %v4922
    %v4935 = vcombine.high %v4890, %v4922
    %v4936 = vcombine.low %v4897, %v4929
    %v4937 = vcombine.high %v4897, %v4929
    %4940 = vrot.lane.b32.xlu0 %v4795, 32
    %v4941 = vpop.permute.xlu0 %4940
    %4942 = vrot.lane.b32.xlu0 %v4931, 32
    %v4943 = vpop.permute.xlu0 %4942
    %4948 = vrot.lane.b32.xlu0 %v4796, 64
    %v4949 = vpop.permute.xlu0 %4948
    %4950 = vrot.lane.b32.xlu0 %v4932, 64
    %v4951 = vpop.permute.xlu0 %4950
    %4956 = vrot.lane.b32.xlu0 %v4797, 96
    %v4957 = vpop.permute.xlu0 %4956
    %4958 = vrot.lane.b32.xlu0 %v4933, 96
    %v4959 = vpop.permute.xlu0 %4958
    %4964 = vrot.lane.b32.xlu0 %v4799, 32
    %v4965 = vpop.permute.xlu0 %4964
    %4966 = vrot.lane.b32.xlu0 %v4935, 32
    %v4967 = vpop.permute.xlu0 %4966
    %4972 = vrot.lane.b32.xlu0 %v4800, 64
    %v4973 = vpop.permute.xlu0 %4972
    %4974 = vrot.lane.b32.xlu0 %v4936, 64
    %v4975 = vpop.permute.xlu0 %4974
    %4980 = vrot.lane.b32.xlu0 %v4801, 96
    %v4981 = vpop.permute.xlu0 %4980
    %4982 = vrot.lane.b32.xlu0 %v4937, 96
    %v4983 = vpop.permute.xlu0 %4982
    %v4986 = vsel %vm3407, %v4794, %v4941
    %v4987 = vsel %vm3407, %v4930, %v4943
    %vm4988 = vcmask 523264
    %v4989 = vsel %vm4988, %v4986, %v4949
    %v4990 = vsel %vm4988, %v4987, %v4951
    %vm4991 = vcmask 785408
    %v4992 = vsel %vm4991, %v4989, %v4957
    %v4993 = vsel %vm4991, %v4990, %v4959
    %v4994 = vsel %vm3407, %v4798, %v4965
    %v4995 = vsel %vm3407, %v4934, %v4967
    %v4996 = vsel %vm4988, %v4994, %v4973
    %v4997 = vsel %vm4988, %v4995, %v4975
    %v4998 = vsel %vm4991, %v4996, %v4981
    %v4999 = vsel %vm4991, %v4997, %v4983
    %v5000 = vpack.c.bf16 %v4993, %v4992
    %v5001 = vpack.c.bf16 %v4999, %v4998
    %v5002 = vld [vmem:[%s4] sm:$0xff]
    %v5003 = vld [vmem:[%s4 + $0x8] sm:$0xff]
    %v5004 = vld [vmem:[%s4 + $0x10] sm:$0xff]
    %v5005 = vld [vmem:[%s4 + $0x18] sm:$0xff]
    %v5006 = vld [vmem:[%s4 + $0x20] sm:$0xff]
    %v5007 = vld [vmem:[%s4 + $0x28] sm:$0xff]
    %v5008 = vld [vmem:[%s4 + $0x30] sm:$0xff]
    %v5009 = vld [vmem:[%s4 + $0x38] sm:$0xff]
    %v5010 = vld [vmem:[%s4 + $0x40] sm:$0xff]
    %v5011 = vld [vmem:[%s4 + $0x48] sm:$0xff]
    %v5012 = vld [vmem:[%s4 + $0x50] sm:$0xff]
    %v5013 = vld [vmem:[%s4 + $0x58] sm:$0xff]
    %v5014 = vld [vmem:[%s4 + $0x60] sm:$0xff]
    %v5015 = vld [vmem:[%s4 + $0x68] sm:$0xff]
    %v5016 = vld [vmem:[%s4 + $0x70] sm:$0xff]
    %v5017 = vld [vmem:[%s4 + $0x78] sm:$0xff]
    %v5018 = vld [vmem:[%s4 + $0x80] sm:$0xff]
    %v5019 = vld [vmem:[%s4 + $0x88] sm:$0xff]
    %v5020 = vld [vmem:[%s4 + $0x90] sm:$0xff]
    %v5021 = vld [vmem:[%s4 + $0x98] sm:$0xff]
    %v5022 = vld [vmem:[%s4 + $0xa0] sm:$0xff]
    %v5023 = vld [vmem:[%s4 + $0xa8] sm:$0xff]
    %v5024 = vld [vmem:[%s4 + $0xb0] sm:$0xff]
    %v5025 = vld [vmem:[%s4 + $0xb8] sm:$0xff]
    %v5026 = vld [vmem:[%s4 + $0xc0] sm:$0xff]
    %v5027 = vld [vmem:[%s4 + $0xc8] sm:$0xff]
    %v5028 = vld [vmem:[%s4 + $0xd0] sm:$0xff]
    %v5029 = vld [vmem:[%s4 + $0xd8] sm:$0xff]
    %v5030 = vld [vmem:[%s4 + $0xe0] sm:$0xff]
    %v5031 = vld [vmem:[%s4 + $0xe8] sm:$0xff]
    %v5032 = vld [vmem:[%s4 + $0xf0] sm:$0xff]
    %v5033 = vld [vmem:[%s4 + $0xf8] sm:$0xff]
    %v5034 = vld [vmem:[%s5] sm:$0x3]
    %v5036 = vlaneseq
    %v5037 = vshrl.u32 %v5036, 7
    %v5038 = vsub.s32 0, %v5037
    %v5039 = vrot.slane %v5034, %v5038
    %v5040 = vlaneseq
    %v5041 = vshrl.u32 %v5040, 7
    %v5042 = vsub.s32 1, %v5041
    %v5043 = vrot.slane %v5034, %v5042
    %v5078 = vunpack.c.l.b16 %v5002
    %v5079 = vunpack.c.h.b16 %v5002
    %v5080 = vunpack.c.l.b16 %v5003
    %v5081 = vunpack.c.h.b16 %v5003
    %v5082 = vunpack.c.l.b16 %v5004
    %v5083 = vunpack.c.h.b16 %v5004
    %v5084 = vunpack.c.l.b16 %v5005
    %v5085 = vunpack.c.h.b16 %v5005
    %v5086 = vunpack.c.l.b16 %v5006
    %v5087 = vunpack.c.h.b16 %v5006
    %v5088 = vunpack.c.l.b16 %v5007
    %v5089 = vunpack.c.h.b16 %v5007
    %v5090 = vunpack.c.l.b16 %v5008
    %v5091 = vunpack.c.h.b16 %v5008
    %v5092 = vunpack.c.l.b16 %v5009
    %v5093 = vunpack.c.h.b16 %v5009
    %v5094 = vunpack.c.l.b16 %v5010
    %v5095 = vunpack.c.h.b16 %v5010
    %v5096 = vunpack.c.l.b16 %v5011
    %v5097 = vunpack.c.h.b16 %v5011
    %v5098 = vunpack.c.l.b16 %v5012
    %v5099 = vunpack.c.h.b16 %v5012
    %v5100 = vunpack.c.l.b16 %v5013
    %v5101 = vunpack.c.h.b16 %v5013
    %v5102 = vunpack.c.l.b16 %v5014
    %v5103 = vunpack.c.h.b16 %v5014
    %v5104 = vunpack.c.l.b16 %v5015
    %v5105 = vunpack.c.h.b16 %v5015
    %v5106 = vunpack.c.l.b16 %v5016
    %v5107 = vunpack.c.h.b16 %v5016
    %v5108 = vunpack.c.l.b16 %v5017
    %v5109 = vunpack.c.h.b16 %v5017
    %v5110 = vunpack.c.l.b16 %v5018
    %v5111 = vunpack.c.h.b16 %v5018
    %v5112 = vunpack.c.l.b16 %v5019
    %v5113 = vunpack.c.h.b16 %v5019
    %v5114 = vunpack.c.l.b16 %v5020
    %v5115 = vunpack.c.h.b16 %v5020
    %v5116 = vunpack.c.l.b16 %v5021
    %v5117 = vunpack.c.h.b16 %v5021
    %v5118 = vunpack.c.l.b16 %v5022
    %v5119 = vunpack.c.h.b16 %v5022
    %v5120 = vunpack.c.l.b16 %v5023
    %v5121 = vunpack.c.h.b16 %v5023
    %v5122 = vunpack.c.l.b16 %v5024
    %v5123 = vunpack.c.h.b16 %v5024
    %v5124 = vunpack.c.l.b16 %v5025
    %v5125 = vunpack.c.h.b16 %v5025
    %v5126 = vunpack.c.l.b16 %v5026
    %v5127 = vunpack.c.h.b16 %v5026
    %v5128 = vunpack.c.l.b16 %v5027
    %v5129 = vunpack.c.h.b16 %v5027
    %v5130 = vunpack.c.l.b16 %v5028
    %v5131 = vunpack.c.h.b16 %v5028
    %v5132 = vunpack.c.l.b16 %v5029
    %v5133 = vunpack.c.h.b16 %v5029
    %v5134 = vunpack.c.l.b16 %v5030
    %v5135 = vunpack.c.h.b16 %v5030
    %v5136 = vunpack.c.l.b16 %v5031
    %v5137 = vunpack.c.h.b16 %v5031
    %v5138 = vunpack.c.l.b16 %v5032
    %v5139 = vunpack.c.h.b16 %v5032
    %v5140 = vunpack.c.l.b16 %v5033
    %v5141 = vunpack.c.h.b16 %v5033
    %v5142 = vpack.c.b16 %v5080, %v5078
    %v5143 = vpack.c.b16 %v5081, %v5079
    %v5144 = vpack.c.b16 %v5084, %v5082
    %v5145 = vpack.c.b16 %v5085, %v5083
    %v5146 = vpack.c.b16 %v5088, %v5086
    %v5147 = vpack.c.b16 %v5089, %v5087
    %v5148 = vpack.c.b16 %v5092, %v5090
    %v5149 = vpack.c.b16 %v5093, %v5091
    %v5150 = vpack.c.b16 %v5096, %v5094
    %v5151 = vpack.c.b16 %v5097, %v5095
    %v5152 = vpack.c.b16 %v5100, %v5098
    %v5153 = vpack.c.b16 %v5101, %v5099
    %v5154 = vpack.c.b16 %v5104, %v5102
    %v5155 = vpack.c.b16 %v5105, %v5103
    %v5156 = vpack.c.b16 %v5108, %v5106
    %v5157 = vpack.c.b16 %v5109, %v5107
    %v5158 = vpack.c.b16 %v5112, %v5110
    %v5159 = vpack.c.b16 %v5113, %v5111
    %v5160 = vpack.c.b16 %v5116, %v5114
    %v5161 = vpack.c.b16 %v5117, %v5115
    %v5162 = vpack.c.b16 %v5120, %v5118
    %v5163 = vpack.c.b16 %v5121, %v5119
    %v5164 = vpack.c.b16 %v5124, %v5122
    %v5165 = vpack.c.b16 %v5125, %v5123
    %v5166 = vpack.c.b16 %v5128, %v5126
    %v5167 = vpack.c.b16 %v5129, %v5127
    %v5168 = vpack.c.b16 %v5132, %v5130
    %v5169 = vpack.c.b16 %v5133, %v5131
    %v5170 = vpack.c.b16 %v5136, %v5134
    %v5171 = vpack.c.b16 %v5137, %v5135
    %v5172 = vpack.c.b16 %v5140, %v5138
    %v5173 = vpack.c.b16 %v5141, %v5139
    %5206 = vmatprep.subr.bf16.mxu0 %v5143
    %5207 = vmatpush1.bf16.msra.mxu0 %v5142
    %5208 = vmatprep.subr.bf16.mxu0 %v5145
    %5209 = vmatpush1.bf16.msra.mxu0 %v5144
    %5210 = vmatprep.subr.bf16.mxu0 %v5147
    %5211 = vmatpush1.bf16.msra.mxu0 %v5146
    %5212 = vmatprep.subr.bf16.mxu0 %v5149
    %5213 = vmatpush1.bf16.msra.mxu0 %v5148
    %5214 = vmatprep.subr.bf16.mxu0 %v5151
    %5215 = vmatpush1.bf16.msra.mxu0 %v5150
    %5216 = vmatprep.subr.bf16.mxu0 %v5153
    %5217 = vmatpush1.bf16.msra.mxu0 %v5152
    %5218 = vmatprep.subr.bf16.mxu0 %v5155
    %5219 = vmatpush1.bf16.msra.mxu0 %v5154
    %5220 = vmatprep.subr.bf16.mxu0 %v5157
    %5221 = vmatpush1.bf16.msra.mxu0 %v5156
    %5222 = vmatprep.subr.bf16.mxu0 %v5159
    %5223 = vmatpush1.bf16.msra.mxu0 %v5158
    %5224 = vmatprep.subr.bf16.mxu0 %v5161
    %5225 = vmatpush1.bf16.msra.mxu0 %v5160
    %5226 = vmatprep.subr.bf16.mxu0 %v5163
    %5227 = vmatpush1.bf16.msra.mxu0 %v5162
    %5228 = vmatprep.subr.bf16.mxu0 %v5165
    %5229 = vmatpush1.bf16.msra.mxu0 %v5164
    %5230 = vmatprep.subr.bf16.mxu0 %v5167
    %5231 = vmatpush1.bf16.msra.mxu0 %v5166
    %5232 = vmatprep.subr.bf16.mxu0 %v5169
    %5233 = vmatpush1.bf16.msra.mxu0 %v5168
    %5234 = vmatprep.subr.bf16.mxu0 %v5171
    %5235 = vmatpush1.bf16.msra.mxu0 %v5170
    %5236 = vmatprep.subr.bf16.mxu0 %v5173
    %5237 = vmatpush1.bf16.msra.mxu0 %v5172
    %5238 = vmatprep.mubr.bf16.mxu0 %v5001
    %5239 = vmatmul.mubr.bf16.gmra.mrb[0].mxu0 %v5000
    %v5240 = vpop.f32.mrb[0].mxu0
    %v5241 = vadd.f32 %v5039, %v5240
    %v5242 = vpop.f32.mrb[0].mxu0
    %v5243 = vadd.f32 %v5043, %v5242
    %v5244 = vpop.f32.mrb[0].mxu0
    %v5245 = vadd.f32 %v5039, %v5244
    %v5246 = vpop.f32.mrb[0].mxu0
    %v5247 = vadd.f32 %v5043, %v5246
    %5248 = vdwg.mxu0
    %5249 = vst [vmem:[#allocation7] sm:$0xff] %v5241
    %5250 = vst [vmem:[#allocation7 + $0x8] sm:$0xff] %v5243
    %5251 = vst [vmem:[#allocation7 + $0x10] sm:$0xff] %v5245
    %5252 = vst [vmem:[#allocation7 + $0x18] sm:$0xff] %v5247
    // Predicated region
    $region34: #{multi_head_attention.1} parent=1 // pred_check
      _
    $region35: #{multi_head_attention.1} parent=1 // pred_check_branch
      %5254 = sbr.rel (0) target = $region37
    $region36: #{multi_head_attention.1} parent=1 // pred_region
      %s5256 = ssub.s32 512, 512
      %5257 = vsyncadd [#allocation6], %s5256
      %s5258 = sshll.u32 [#allocation7], 4
      %s5259 = int_to_ptr.vmem [resolvable:$true] %s5258
      %5264 = dma.vmem_to_hbm [thread:$0]  %s5259, 512, %s8, [#allocation6], 256, 256, 16
    $region37: #{multi_head_attention.1} parent=1 // pred_fallthru
      _
    // Predicated region
    $region38: #{multi_head_attention.1} parent=1 // pred_check
      _
    $region39: #{multi_head_attention.1} parent=1 // pred_check_branch
      %5266 = sbr.rel (0) target = $region41
    $region40: #{multi_head_attention.1} parent=1 // pred_region
      %5267 = dma.done [#allocation6], 512
    $region41: #{multi_head_attention.1} parent=1 // pred_fallthru
      _
    %5268 = vsyncpa [#allocation5], 1
    %5269 = vsyncpa [#allocation6], 1

</llo_original>
